<compile_context>
chip_gen: v7x
topology: tpu7x:2x2x1
jax: 0.10.0
libtpu: 0.0.40
codegen_flags: <defaults>
</compile_context>

<pallas_src>
import jax
import jax.numpy as jnp
from jax.experimental import pallas as pl
from jax.experimental.pallas import tpu as pltpu


# --------------------------------------------------------------------------------
# Pallas kernel: fused 3-layer MLP (bf16 matmuls, f32 accumulation / epilogue)
# --------------------------------------------------------------------------------
def _estimator_kernel(x_ref, w1_ref, b1_ref, w2_ref, b2_ref, w3_ref, b3_ref, o_ref):
    # fc1 + ReLU : (TB, D) @ (D, 512) -> f32   (x cast to bf16 in-register, MXU f32 acc)
    x = x_ref[...].astype(jnp.bfloat16)
    h1 = jnp.dot(x, w1_ref[...], preferred_element_type=jnp.float32)
    h1 = jnp.maximum(h1 + b1_ref[...], 0.0)
    # fc2 + ReLU : (TB, 512) @ (512, 256) -> f32
    h2 = jnp.dot(h1.astype(jnp.bfloat16), w2_ref[...],
                 preferred_element_type=jnp.float32)
    h2 = jnp.maximum(h2 + b2_ref[...], 0.0)
    # fc3 (out_features = 1): contract the w3 row against h2's feature axis so the per-row
    # scalars land lane-dense as a (1, TB) row (avoids a (TB, 1) masked column store).
    out_row = jax.lax.dot_general(
        w3_ref[...], h2,
        dimension_numbers=(((1,), (1,)), ((), ())),
        preferred_element_type=jnp.float32)                    # (1, TB)
    o_ref[...] = (out_row + b3_ref[0, 0]).astype(o_ref.dtype)


def _round_up(v, m):
    return (v + m - 1) // m * m


def _vmem_capacity_bytes():
    try:
        return int(pltpu.get_tpu_info().vmem_capacity_bytes)
    except Exception:
        return 64 << 20          # conservative default (v7x per-TensorCore VMEM)


def estimator_forward(x, params, *, tb=None):
    """x: any shape (B, ...); returns (B, 1) float32, matching the PyTorch forward."""
    b = x.shape[0]
    x2 = x.reshape(b, -1)                       # metadata-only for contiguous x; no dtype cast
    d = x2.shape[1]
    w1t, b1, w2t, b2, w3row, b3 = params
    x_bytes = x2.dtype.itemsize

    # ---- generation-aware VMEM budget (leave headroom for compiler scratch) ----
    budget = (_vmem_capacity_bytes() * 3) // 4

    def footprint(tile):
        return (
            2 * (d * 512 * 2 + 512 * 256 * 2)           # bf16 weights (worst case: 2 buffers)
            + (512 + 256 + 256) * 4                     # f32 bias rows + w3 row
            + 2 * tile * d * x_bytes                    # double-buffered x tiles
            + 2 * tile * 4                              # double-buffered out rows
            + tile * 512 * (4 + 2)                      # h1 (f32 + bf16 copy)
            + tile * 256 * 4                            # h2 (f32)
        )

    # ---- batch tile selection ----
    if tb is None:
        tb = 128
        for cand in (1024, 512, 256, 128):
            if footprint(cand) <= budget:
                tb = cand
                break
    if b <= tb:
        tb, num_tiles = b, 1                    # single block == full batch (no padding at all)
    else:
        tb = _round_up(tb, 128)                 # lane-dense out row needs a multiple of 128
        num_tiles = pl.cdiv(b, tb)              # ragged last tile: OOB rows only feed cols >= b
    b_out = num_tiles * tb

    vmem_limit = int(min(max(2 * footprint(tb), 32 << 20), budget))

    cost = pl.CostEstimate(
        flops=2 * b_out * (d * 512 + 512 * 256 + 256),
        transcendentals=0,
        bytes_accessed=(b * d * x_bytes + (d * 512 + 512 * 256) * 2
                        + (512 + 256 + 256 + 1) * 4 + b_out * 4),
    )

    def _run(single_buffer_weights):
        def const_spec(shape):
            if single_buffer_weights:
                return pl.BlockSpec(shape, lambda i: (0, 0),
                                    pipeline_mode=pl.Buffered(1))
            return pl.BlockSpec(shape, lambda i: (0, 0))

        return pl.pallas_call(
            _estimator_kernel,
            out_shape=jax.ShapeDtypeStruct((1, b_out), jnp.float32),
            grid=(num_tiles,),
            in_specs=[
                pl.BlockSpec((tb, d), lambda i: (i, 0)),            # x tile (double-buffered)
                const_spec((d, 512)),                               # w1^T   (resident)
                const_spec((1, 512)),                               # b1     (resident)
                const_spec((512, 256)),                             # w2^T   (resident)
                const_spec((1, 256)),                               # b2     (resident)
                const_spec((1, 256)),                               # w3 row (resident)
                pl.BlockSpec(memory_space=pltpu.MemorySpace.SMEM),  # b3 scalar
            ],
            out_specs=pl.BlockSpec((1, tb), lambda i: (0, i)),      # lane-dense output row
            compiler_params=pltpu.CompilerParams(
                dimension_semantics=("parallel",),
                vmem_limit_bytes=vmem_limit,
            ),
            cost_estimate=cost,
        )(x2, w1t, b1, w2t, b2, w3row, b3)

    try:
        out_row = jax.block_until_ready(_run(True))
    except Exception:
        # pipeline_mode=pl.Buffered(1) not supported on this jax version -> default buffering.
        out_row = jax.block_until_ready(_run(False))

    return out_row[0, :b].reshape(b, 1)


# --------------------------------------------------------------------------------
# Parameter setup (plain JAX glue): deterministic init + spectral normalization
# --------------------------------------------------------------------------------
def _spectral_normalize(w, key, n_power_iterations=1, eps=1e-12):
    """w: (out_features, in_features) torch-style. Returns w / sigma(w)."""
    out_dim, _ = w.shape
    u = jax.random.normal(key, (out_dim,), dtype=w.dtype)
    u = u / jnp.maximum(jnp.linalg.norm(u), eps)
    v = None
    for _ in range(n_power_iterations):
        v = w.T @ u
        v = v / jnp.maximum(jnp.linalg.norm(v), eps)
        u = w @ v
        u = u / jnp.maximum(jnp.linalg.norm(u), eps)
    sigma = u @ (w @ v)
    return w / sigma


def _init_linear(key, in_features, out_features):
    """Mimic nn.Linear default init: U(-1/sqrt(fan_in), 1/sqrt(fan_in))."""
    kw, kb = jax.random.split(key)
    bound = 1.0 / jnp.sqrt(jnp.float32(in_features))
    w = jax.random.uniform(kw, (out_features, in_features), jnp.float32, -bound, bound)
    b = jax.random.uniform(kb, (out_features,), jnp.float32, -bound, bound)
    return w, b


def make_estimator_params(key, input_dim):
    k1, k2, k3, ku1, ku2, ku3 = jax.random.split(key, 6)
    w1, b1 = _init_linear(k1, input_dim, 512)
    w2, b2 = _init_linear(k2, 512, 256)
    w3, b3 = _init_linear(k3, 256, 1)

    w1 = _spectral_normalize(w1, ku1)
    w2 = _spectral_normalize(w2, ku2)
    w3 = _spectral_normalize(w3, ku3)

    # Kernel layout: transposed bf16 weights (in, out); f32 bias rows; w3 as a (1, 256) f32
    # row (LHS of the fc3 contraction); b3 as a (1, 1) SMEM scalar.
    return (
        w1.T.astype(jnp.bfloat16), b1.reshape(1, 512).astype(jnp.float32),
        w2.T.astype(jnp.bfloat16), b2.reshape(1, 256).astype(jnp.float32),
        w3.reshape(1, 256).astype(jnp.float32),
        b3.reshape(1, 1).astype(jnp.float32),
    )


# --------------------------------------------------------------------------------
# Pure-JAX reference (same bf16/f32 numerics as the kernel)
# --------------------------------------------------------------------------------
def estimator_ref(x, params):
    b = x.shape[0]
    x2 = x.reshape(b, -1).astype(jnp.bfloat16)
    w1t, b1, w2t, b2, w3row, b3 = params
    h1 = jnp.maximum(jnp.dot(x2, w1t, preferred_element_type=jnp.float32) + b1, 0.0)
    h2 = jnp.maximum(jnp.dot(h1.astype(jnp.bfloat16), w2t,
                             preferred_element_type=jnp.float32) + b2, 0.0)
    return jnp.sum(h2 * w3row, axis=-1, keepdims=True) + b3[0, 0]


if __name__ == "__main__":
    key = jax.random.PRNGKey(0)
    kx, kp, kx2 = jax.random.split(key, 3)

    # Small NCHW-style input: batch=2, channels=4, spatial=16x16 -> input_dim=1024.
    x = jax.random.normal(kx, (2, 4, 16, 16), dtype=jnp.float32)
    params = make_estimator_params(kp, input_dim=4 * 16 * 16)

    out = jax.block_until_ready(estimator_forward(x, params))
    ref = estimator_ref(x, params)
    assert out.shape == (2, 1), out.shape
    assert jnp.allclose(out, ref, atol=1e-2, rtol=1e-2), "mismatch vs reference"

    # Also exercise the multi-tile path (lane-dense out row, ragged last block, no pad).
    xb = jax.random.normal(kx2, (200, 4, 16, 16), dtype=jnp.float32)
    outb = jax.block_until_ready(estimator_forward(xb, params, tb=128))
    refb = estimator_ref(xb, params)
    assert outb.shape == (200, 1), outb.shape
    assert jnp.allclose(outb, refb, atol=1e-2, rtol=1e-2), "mismatch vs reference (multi-tile)"

    print("KERNEL_OK")
</pallas_src>

<mosaic_0001>
module attributes {stable_mosaic.version = 11 : i64} {
  func.func @_estimator_kernel(%arg0: i32, %arg1: memref<2x1024xf32, #tpu.memory_space<vmem>>, %arg2: memref<1024x512xbf16, #tpu.memory_space<vmem>>, %arg3: memref<1x512xf32, #tpu.memory_space<vmem>>, %arg4: memref<512x256xbf16, #tpu.memory_space<vmem>>, %arg5: memref<1x256xf32, #tpu.memory_space<vmem>>, %arg6: memref<1x256xf32, #tpu.memory_space<vmem>>, %arg7: memref<1x1xf32, #tpu.memory_space<smem>>, %arg8: memref<1x2xf32, #tpu.memory_space<vmem>>) attributes {dimension_semantics = [#tpu.dimension_semantics<parallel>], iteration_bounds = array<i64: 1>, scalar_prefetch = 0 : i64, scratch_operands = 0 : i64, tpu.core_type = #tpu.core_type<tc>, window_params = [{transform_indices = @transform_0, window_bounds = array<i64: 2, 1024>}, {pipeline_mode = #tpu.pipeline_mode<synchronous>, transform_indices = @transform_1, window_bounds = array<i64: 1024, 512>}, {pipeline_mode = #tpu.pipeline_mode<synchronous>, transform_indices = @transform_2, window_bounds = array<i64: 1, 512>}, {pipeline_mode = #tpu.pipeline_mode<synchronous>, transform_indices = @transform_3, window_bounds = array<i64: 512, 256>}, {pipeline_mode = #tpu.pipeline_mode<synchronous>, transform_indices = @transform_4, window_bounds = array<i64: 1, 256>}, {pipeline_mode = #tpu.pipeline_mode<synchronous>, transform_indices = @transform_5, window_bounds = array<i64: 1, 256>}, {transform_indices = @transform_6, window_bounds = array<i64: 1, 1>}, {transform_indices = @transform_7, window_bounds = array<i64: 1, 2>}]} {
    %c0 = arith.constant 0 : index
    %c0_0 = arith.constant 0 : index
    %0 = vector.load %arg1[%c0, %c0_0] : memref<2x1024xf32, #tpu.memory_space<vmem>>, vector<2x1024xf32>
    %1 = arith.truncf %0 : vector<2x1024xf32> to vector<2x1024xbf16>
    %c0_1 = arith.constant 0 : index
    %c0_2 = arith.constant 0 : index
    %2 = vector.load %arg2[%c0_1, %c0_2] : memref<1024x512xbf16, #tpu.memory_space<vmem>>, vector<1024x512xbf16>
    %cst = arith.constant dense<0.000000e+00> : vector<2x512xf32>
    %3 = tpu.matmul %1, %2, %cst {dimension_numbers = #tpu.dot_dimension_numbers<[1], [0], [0], [1], [0, 0, 1, 1], [], []>} : vector<2x1024xbf16>, vector<1024x512xbf16>, vector<2x512xf32> -> vector<2x512xf32>
    %c0_3 = arith.constant 0 : index
    %c0_4 = arith.constant 0 : index
    %4 = vector.load %arg3[%c0_3, %c0_4] : memref<1x512xf32, #tpu.memory_space<vmem>>, vector<1x512xf32>
    %5 = vector.broadcast %4 : vector<1x512xf32> to vector<2x512xf32>
    %6 = arith.addf %3, %5 : vector<2x512xf32>
    %cst_5 = arith.constant 0.000000e+00 : f32
    %7 = vector.broadcast %cst_5 : f32 to vector<2x512xf32>
    %8 = arith.maximumf %6, %7 : vector<2x512xf32>
    %9 = arith.truncf %8 : vector<2x512xf32> to vector<2x512xbf16>
    %c0_6 = arith.constant 0 : index
    %c0_7 = arith.constant 0 : index
    %10 = vector.load %arg4[%c0_6, %c0_7] : memref<512x256xbf16, #tpu.memory_space<vmem>>, vector<512x256xbf16>
    %cst_8 = arith.constant dense<0.000000e+00> : vector<2x256xf32>
    %11 = tpu.matmul %9, %10, %cst_8 {dimension_numbers = #tpu.dot_dimension_numbers<[1], [0], [0], [1], [0, 0, 1, 1], [], []>} : vector<2x512xbf16>, vector<512x256xbf16>, vector<2x256xf32> -> vector<2x256xf32>
    %c0_9 = arith.constant 0 : index
    %c0_10 = arith.constant 0 : index
    %12 = vector.load %arg5[%c0_9, %c0_10] : memref<1x256xf32, #tpu.memory_space<vmem>>, vector<1x256xf32>
    %13 = vector.broadcast %12 : vector<1x256xf32> to vector<2x256xf32>
    %14 = arith.addf %11, %13 : vector<2x256xf32>
    %cst_11 = arith.constant 0.000000e+00 : f32
    %15 = vector.broadcast %cst_11 : f32 to vector<2x256xf32>
    %16 = arith.maximumf %14, %15 : vector<2x256xf32>
    %c0_12 = arith.constant 0 : index
    %c0_13 = arith.constant 0 : index
    %17 = vector.load %arg6[%c0_12, %c0_13] : memref<1x256xf32, #tpu.memory_space<vmem>>, vector<1x256xf32>
    %cst_14 = arith.constant dense<0.000000e+00> : vector<1x2xf32>
    %18 = tpu.matmul %17, %16, %cst_14 {dimension_numbers = #tpu.dot_dimension_numbers<[1], [1], [0], [0], [0, 0, 1, 0], [], []>} : vector<1x256xf32>, vector<2x256xf32>, vector<1x2xf32> -> vector<1x2xf32>
    %c0_15 = arith.constant 0 : index
    %c0_16 = arith.constant 0 : index
    %19 = memref.load %arg7[%c0_15, %c0_16] : memref<1x1xf32, #tpu.memory_space<smem>>
    %20 = vector.broadcast %19 : f32 to vector<1x2xf32>
    %21 = arith.addf %18, %20 : vector<1x2xf32>
    %c0_17 = arith.constant 0 : index
    %c0_18 = arith.constant 0 : index
    %22 = vector.load %arg8[%c0_17, %c0_18] : memref<1x2xf32, #tpu.memory_space<vmem>>, vector<1x2xf32>
    tpu.vector_store %arg8[%c0_17, %c0_18], %21 {strides = array<i32>} : memref<1x2xf32, #tpu.memory_space<vmem>>, vector<1x2xf32>,
    return
  }
  func.func @transform_0(%arg0: i32) -> (i32, i32) {
    %c0_i32 = arith.constant 0 : i32
    %c0_i32_0 = arith.constant 0 : i32
    return %arg0, %c0_i32 : i32, i32
  }
  func.func @transform_1(%arg0: i32) -> (i32, i32) {
    %c0_i32 = arith.constant 0 : i32
    %c0_i32_0 = arith.constant 0 : i32
    %c0_i32_1 = arith.constant 0 : i32
    return %c0_i32, %c0_i32_0 : i32, i32
  }
  func.func @transform_2(%arg0: i32) -> (i32, i32) {
    %c0_i32 = arith.constant 0 : i32
    %c0_i32_0 = arith.constant 0 : i32
    %c0_i32_1 = arith.constant 0 : i32
    return %c0_i32, %c0_i32_0 : i32, i32
  }
  func.func @transform_3(%arg0: i32) -> (i32, i32) {
    %c0_i32 = arith.constant 0 : i32
    %c0_i32_0 = arith.constant 0 : i32
    %c0_i32_1 = arith.constant 0 : i32
    return %c0_i32, %c0_i32_0 : i32, i32
  }
  func.func @transform_4(%arg0: i32) -> (i32, i32) {
    %c0_i32 = arith.constant 0 : i32
    %c0_i32_0 = arith.constant 0 : i32
    %c0_i32_1 = arith.constant 0 : i32
    return %c0_i32, %c0_i32_0 : i32, i32
  }
  func.func @transform_5(%arg0: i32) -> (i32, i32) {
    %c0_i32 = arith.constant 0 : i32
    %c0_i32_0 = arith.constant 0 : i32
    %c0_i32_1 = arith.constant 0 : i32
    return %c0_i32, %c0_i32_0 : i32, i32
  }
  func.func @transform_6(%arg0: i32) -> (i32, i32) {
    %c0_i32 = arith.constant 0 : i32
    %c0_i32_0 = arith.constant 0 : i32
    %c0_i32_1 = arith.constant 0 : i32
    return %c0_i32, %c0_i32_0 : i32, i32
  }
  func.func @transform_7(%arg0: i32) -> (i32, i32) {
    %c0_i32 = arith.constant 0 : i32
    %c0_i32_0 = arith.constant 0 : i32
    return %c0_i32, %arg0 : i32, i32
  }
}

module attributes {stable_mosaic.version = 11 : i64} {
  func.func @_estimator_kernel(%arg0: i32, %arg1: memref<2x1024xf32, #tpu.memory_space<vmem>>, %arg2: memref<1024x512xbf16, #tpu.memory_space<vmem>>, %arg3: memref<1x512xf32, #tpu.memory_space<vmem>>, %arg4: memref<512x256xbf16, #tpu.memory_space<vmem>>, %arg5: memref<1x256xf32, #tpu.memory_space<vmem>>, %arg6: memref<1x256xf32, #tpu.memory_space<vmem>>, %arg7: memref<1x1xf32, #tpu.memory_space<smem>>, %arg8: memref<1x2xf32, #tpu.memory_space<vmem>>) attributes {dimension_semantics = [#tpu.dimension_semantics<parallel>], iteration_bounds = array<i64: 1>, scalar_prefetch = 0 : i64, scratch_operands = 0 : i64, tpu.core_type = #tpu.core_type<tc>, window_params = [{transform_indices = @transform_0, window_bounds = array<i64: 2, 1024>}, {pipeline_mode = #tpu.pipeline_mode<synchronous>, transform_indices = @transform_1, window_bounds = array<i64: 1024, 512>}, {pipeline_mode = #tpu.pipeline_mode<synchronous>, transform_indices = @transform_2, window_bounds = array<i64: 1, 512>}, {pipeline_mode = #tpu.pipeline_mode<synchronous>, transform_indices = @transform_3, window_bounds = array<i64: 512, 256>}, {pipeline_mode = #tpu.pipeline_mode<synchronous>, transform_indices = @transform_4, window_bounds = array<i64: 1, 256>}, {pipeline_mode = #tpu.pipeline_mode<synchronous>, transform_indices = @transform_5, window_bounds = array<i64: 1, 256>}, {transform_indices = @transform_6, window_bounds = array<i64: 1, 1>}, {transform_indices = @transform_7, window_bounds = array<i64: 1, 2>}]} {
    %c0 = arith.constant 0 : index
    %c0_0 = arith.constant 0 : index
    %0 = vector.load %arg1[%c0, %c0_0] : memref<2x1024xf32, #tpu.memory_space<vmem>>, vector<2x1024xf32>
    %1 = arith.truncf %0 : vector<2x1024xf32> to vector<2x1024xbf16>
    %c0_1 = arith.constant 0 : index
    %c0_2 = arith.constant 0 : index
    %2 = vector.load %arg2[%c0_1, %c0_2] : memref<1024x512xbf16, #tpu.memory_space<vmem>>, vector<1024x512xbf16>
    %cst = arith.constant dense<0.000000e+00> : vector<2x512xf32>
    %3 = tpu.matmul %1, %2, %cst {dimension_numbers = #tpu.dot_dimension_numbers<[1], [0], [0], [1], [0, 0, 1, 1], [], []>} : vector<2x1024xbf16>, vector<1024x512xbf16>, vector<2x512xf32> -> vector<2x512xf32>
    %c0_3 = arith.constant 0 : index
    %c0_4 = arith.constant 0 : index
    %4 = vector.load %arg3[%c0_3, %c0_4] : memref<1x512xf32, #tpu.memory_space<vmem>>, vector<1x512xf32>
    %5 = vector.broadcast %4 : vector<1x512xf32> to vector<2x512xf32>
    %6 = arith.addf %3, %5 : vector<2x512xf32>
    %cst_5 = arith.constant 0.000000e+00 : f32
    %7 = vector.broadcast %cst_5 : f32 to vector<2x512xf32>
    %8 = arith.maximumf %6, %7 : vector<2x512xf32>
    %9 = arith.truncf %8 : vector<2x512xf32> to vector<2x512xbf16>
    %c0_6 = arith.constant 0 : index
    %c0_7 = arith.constant 0 : index
    %10 = vector.load %arg4[%c0_6, %c0_7] : memref<512x256xbf16, #tpu.memory_space<vmem>>, vector<512x256xbf16>
    %cst_8 = arith.constant dense<0.000000e+00> : vector<2x256xf32>
    %11 = tpu.matmul %9, %10, %cst_8 {dimension_numbers = #tpu.dot_dimension_numbers<[1], [0], [0], [1], [0, 0, 1, 1], [], []>} : vector<2x512xbf16>, vector<512x256xbf16>, vector<2x256xf32> -> vector<2x256xf32>
    %c0_9 = arith.constant 0 : index
    %c0_10 = arith.constant 0 : index
    %12 = vector.load %arg5[%c0_9, %c0_10] : memref<1x256xf32, #tpu.memory_space<vmem>>, vector<1x256xf32>
    %13 = vector.broadcast %12 : vector<1x256xf32> to vector<2x256xf32>
    %14 = arith.addf %11, %13 : vector<2x256xf32>
    %cst_11 = arith.constant 0.000000e+00 : f32
    %15 = vector.broadcast %cst_11 : f32 to vector<2x256xf32>
    %16 = arith.maximumf %14, %15 : vector<2x256xf32>
    %c0_12 = arith.constant 0 : index
    %c0_13 = arith.constant 0 : index
    %17 = vector.load %arg6[%c0_12, %c0_13] : memref<1x256xf32, #tpu.memory_space<vmem>>, vector<1x256xf32>
    %cst_14 = arith.constant dense<0.000000e+00> : vector<1x2xf32>
    %18 = tpu.matmul %17, %16, %cst_14 {dimension_numbers = #tpu.dot_dimension_numbers<[1], [1], [0], [0], [0, 0, 1, 0], [], []>} : vector<1x256xf32>, vector<2x256xf32>, vector<1x2xf32> -> vector<1x2xf32>
    %c0_15 = arith.constant 0 : index
    %c0_16 = arith.constant 0 : index
    %19 = memref.load %arg7[%c0_15, %c0_16] : memref<1x1xf32, #tpu.memory_space<smem>>
    %20 = vector.broadcast %19 : f32 to vector<1x2xf32>
    %21 = arith.addf %18, %20 : vector<1x2xf32>
    %c0_17 = arith.constant 0 : index
    %c0_18 = arith.constant 0 : index
    %22 = vector.load %arg8[%c0_17, %c0_18] : memref<1x2xf32, #tpu.memory_space<vmem>>, vector<1x2xf32>
    tpu.vector_store %arg8[%c0_17, %c0_18], %21 {strides = array<i32>} : memref<1x2xf32, #tpu.memory_space<vmem>>, vector<1x2xf32>,
    return
  }
  func.func @transform_0(%arg0: i32) -> (i32, i32) {
    %c0_i32 = arith.constant 0 : i32
    %c0_i32_0 = arith.constant 0 : i32
    return %arg0, %c0_i32 : i32, i32
  }
  func.func @transform_1(%arg0: i32) -> (i32, i32) {
    %c0_i32 = arith.constant 0 : i32
    %c0_i32_0 = arith.constant 0 : i32
    %c0_i32_1 = arith.constant 0 : i32
    return %c0_i32, %c0_i32_0 : i32, i32
  }
  func.func @transform_2(%arg0: i32) -> (i32, i32) {
    %c0_i32 = arith.constant 0 : i32
    %c0_i32_0 = arith.constant 0 : i32
    %c0_i32_1 = arith.constant 0 : i32
    return %c0_i32, %c0_i32_0 : i32, i32
  }
  func.func @transform_3(%arg0: i32) -> (i32, i32) {
    %c0_i32 = arith.constant 0 : i32
    %c0_i32_0 = arith.constant 0 : i32
    %c0_i32_1 = arith.constant 0 : i32
    return %c0_i32, %c0_i32_0 : i32, i32
  }
  func.func @transform_4(%arg0: i32) -> (i32, i32) {
    %c0_i32 = arith.constant 0 : i32
    %c0_i32_0 = arith.constant 0 : i32
    %c0_i32_1 = arith.constant 0 : i32
    return %c0_i32, %c0_i32_0 : i32, i32
  }
  func.func @transform_5(%arg0: i32) -> (i32, i32) {
    %c0_i32 = arith.constant 0 : i32
    %c0_i32_0 = arith.constant 0 : i32
    %c0_i32_1 = arith.constant 0 : i32
    return %c0_i32, %c0_i32_0 : i32, i32
  }
  func.func @transform_6(%arg0: i32) -> (i32, i32) {
    %c0_i32 = arith.constant 0 : i32
    %c0_i32_0 = arith.constant 0 : i32
    %c0_i32_1 = arith.constant 0 : i32
    return %c0_i32, %c0_i32_0 : i32, i32
  }
  func.func @transform_7(%arg0: i32) -> (i32, i32) {
    %c0_i32 = arith.constant 0 : i32
    %c0_i32_0 = arith.constant 0 : i32
    return %c0_i32, %arg0 : i32, i32
  }
}

</mosaic_0001>

<llo_original>
// kernel: tpu_custom_call.1
$region0: #{tpu_custom_call.1}
  #allocation0 [shape = 'u32[]', space=smem, size = 0x4, offset = 0x4, fixed_abs, tag = 'smem constant byte address 0x4 - core index']
  #allocation1 [shape = 'u32[144,128]{1,0:T(1,128)}', space=vmem, size = 0x12000, scoped, tag = 'internal scratch']
  #allocation2 [shape = 'f32[1,1]{1,0:T(1,128)S(6)}', space=smem, size = 0x200, scoped, tag = 'scoped memory for tpu_custom_call.1']
  %s0 = inlined_call_operand.hbm [shape: f32[2,1024], index: 0, kind: input, shape index: {}]
  %s1 = inlined_call_operand.hbm [shape: bf16[1024,512], index: 1, kind: input, shape index: {}]
  %s2 = inlined_call_operand.vmem [shape: f32[1,512], index: 2, kind: input, shape index: {}]
  %s3 = inlined_call_operand.hbm [shape: bf16[512,256], index: 3, kind: input, shape index: {}]
  %s4 = inlined_call_operand.vmem [shape: f32[1,256], index: 4, kind: input, shape index: {}]
  %s5 = inlined_call_operand.vmem [shape: f32[1,256], index: 5, kind: input, shape index: {}]
  %s6 = inlined_call_operand.<no memory space> [shape: f32[1,1], index: 6, kind: input, shape index: {}]
  %s7 = inlined_call_operand.hbm [shape: f32[1,2], index: 7, kind: output, shape index: {}]
  %s8 = sld [smem:[#allocation0]]
  $region50: #{tpu_custom_call.1} parent=0
    _
  %s10 = ssub.s32 1, %s8
  %s11 = scalar_select 0, %s10, %s8
  %12 = sst [smem:[#allocation2]] %s6
  $region1: #{tpu_custom_call.1} parent=0
    #allocation3 [shape = 'u8[8192]{0}', space=vmem, size = 0x2000, scoped, tag = 'input window, operand 0, single buffered']
    #allocation4 [shape = 's32[1]{0}', space=sflag, size = 0x4, scoped, tag = 'scoped memory for tpu_custom_call.1']
    #allocation5 [shape = 's32[1]{0}', space=sflag, size = 0x4, scoped, tag = 'scoped memory for tpu_custom_call.1']
    #allocation6 [shape = 'u8[1048576]{0}', space=vmem, size = 0x100000, scoped, tag = 'input window, operand 1, single buffered']
    #allocation7 [shape = 's32[1]{0}', space=sflag, size = 0x4, scoped, tag = 'scoped memory for tpu_custom_call.1']
    #allocation8 [shape = 'u8[262144]{0}', space=vmem, size = 0x40000, scoped, tag = 'input window, operand 3, single buffered']
    #allocation9 [shape = 'u8[512]{0}', space=vmem, size = 0x400, scoped, tag = 'output window, operand 0, single buffered']
    %13 = vsyncpa [#allocation4], 0
    %14 = vsyncpa [#allocation7], 0
    %15 = vsyncpa [#allocation5], 0
    // Predicated region
    $region2: #{tpu_custom_call.1} parent=1 // pred_check
      _
    $region3: #{tpu_custom_call.1} parent=1 // pred_check_branch
      %17 = sbr.rel (0) target = $region5
    $region4: #{tpu_custom_call.1} parent=1 // pred_region
      %s19 = ssub.s32 256, 256
      %20 = vsyncadd [#allocation4], %s19
      %s22 = sshll.u32 [#allocation3], 4
      %s23 = int_to_ptr.vmem [resolvable:$true] %s22
      %25 = dma.hbm_to_vmem [thread:$0]  %s0, 256, %s23, [#allocation4]
    $region5: #{tpu_custom_call.1} parent=1 // pred_fallthru
      _
    // Predicated region
    $region6: #{tpu_custom_call.1} parent=1 // pred_check
      _
    $region7: #{tpu_custom_call.1} parent=1 // pred_check_branch
      %27 = sbr.rel (0) target = $region9
    $region8: #{tpu_custom_call.1} parent=1 // pred_region
      %s29 = ssub.s32 32768, 32768
      %30 = vsyncadd [#allocation7], %s29
      %s31 = sshll.u32 [#allocation6], 4
      %s32 = int_to_ptr.vmem [resolvable:$true] %s31
      %37 = dma.hbm_to_vmem [thread:$0]  %s1, 32768, %s32, [#allocation7], 256, 256, 16
    $region9: #{tpu_custom_call.1} parent=1 // pred_fallthru
      _
    // Predicated region
    $region10: #{tpu_custom_call.1} parent=1 // pred_check
      _
    $region11: #{tpu_custom_call.1} parent=1 // pred_check_branch
      %39 = sbr.rel (0) target = $region13
    $region12: #{tpu_custom_call.1} parent=1 // pred_region
      _
    $region13: #{tpu_custom_call.1} parent=1 // pred_fallthru
      _
    // Predicated region
    $region14: #{tpu_custom_call.1} parent=1 // pred_check
      _
    $region15: #{tpu_custom_call.1} parent=1 // pred_check_branch
      %41 = sbr.rel (0) target = $region17
    $region16: #{tpu_custom_call.1} parent=1 // pred_region
      %s43 = ssub.s32 8192, 8192
      %44 = vsyncadd [#allocation7], %s43
      %s45 = sshll.u32 [#allocation8], 4
      %s46 = int_to_ptr.vmem [resolvable:$true] %s45
      %51 = dma.hbm_to_vmem [thread:$0]  %s3, 8192, %s46, [#allocation7], 128, 128, 8
    $region17: #{tpu_custom_call.1} parent=1 // pred_fallthru
      _
    // Predicated region
    $region18: #{tpu_custom_call.1} parent=1 // pred_check
      _
    $region19: #{tpu_custom_call.1} parent=1 // pred_check_branch
      %53 = sbr.rel (0) target = $region21
    $region20: #{tpu_custom_call.1} parent=1 // pred_region
      _
    $region21: #{tpu_custom_call.1} parent=1 // pred_fallthru
      _
    // Predicated region
    $region22: #{tpu_custom_call.1} parent=1 // pred_check
      _
    $region23: #{tpu_custom_call.1} parent=1 // pred_check_branch
      %55 = sbr.rel (0) target = $region25
    $region24: #{tpu_custom_call.1} parent=1 // pred_region
      _
    $region25: #{tpu_custom_call.1} parent=1 // pred_fallthru
      _
    // Predicated region
    $region26: #{tpu_custom_call.1} parent=1 // pred_check
      _
    $region27: #{tpu_custom_call.1} parent=1 // pred_check_branch
      %57 = sbr.rel (0) target = $region29
    $region28: #{tpu_custom_call.1} parent=1 // pred_region
      _
    $region29: #{tpu_custom_call.1} parent=1 // pred_fallthru
      _
    // Predicated region
    $region30: #{tpu_custom_call.1} parent=1 // pred_check
      _
    $region31: #{tpu_custom_call.1} parent=1 // pred_check_branch
      %59 = sbr.rel (0) target = $region33
    $region32: #{tpu_custom_call.1} parent=1 // pred_region
      %60 = dma.done [#allocation4], 256
    $region33: #{tpu_custom_call.1} parent=1 // pred_fallthru
      _
    // Predicated region
    $region34: #{tpu_custom_call.1} parent=1 // pred_check
      _
    $region35: #{tpu_custom_call.1} parent=1 // pred_check_branch
      %62 = sbr.rel (0) target = $region37
    $region36: #{tpu_custom_call.1} parent=1 // pred_region
      %63 = dma.done [#allocation7], 32768
    $region37: #{tpu_custom_call.1} parent=1 // pred_fallthru
      _
    // Predicated region
    $region38: #{tpu_custom_call.1} parent=1 // pred_check
      _
    $region39: #{tpu_custom_call.1} parent=1 // pred_check_branch
      %65 = sbr.rel (0) target = $region41
    $region40: #{tpu_custom_call.1} parent=1 // pred_region
      %66 = dma.done [#allocation7], 8192
    $region41: #{tpu_custom_call.1} parent=1 // pred_fallthru
      _
    %v67 = vld [vmem:[#allocation3] sm:$0xff]
    %v68 = vld [vmem:[#allocation3 + $0x8] sm:$0xff]
    %v71 = vcombine.high %v67, %v67
    %v73 = vunpack.c.l.s4 1983009808
    %v74 = vunpack.c.0.s8 %v73
    %v75 = vlaneseq
    %v76 = vshrl.u32 %v75, 7
    %v77 = vsub.s32 %v74, %v76
    %v78 = vrot.slane %v67, %v77
    %v80 = vunpack.c.l.s4 1983009808
    %v81 = vunpack.c.0.s8 %v80
    %v82 = vlaneseq
    %v83 = vshrl.u32 %v82, 7
    %v84 = vsub.s32 %v81, %v83
    %v85 = vrot.slane %v71, %v84
    %v86 = vcombine.high %v78, %v78
    %v87 = vcombine.high %v85, %v85
    %v88 = vcombine.high %v68, %v68
    %v90 = vunpack.c.l.s4 1983009808
    %v91 = vunpack.c.0.s8 %v90
    %v92 = vlaneseq
    %v93 = vshrl.u32 %v92, 7
    %v94 = vsub.s32 %v91, %v93
    %v95 = vrot.slane %v68, %v94
    %v97 = vunpack.c.l.s4 1983009808
    %v98 = vunpack.c.0.s8 %v97
    %v99 = vlaneseq
    %v100 = vshrl.u32 %v99, 7
    %v101 = vsub.s32 %v98, %v100
    %v102 = vrot.slane %v88, %v101
    %v103 = vcombine.high %v95, %v95
    %v104 = vcombine.high %v102, %v102
    %v113 = vpack.c.bf16 %v78, %v78
    %v114 = vpack.c.bf16 %v86, %v86
    %v115 = vpack.c.bf16 %v85, %v85
    %v116 = vpack.c.bf16 %v87, %v87
    %v117 = vpack.c.bf16 %v95, %v95
    %v118 = vpack.c.bf16 %v103, %v103
    %v119 = vpack.c.bf16 %v102, %v102
    %v120 = vpack.c.bf16 %v104, %v104
    %v121 = vld [vmem:[#allocation6] sm:$0xff]
    %v122 = vld [vmem:[#allocation6 + $0x8] sm:$0xff]
    %v123 = vld [vmem:[#allocation6 + $0x10] sm:$0xff]
    %v124 = vld [vmem:[#allocation6 + $0x18] sm:$0xff]
    %v125 = vld [vmem:[#allocation6 + $0x20] sm:$0xff]
    %v126 = vld [vmem:[#allocation6 + $0x28] sm:$0xff]
    %v127 = vld [vmem:[#allocation6 + $0x30] sm:$0xff]
    %v128 = vld [vmem:[#allocation6 + $0x38] sm:$0xff]
    %v129 = vld [vmem:[#allocation6 + $0x40] sm:$0xff]
    %v130 = vld [vmem:[#allocation6 + $0x48] sm:$0xff]
    %v131 = vld [vmem:[#allocation6 + $0x50] sm:$0xff]
    %v132 = vld [vmem:[#allocation6 + $0x58] sm:$0xff]
    %v133 = vld [vmem:[#allocation6 + $0x60] sm:$0xff]
    %v134 = vld [vmem:[#allocation6 + $0x68] sm:$0xff]
    %v135 = vld [vmem:[#allocation6 + $0x70] sm:$0xff]
    %v136 = vld [vmem:[#allocation6 + $0x78] sm:$0xff]
    %v137 = vld [vmem:[#allocation6 + $0x80] sm:$0xff]
    %v138 = vld [vmem:[#allocation6 + $0x88] sm:$0xff]
    %v139 = vld [vmem:[#allocation6 + $0x90] sm:$0xff]
    %v140 = vld [vmem:[#allocation6 + $0x98] sm:$0xff]
    %v141 = vld [vmem:[#allocation6 + $0xa0] sm:$0xff]
    %v142 = vld [vmem:[#allocation6 + $0xa8] sm:$0xff]
    %v143 = vld [vmem:[#allocation6 + $0xb0] sm:$0xff]
    %v144 = vld [vmem:[#allocation6 + $0xb8] sm:$0xff]
    %v145 = vld [vmem:[#allocation6 + $0xc0] sm:$0xff]
    %v146 = vld [vmem:[#allocation6 + $0xc8] sm:$0xff]
    %v147 = vld [vmem:[#allocation6 + $0xd0] sm:$0xff]
    %v148 = vld [vmem:[#allocation6 + $0xd8] sm:$0xff]
    %v149 = vld [vmem:[#allocation6 + $0xe0] sm:$0xff]
    %v150 = vld [vmem:[#allocation6 + $0xe8] sm:$0xff]
    %v151 = vld [vmem:[#allocation6 + $0xf0] sm:$0xff]
    %v152 = vld [vmem:[#allocation6 + $0xf8] sm:$0xff]
    %v153 = vld [vmem:[#allocation6 + $0x100] sm:$0xff]
    %v154 = vld [vmem:[#allocation6 + $0x108] sm:$0xff]
    %v155 = vld [vmem:[#allocation6 + $0x110] sm:$0xff]
    %v156 = vld [vmem:[#allocation6 + $0x118] sm:$0xff]
    %v157 = vld [vmem:[#allocation6 + $0x120] sm:$0xff]
    %v158 = vld [vmem:[#allocation6 + $0x128] sm:$0xff]
    %v159 = vld [vmem:[#allocation6 + $0x130] sm:$0xff]
    %v160 = vld [vmem:[#allocation6 + $0x138] sm:$0xff]
    %v161 = vld [vmem:[#allocation6 + $0x140] sm:$0xff]
    %v162 = vld [vmem:[#allocation6 + $0x148] sm:$0xff]
    %v163 = vld [vmem:[#allocation6 + $0x150] sm:$0xff]
    %v164 = vld [vmem:[#allocation6 + $0x158] sm:$0xff]
    %v165 = vld [vmem:[#allocation6 + $0x160] sm:$0xff]
    %v166 = vld [vmem:[#allocation6 + $0x168] sm:$0xff]
    %v167 = vld [vmem:[#allocation6 + $0x170] sm:$0xff]
    %v168 = vld [vmem:[#allocation6 + $0x178] sm:$0xff]
    %v169 = vld [vmem:[#allocation6 + $0x180] sm:$0xff]
    %v170 = vld [vmem:[#allocation6 + $0x188] sm:$0xff]
    %v171 = vld [vmem:[#allocation6 + $0x190] sm:$0xff]
    %v172 = vld [vmem:[#allocation6 + $0x198] sm:$0xff]
    %v173 = vld [vmem:[#allocation6 + $0x1a0] sm:$0xff]
    %v174 = vld [vmem:[#allocation6 + $0x1a8] sm:$0xff]
    %v175 = vld [vmem:[#allocation6 + $0x1b0] sm:$0xff]
    %v176 = vld [vmem:[#allocation6 + $0x1b8] sm:$0xff]
    %v177 = vld [vmem:[#allocation6 + $0x1c0] sm:$0xff]
    %v178 = vld [vmem:[#allocation6 + $0x1c8] sm:$0xff]
    %v179 = vld [vmem:[#allocation6 + $0x1d0] sm:$0xff]
    %v180 = vld [vmem:[#allocation6 + $0x1d8] sm:$0xff]
    %v181 = vld [vmem:[#allocation6 + $0x1e0] sm:$0xff]
    %v182 = vld [vmem:[#allocation6 + $0x1e8] sm:$0xff]
    %v183 = vld [vmem:[#allocation6 + $0x1f0] sm:$0xff]
    %v184 = vld [vmem:[#allocation6 + $0x1f8] sm:$0xff]
    %v185 = vld [vmem:[#allocation6 + $0x200] sm:$0xff]
    %v186 = vld [vmem:[#allocation6 + $0x208] sm:$0xff]
    %v187 = vld [vmem:[#allocation6 + $0x210] sm:$0xff]
    %v188 = vld [vmem:[#allocation6 + $0x218] sm:$0xff]
    %v189 = vld [vmem:[#allocation6 + $0x220] sm:$0xff]
    %v190 = vld [vmem:[#allocation6 + $0x228] sm:$0xff]
    %v191 = vld [vmem:[#allocation6 + $0x230] sm:$0xff]
    %v192 = vld [vmem:[#allocation6 + $0x238] sm:$0xff]
    %v193 = vld [vmem:[#allocation6 + $0x240] sm:$0xff]
    %v194 = vld [vmem:[#allocation6 + $0x248] sm:$0xff]
    %v195 = vld [vmem:[#allocation6 + $0x250] sm:$0xff]
    %v196 = vld [vmem:[#allocation6 + $0x258] sm:$0xff]
    %v197 = vld [vmem:[#allocation6 + $0x260] sm:$0xff]
    %v198 = vld [vmem:[#allocation6 + $0x268] sm:$0xff]
    %v199 = vld [vmem:[#allocation6 + $0x270] sm:$0xff]
    %v200 = vld [vmem:[#allocation6 + $0x278] sm:$0xff]
    %v201 = vld [vmem:[#allocation6 + $0x280] sm:$0xff]
    %v202 = vld [vmem:[#allocation6 + $0x288] sm:$0xff]
    %v203 = vld [vmem:[#allocation6 + $0x290] sm:$0xff]
    %v204 = vld [vmem:[#allocation6 + $0x298] sm:$0xff]
    %v205 = vld [vmem:[#allocation6 + $0x2a0] sm:$0xff]
    %v206 = vld [vmem:[#allocation6 + $0x2a8] sm:$0xff]
    %v207 = vld [vmem:[#allocation6 + $0x2b0] sm:$0xff]
    %v208 = vld [vmem:[#allocation6 + $0x2b8] sm:$0xff]
    %v209 = vld [vmem:[#allocation6 + $0x2c0] sm:$0xff]
    %v210 = vld [vmem:[#allocation6 + $0x2c8] sm:$0xff]
    %v211 = vld [vmem:[#allocation6 + $0x2d0] sm:$0xff]
    %v212 = vld [vmem:[#allocation6 + $0x2d8] sm:$0xff]
    %v213 = vld [vmem:[#allocation6 + $0x2e0] sm:$0xff]
    %v214 = vld [vmem:[#allocation6 + $0x2e8] sm:$0xff]
    %v215 = vld [vmem:[#allocation6 + $0x2f0] sm:$0xff]
    %v216 = vld [vmem:[#allocation6 + $0x2f8] sm:$0xff]
    %v217 = vld [vmem:[#allocation6 + $0x300] sm:$0xff]
    %v218 = vld [vmem:[#allocation6 + $0x308] sm:$0xff]
    %v219 = vld [vmem:[#allocation6 + $0x310] sm:$0xff]
    %v220 = vld [vmem:[#allocation6 + $0x318] sm:$0xff]
    %v221 = vld [vmem:[#allocation6 + $0x320] sm:$0xff]
    %v222 = vld [vmem:[#allocation6 + $0x328] sm:$0xff]
    %v223 = vld [vmem:[#allocation6 + $0x330] sm:$0xff]
    %v224 = vld [vmem:[#allocation6 + $0x338] sm:$0xff]
    %v225 = vld [vmem:[#allocation6 + $0x340] sm:$0xff]
    %v226 = vld [vmem:[#allocation6 + $0x348] sm:$0xff]
    %v227 = vld [vmem:[#allocation6 + $0x350] sm:$0xff]
    %v228 = vld [vmem:[#allocation6 + $0x358] sm:$0xff]
    %v229 = vld [vmem:[#allocation6 + $0x360] sm:$0xff]
    %v230 = vld [vmem:[#allocation6 + $0x368] sm:$0xff]
    %v231 = vld [vmem:[#allocation6 + $0x370] sm:$0xff]
    %v232 = vld [vmem:[#allocation6 + $0x378] sm:$0xff]
    %v233 = vld [vmem:[#allocation6 + $0x380] sm:$0xff]
    %v234 = vld [vmem:[#allocation6 + $0x388] sm:$0xff]
    %v235 = vld [vmem:[#allocation6 + $0x390] sm:$0xff]
    %v236 = vld [vmem:[#allocation6 + $0x398] sm:$0xff]
    %v237 = vld [vmem:[#allocation6 + $0x3a0] sm:$0xff]
    %v238 = vld [vmem:[#allocation6 + $0x3a8] sm:$0xff]
    %v239 = vld [vmem:[#allocation6 + $0x3b0] sm:$0xff]
    %v240 = vld [vmem:[#allocation6 + $0x3b8] sm:$0xff]
    %v241 = vld [vmem:[#allocation6 + $0x3c0] sm:$0xff]
    %v242 = vld [vmem:[#allocation6 + $0x3c8] sm:$0xff]
    %v243 = vld [vmem:[#allocation6 + $0x3d0] sm:$0xff]
    %v244 = vld [vmem:[#allocation6 + $0x3d8] sm:$0xff]
    %v245 = vld [vmem:[#allocation6 + $0x3e0] sm:$0xff]
    %v246 = vld [vmem:[#allocation6 + $0x3e8] sm:$0xff]
    %v247 = vld [vmem:[#allocation6 + $0x3f0] sm:$0xff]
    %v248 = vld [vmem:[#allocation6 + $0x3f8] sm:$0xff]
    %v249 = vld [vmem:[#allocation6 + $0x400] sm:$0xff]
    %v250 = vld [vmem:[#allocation6 + $0x408] sm:$0xff]
    %v251 = vld [vmem:[#allocation6 + $0x410] sm:$0xff]
    %v252 = vld [vmem:[#allocation6 + $0x418] sm:$0xff]
    %v253 = vld [vmem:[#allocation6 + $0x420] sm:$0xff]
    %v254 = vld [vmem:[#allocation6 + $0x428] sm:$0xff]
    %v255 = vld [vmem:[#allocation6 + $0x430] sm:$0xff]
    %v256 = vld [vmem:[#allocation6 + $0x438] sm:$0xff]
    %v257 = vld [vmem:[#allocation6 + $0x440] sm:$0xff]
    %v258 = vld [vmem:[#allocation6 + $0x448] sm:$0xff]
    %v259 = vld [vmem:[#allocation6 + $0x450] sm:$0xff]
    %v260 = vld [vmem:[#allocation6 + $0x458] sm:$0xff]
    %v261 = vld [vmem:[#allocation6 + $0x460] sm:$0xff]
    %v262 = vld [vmem:[#allocation6 + $0x468] sm:$0xff]
    %v263 = vld [vmem:[#allocation6 + $0x470] sm:$0xff]
    %v264 = vld [vmem:[#allocation6 + $0x478] sm:$0xff]
    %v265 = vld [vmem:[#allocation6 + $0x480] sm:$0xff]
    %v266 = vld [vmem:[#allocation6 + $0x488] sm:$0xff]
    %v267 = vld [vmem:[#allocation6 + $0x490] sm:$0xff]
    %v268 = vld [vmem:[#allocation6 + $0x498] sm:$0xff]
    %v269 = vld [vmem:[#allocation6 + $0x4a0] sm:$0xff]
    %v270 = vld [vmem:[#allocation6 + $0x4a8] sm:$0xff]
    %v271 = vld [vmem:[#allocation6 + $0x4b0] sm:$0xff]
    %v272 = vld [vmem:[#allocation6 + $0x4b8] sm:$0xff]
    %v273 = vld [vmem:[#allocation6 + $0x4c0] sm:$0xff]
    %v274 = vld [vmem:[#allocation6 + $0x4c8] sm:$0xff]
    %v275 = vld [vmem:[#allocation6 + $0x4d0] sm:$0xff]
    %v276 = vld [vmem:[#allocation6 + $0x4d8] sm:$0xff]
    %v277 = vld [vmem:[#allocation6 + $0x4e0] sm:$0xff]
    %v278 = vld [vmem:[#allocation6 + $0x4e8] sm:$0xff]
    %v279 = vld [vmem:[#allocation6 + $0x4f0] sm:$0xff]
    %v280 = vld [vmem:[#allocation6 + $0x4f8] sm:$0xff]
    %v281 = vld [vmem:[#allocation6 + $0x500] sm:$0xff]
    %v282 = vld [vmem:[#allocation6 + $0x508] sm:$0xff]
    %v283 = vld [vmem:[#allocation6 + $0x510] sm:$0xff]
    %v284 = vld [vmem:[#allocation6 + $0x518] sm:$0xff]
    %v285 = vld [vmem:[#allocation6 + $0x520] sm:$0xff]
    %v286 = vld [vmem:[#allocation6 + $0x528] sm:$0xff]
    %v287 = vld [vmem:[#allocation6 + $0x530] sm:$0xff]
    %v288 = vld [vmem:[#allocation6 + $0x538] sm:$0xff]
    %v289 = vld [vmem:[#allocation6 + $0x540] sm:$0xff]
    %v290 = vld [vmem:[#allocation6 + $0x548] sm:$0xff]
    %v291 = vld [vmem:[#allocation6 + $0x550] sm:$0xff]
    %v292 = vld [vmem:[#allocation6 + $0x558] sm:$0xff]
    %v293 = vld [vmem:[#allocation6 + $0x560] sm:$0xff]
    %v294 = vld [vmem:[#allocation6 + $0x568] sm:$0xff]
    %v295 = vld [vmem:[#allocation6 + $0x570] sm:$0xff]
    %v296 = vld [vmem:[#allocation6 + $0x578] sm:$0xff]
    %v297 = vld [vmem:[#allocation6 + $0x580] sm:$0xff]
    %v298 = vld [vmem:[#allocation6 + $0x588] sm:$0xff]
    %v299 = vld [vmem:[#allocation6 + $0x590] sm:$0xff]
    %v300 = vld [vmem:[#allocation6 + $0x598] sm:$0xff]
    %v301 = vld [vmem:[#allocation6 + $0x5a0] sm:$0xff]
    %v302 = vld [vmem:[#allocation6 + $0x5a8] sm:$0xff]
    %v303 = vld [vmem:[#allocation6 + $0x5b0] sm:$0xff]
    %v304 = vld [vmem:[#allocation6 + $0x5b8] sm:$0xff]
    %v305 = vld [vmem:[#allocation6 + $0x5c0] sm:$0xff]
    %v306 = vld [vmem:[#allocation6 + $0x5c8] sm:$0xff]
    %v307 = vld [vmem:[#allocation6 + $0x5d0] sm:$0xff]
    %v308 = vld [vmem:[#allocation6 + $0x5d8] sm:$0xff]
    %v309 = vld [vmem:[#allocation6 + $0x5e0] sm:$0xff]
    %v310 = vld [vmem:[#allocation6 + $0x5e8] sm:$0xff]
    %v311 = vld [vmem:[#allocation6 + $0x5f0] sm:$0xff]
    %v312 = vld [vmem:[#allocation6 + $0x5f8] sm:$0xff]
    %v313 = vld [vmem:[#allocation6 + $0x600] sm:$0xff]
    %v314 = vld [vmem:[#allocation6 + $0x608] sm:$0xff]
    %v315 = vld [vmem:[#allocation6 + $0x610] sm:$0xff]
    %v316 = vld [vmem:[#allocation6 + $0x618] sm:$0xff]
    %v317 = vld [vmem:[#allocation6 + $0x620] sm:$0xff]
    %v318 = vld [vmem:[#allocation6 + $0x628] sm:$0xff]
    %v319 = vld [vmem:[#allocation6 + $0x630] sm:$0xff]
    %v320 = vld [vmem:[#allocation6 + $0x638] sm:$0xff]
    %v321 = vld [vmem:[#allocation6 + $0x640] sm:$0xff]
    %v322 = vld [vmem:[#allocation6 + $0x648] sm:$0xff]
    %v323 = vld [vmem:[#allocation6 + $0x650] sm:$0xff]
    %v324 = vld [vmem:[#allocation6 + $0x658] sm:$0xff]
    %v325 = vld [vmem:[#allocation6 + $0x660] sm:$0xff]
    %v326 = vld [vmem:[#allocation6 + $0x668] sm:$0xff]
    %v327 = vld [vmem:[#allocation6 + $0x670] sm:$0xff]
    %v328 = vld [vmem:[#allocation6 + $0x678] sm:$0xff]
    %v329 = vld [vmem:[#allocation6 + $0x680] sm:$0xff]
    %v330 = vld [vmem:[#allocation6 + $0x688] sm:$0xff]
    %v331 = vld [vmem:[#allocation6 + $0x690] sm:$0xff]
    %v332 = vld [vmem:[#allocation6 + $0x698] sm:$0xff]
    %v333 = vld [vmem:[#allocation6 + $0x6a0] sm:$0xff]
    %v334 = vld [vmem:[#allocation6 + $0x6a8] sm:$0xff]
    %v335 = vld [vmem:[#allocation6 + $0x6b0] sm:$0xff]
    %v336 = vld [vmem:[#allocation6 + $0x6b8] sm:$0xff]
    %v337 = vld [vmem:[#allocation6 + $0x6c0] sm:$0xff]
    %v338 = vld [vmem:[#allocation6 + $0x6c8] sm:$0xff]
    %v339 = vld [vmem:[#allocation6 + $0x6d0] sm:$0xff]
    %v340 = vld [vmem:[#allocation6 + $0x6d8] sm:$0xff]
    %v341 = vld [vmem:[#allocation6 + $0x6e0] sm:$0xff]
    %v342 = vld [vmem:[#allocation6 + $0x6e8] sm:$0xff]
    %v343 = vld [vmem:[#allocation6 + $0x6f0] sm:$0xff]
    %v344 = vld [vmem:[#allocation6 + $0x6f8] sm:$0xff]
    %v345 = vld [vmem:[#allocation6 + $0x700] sm:$0xff]
    %v346 = vld [vmem:[#allocation6 + $0x708] sm:$0xff]
    %v347 = vld [vmem:[#allocation6 + $0x710] sm:$0xff]
    %v348 = vld [vmem:[#allocation6 + $0x718] sm:$0xff]
    %v349 = vld [vmem:[#allocation6 + $0x720] sm:$0xff]
    %v350 = vld [vmem:[#allocation6 + $0x728] sm:$0xff]
    %v351 = vld [vmem:[#allocation6 + $0x730] sm:$0xff]
    %v352 = vld [vmem:[#allocation6 + $0x738] sm:$0xff]
    %v353 = vld [vmem:[#allocation6 + $0x740] sm:$0xff]
    %v354 = vld [vmem:[#allocation6 + $0x748] sm:$0xff]
    %v355 = vld [vmem:[#allocation6 + $0x750] sm:$0xff]
    %v356 = vld [vmem:[#allocation6 + $0x758] sm:$0xff]
    %v357 = vld [vmem:[#allocation6 + $0x760] sm:$0xff]
    %v358 = vld [vmem:[#allocation6 + $0x768] sm:$0xff]
    %v359 = vld [vmem:[#allocation6 + $0x770] sm:$0xff]
    %v360 = vld [vmem:[#allocation6 + $0x778] sm:$0xff]
    %v361 = vld [vmem:[#allocation6 + $0x780] sm:$0xff]
    %v362 = vld [vmem:[#allocation6 + $0x788] sm:$0xff]
    %v363 = vld [vmem:[#allocation6 + $0x790] sm:$0xff]
    %v364 = vld [vmem:[#allocation6 + $0x798] sm:$0xff]
    %v365 = vld [vmem:[#allocation6 + $0x7a0] sm:$0xff]
    %v366 = vld [vmem:[#allocation6 + $0x7a8] sm:$0xff]
    %v367 = vld [vmem:[#allocation6 + $0x7b0] sm:$0xff]
    %v368 = vld [vmem:[#allocation6 + $0x7b8] sm:$0xff]
    %v369 = vld [vmem:[#allocation6 + $0x7c0] sm:$0xff]
    %v370 = vld [vmem:[#allocation6 + $0x7c8] sm:$0xff]
    %v371 = vld [vmem:[#allocation6 + $0x7d0] sm:$0xff]
    %v372 = vld [vmem:[#allocation6 + $0x7d8] sm:$0xff]
    %v373 = vld [vmem:[#allocation6 + $0x7e0] sm:$0xff]
    %v374 = vld [vmem:[#allocation6 + $0x7e8] sm:$0xff]
    %v375 = vld [vmem:[#allocation6 + $0x7f0] sm:$0xff]
    %v376 = vld [vmem:[#allocation6 + $0x7f8] sm:$0xff]
    %v377 = vld [vmem:[%s2] sm:$0xf]
    %v379 = vlaneseq
    %v380 = vshrl.u32 %v379, 7
    %v381 = vsub.s32 0, %v380
    %v382 = vrot.slane %v377, %v381
    %v383 = vlaneseq
    %v384 = vshrl.u32 %v383, 7
    %v385 = vsub.s32 1, %v384
    %v386 = vrot.slane %v377, %v385
    %v387 = vlaneseq
    %v388 = vshrl.u32 %v387, 7
    %v389 = vsub.s32 2, %v388
    %v390 = vrot.slane %v377, %v389
    %v391 = vlaneseq
    %v392 = vshrl.u32 %v391, 7
    %v393 = vsub.s32 3, %v392
    %v394 = vrot.slane %v377, %v393
    %v655 = vunpack.c.l.b16 %v121
    %v656 = vunpack.c.h.b16 %v121
    %v657 = vunpack.c.l.b16 %v122
    %v658 = vunpack.c.h.b16 %v122
    %v659 = vunpack.c.l.b16 %v123
    %v660 = vunpack.c.h.b16 %v123
    %v661 = vunpack.c.l.b16 %v124
    %v662 = vunpack.c.h.b16 %v124
    %v663 = vunpack.c.l.b16 %v125
    %v664 = vunpack.c.h.b16 %v125
    %v665 = vunpack.c.l.b16 %v126
    %v666 = vunpack.c.h.b16 %v126
    %v667 = vunpack.c.l.b16 %v127
    %v668 = vunpack.c.h.b16 %v127
    %v669 = vunpack.c.l.b16 %v128
    %v670 = vunpack.c.h.b16 %v128
    %v671 = vunpack.c.l.b16 %v129
    %v672 = vunpack.c.h.b16 %v129
    %v673 = vunpack.c.l.b16 %v130
    %v674 = vunpack.c.h.b16 %v130
    %v675 = vunpack.c.l.b16 %v131
    %v676 = vunpack.c.h.b16 %v131
    %v677 = vunpack.c.l.b16 %v132
    %v678 = vunpack.c.h.b16 %v132
    %v679 = vunpack.c.l.b16 %v133
    %v680 = vunpack.c.h.b16 %v133
    %v681 = vunpack.c.l.b16 %v134
    %v682 = vunpack.c.h.b16 %v134
    %v683 = vunpack.c.l.b16 %v135
    %v684 = vunpack.c.h.b16 %v135
    %v685 = vunpack.c.l.b16 %v136
    %v686 = vunpack.c.h.b16 %v136
    %v687 = vunpack.c.l.b16 %v137
    %v688 = vunpack.c.h.b16 %v137
    %v689 = vunpack.c.l.b16 %v138
    %v690 = vunpack.c.h.b16 %v138
    %v691 = vunpack.c.l.b16 %v139
    %v692 = vunpack.c.h.b16 %v139
    %v693 = vunpack.c.l.b16 %v140
    %v694 = vunpack.c.h.b16 %v140
    %v695 = vunpack.c.l.b16 %v141
    %v696 = vunpack.c.h.b16 %v141
    %v697 = vunpack.c.l.b16 %v142
    %v698 = vunpack.c.h.b16 %v142
    %v699 = vunpack.c.l.b16 %v143
    %v700 = vunpack.c.h.b16 %v143
    %v701 = vunpack.c.l.b16 %v144
    %v702 = vunpack.c.h.b16 %v144
    %v703 = vunpack.c.l.b16 %v145
    %v704 = vunpack.c.h.b16 %v145
    %v705 = vunpack.c.l.b16 %v146
    %v706 = vunpack.c.h.b16 %v146
    %v707 = vunpack.c.l.b16 %v147
    %v708 = vunpack.c.h.b16 %v147
    %v709 = vunpack.c.l.b16 %v148
    %v710 = vunpack.c.h.b16 %v148
    %v711 = vunpack.c.l.b16 %v149
    %v712 = vunpack.c.h.b16 %v149
    %v713 = vunpack.c.l.b16 %v150
    %v714 = vunpack.c.h.b16 %v150
    %v715 = vunpack.c.l.b16 %v151
    %v716 = vunpack.c.h.b16 %v151
    %v717 = vunpack.c.l.b16 %v152
    %v718 = vunpack.c.h.b16 %v152
    %v719 = vunpack.c.l.b16 %v153
    %v720 = vunpack.c.h.b16 %v153
    %v721 = vunpack.c.l.b16 %v154
    %v722 = vunpack.c.h.b16 %v154
    %v723 = vunpack.c.l.b16 %v155
    %v724 = vunpack.c.h.b16 %v155
    %v725 = vunpack.c.l.b16 %v156
    %v726 = vunpack.c.h.b16 %v156
    %v727 = vunpack.c.l.b16 %v157
    %v728 = vunpack.c.h.b16 %v157
    %v729 = vunpack.c.l.b16 %v158
    %v730 = vunpack.c.h.b16 %v158
    %v731 = vunpack.c.l.b16 %v159
    %v732 = vunpack.c.h.b16 %v159
    %v733 = vunpack.c.l.b16 %v160
    %v734 = vunpack.c.h.b16 %v160
    %v735 = vunpack.c.l.b16 %v161
    %v736 = vunpack.c.h.b16 %v161
    %v737 = vunpack.c.l.b16 %v162
    %v738 = vunpack.c.h.b16 %v162
    %v739 = vunpack.c.l.b16 %v163
    %v740 = vunpack.c.h.b16 %v163
    %v741 = vunpack.c.l.b16 %v164
    %v742 = vunpack.c.h.b16 %v164
    %v743 = vunpack.c.l.b16 %v165
    %v744 = vunpack.c.h.b16 %v165
    %v745 = vunpack.c.l.b16 %v166
    %v746 = vunpack.c.h.b16 %v166
    %v747 = vunpack.c.l.b16 %v167
    %v748 = vunpack.c.h.b16 %v167
    %v749 = vunpack.c.l.b16 %v168
    %v750 = vunpack.c.h.b16 %v168
    %v751 = vunpack.c.l.b16 %v169
    %v752 = vunpack.c.h.b16 %v169
    %v753 = vunpack.c.l.b16 %v170
    %v754 = vunpack.c.h.b16 %v170
    %v755 = vunpack.c.l.b16 %v171
    %v756 = vunpack.c.h.b16 %v171
    %v757 = vunpack.c.l.b16 %v172
    %v758 = vunpack.c.h.b16 %v172
    %v759 = vunpack.c.l.b16 %v173
    %v760 = vunpack.c.h.b16 %v173
    %v761 = vunpack.c.l.b16 %v174
    %v762 = vunpack.c.h.b16 %v174
    %v763 = vunpack.c.l.b16 %v175
    %v764 = vunpack.c.h.b16 %v175
    %v765 = vunpack.c.l.b16 %v176
    %v766 = vunpack.c.h.b16 %v176
    %v767 = vunpack.c.l.b16 %v177
    %v768 = vunpack.c.h.b16 %v177
    %v769 = vunpack.c.l.b16 %v178
    %v770 = vunpack.c.h.b16 %v178
    %v771 = vunpack.c.l.b16 %v179
    %v772 = vunpack.c.h.b16 %v179
    %v773 = vunpack.c.l.b16 %v180
    %v774 = vunpack.c.h.b16 %v180
    %v775 = vunpack.c.l.b16 %v181
    %v776 = vunpack.c.h.b16 %v181
    %v777 = vunpack.c.l.b16 %v182
    %v778 = vunpack.c.h.b16 %v182
    %v779 = vunpack.c.l.b16 %v183
    %v780 = vunpack.c.h.b16 %v183
    %v781 = vunpack.c.l.b16 %v184
    %v782 = vunpack.c.h.b16 %v184
    %v783 = vunpack.c.l.b16 %v185
    %v784 = vunpack.c.h.b16 %v185
    %v785 = vunpack.c.l.b16 %v186
    %v786 = vunpack.c.h.b16 %v186
    %v787 = vunpack.c.l.b16 %v187
    %v788 = vunpack.c.h.b16 %v187
    %v789 = vunpack.c.l.b16 %v188
    %v790 = vunpack.c.h.b16 %v188
    %v791 = vunpack.c.l.b16 %v189
    %v792 = vunpack.c.h.b16 %v189
    %v793 = vunpack.c.l.b16 %v190
    %v794 = vunpack.c.h.b16 %v190
    %v795 = vunpack.c.l.b16 %v191
    %v796 = vunpack.c.h.b16 %v191
    %v797 = vunpack.c.l.b16 %v192
    %v798 = vunpack.c.h.b16 %v192
    %v799 = vunpack.c.l.b16 %v193
    %v800 = vunpack.c.h.b16 %v193
    %v801 = vunpack.c.l.b16 %v194
    %v802 = vunpack.c.h.b16 %v194
    %v803 = vunpack.c.l.b16 %v195
    %v804 = vunpack.c.h.b16 %v195
    %v805 = vunpack.c.l.b16 %v196
    %v806 = vunpack.c.h.b16 %v196
    %v807 = vunpack.c.l.b16 %v197
    %v808 = vunpack.c.h.b16 %v197
    %v809 = vunpack.c.l.b16 %v198
    %v810 = vunpack.c.h.b16 %v198
    %v811 = vunpack.c.l.b16 %v199
    %v812 = vunpack.c.h.b16 %v199
    %v813 = vunpack.c.l.b16 %v200
    %v814 = vunpack.c.h.b16 %v200
    %v815 = vunpack.c.l.b16 %v201
    %v816 = vunpack.c.h.b16 %v201
    %v817 = vunpack.c.l.b16 %v202
    %v818 = vunpack.c.h.b16 %v202
    %v819 = vunpack.c.l.b16 %v203
    %v820 = vunpack.c.h.b16 %v203
    %v821 = vunpack.c.l.b16 %v204
    %v822 = vunpack.c.h.b16 %v204
    %v823 = vunpack.c.l.b16 %v205
    %v824 = vunpack.c.h.b16 %v205
    %v825 = vunpack.c.l.b16 %v206
    %v826 = vunpack.c.h.b16 %v206
    %v827 = vunpack.c.l.b16 %v207
    %v828 = vunpack.c.h.b16 %v207
    %v829 = vunpack.c.l.b16 %v208
    %v830 = vunpack.c.h.b16 %v208
    %v831 = vunpack.c.l.b16 %v209
    %v832 = vunpack.c.h.b16 %v209
    %v833 = vunpack.c.l.b16 %v210
    %v834 = vunpack.c.h.b16 %v210
    %v835 = vunpack.c.l.b16 %v211
    %v836 = vunpack.c.h.b16 %v211
    %v837 = vunpack.c.l.b16 %v212
    %v838 = vunpack.c.h.b16 %v212
    %v839 = vunpack.c.l.b16 %v213
    %v840 = vunpack.c.h.b16 %v213
    %v841 = vunpack.c.l.b16 %v214
    %v842 = vunpack.c.h.b16 %v214
    %v843 = vunpack.c.l.b16 %v215
    %v844 = vunpack.c.h.b16 %v215
    %v845 = vunpack.c.l.b16 %v216
    %v846 = vunpack.c.h.b16 %v216
    %v847 = vunpack.c.l.b16 %v217
    %v848 = vunpack.c.h.b16 %v217
    %v849 = vunpack.c.l.b16 %v218
    %v850 = vunpack.c.h.b16 %v218
    %v851 = vunpack.c.l.b16 %v219
    %v852 = vunpack.c.h.b16 %v219
    %v853 = vunpack.c.l.b16 %v220
    %v854 = vunpack.c.h.b16 %v220
    %v855 = vunpack.c.l.b16 %v221
    %v856 = vunpack.c.h.b16 %v221
    %v857 = vunpack.c.l.b16 %v222
    %v858 = vunpack.c.h.b16 %v222
    %v859 = vunpack.c.l.b16 %v223
    %v860 = vunpack.c.h.b16 %v223
    %v861 = vunpack.c.l.b16 %v224
    %v862 = vunpack.c.h.b16 %v224
    %v863 = vunpack.c.l.b16 %v225
    %v864 = vunpack.c.h.b16 %v225
    %v865 = vunpack.c.l.b16 %v226
    %v866 = vunpack.c.h.b16 %v226
    %v867 = vunpack.c.l.b16 %v227
    %v868 = vunpack.c.h.b16 %v227
    %v869 = vunpack.c.l.b16 %v228
    %v870 = vunpack.c.h.b16 %v228
    %v871 = vunpack.c.l.b16 %v229
    %v872 = vunpack.c.h.b16 %v229
    %v873 = vunpack.c.l.b16 %v230
    %v874 = vunpack.c.h.b16 %v230
    %v875 = vunpack.c.l.b16 %v231
    %v876 = vunpack.c.h.b16 %v231
    %v877 = vunpack.c.l.b16 %v232
    %v878 = vunpack.c.h.b16 %v232
    %v879 = vunpack.c.l.b16 %v233
    %v880 = vunpack.c.h.b16 %v233
    %v881 = vunpack.c.l.b16 %v234
    %v882 = vunpack.c.h.b16 %v234
    %v883 = vunpack.c.l.b16 %v235
    %v884 = vunpack.c.h.b16 %v235
    %v885 = vunpack.c.l.b16 %v236
    %v886 = vunpack.c.h.b16 %v236
    %v887 = vunpack.c.l.b16 %v237
    %v888 = vunpack.c.h.b16 %v237
    %v889 = vunpack.c.l.b16 %v238
    %v890 = vunpack.c.h.b16 %v238
    %v891 = vunpack.c.l.b16 %v239
    %v892 = vunpack.c.h.b16 %v239
    %v893 = vunpack.c.l.b16 %v240
    %v894 = vunpack.c.h.b16 %v240
    %v895 = vunpack.c.l.b16 %v241
    %v896 = vunpack.c.h.b16 %v241
    %v897 = vunpack.c.l.b16 %v242
    %v898 = vunpack.c.h.b16 %v242
    %v899 = vunpack.c.l.b16 %v243
    %v900 = vunpack.c.h.b16 %v243
    %v901 = vunpack.c.l.b16 %v244
    %v902 = vunpack.c.h.b16 %v244
    %v903 = vunpack.c.l.b16 %v245
    %v904 = vunpack.c.h.b16 %v245
    %v905 = vunpack.c.l.b16 %v246
    %v906 = vunpack.c.h.b16 %v246
    %v907 = vunpack.c.l.b16 %v247
    %v908 = vunpack.c.h.b16 %v247
    %v909 = vunpack.c.l.b16 %v248
    %v910 = vunpack.c.h.b16 %v248
    %v911 = vunpack.c.l.b16 %v249
    %v912 = vunpack.c.h.b16 %v249
    %v913 = vunpack.c.l.b16 %v250
    %v914 = vunpack.c.h.b16 %v250
    %v915 = vunpack.c.l.b16 %v251
    %v916 = vunpack.c.h.b16 %v251
    %v917 = vunpack.c.l.b16 %v252
    %v918 = vunpack.c.h.b16 %v252
    %v919 = vunpack.c.l.b16 %v253
    %v920 = vunpack.c.h.b16 %v253
    %v921 = vunpack.c.l.b16 %v254
    %v922 = vunpack.c.h.b16 %v254
    %v923 = vunpack.c.l.b16 %v255
    %v924 = vunpack.c.h.b16 %v255
    %v925 = vunpack.c.l.b16 %v256
    %v926 = vunpack.c.h.b16 %v256
    %v927 = vunpack.c.l.b16 %v257
    %v928 = vunpack.c.h.b16 %v257
    %v929 = vunpack.c.l.b16 %v258
    %v930 = vunpack.c.h.b16 %v258
    %v931 = vunpack.c.l.b16 %v259
    %v932 = vunpack.c.h.b16 %v259
    %v933 = vunpack.c.l.b16 %v260
    %v934 = vunpack.c.h.b16 %v260
    %v935 = vunpack.c.l.b16 %v261
    %v936 = vunpack.c.h.b16 %v261
    %v937 = vunpack.c.l.b16 %v262
    %v938 = vunpack.c.h.b16 %v262
    %v939 = vunpack.c.l.b16 %v263
    %v940 = vunpack.c.h.b16 %v263
    %v941 = vunpack.c.l.b16 %v264
    %v942 = vunpack.c.h.b16 %v264
    %v943 = vunpack.c.l.b16 %v265
    %v944 = vunpack.c.h.b16 %v265
    %v945 = vunpack.c.l.b16 %v266
    %v946 = vunpack.c.h.b16 %v266
    %v947 = vunpack.c.l.b16 %v267
    %v948 = vunpack.c.h.b16 %v267
    %v949 = vunpack.c.l.b16 %v268
    %v950 = vunpack.c.h.b16 %v268
    %v951 = vunpack.c.l.b16 %v269
    %v952 = vunpack.c.h.b16 %v269
    %v953 = vunpack.c.l.b16 %v270
    %v954 = vunpack.c.h.b16 %v270
    %v955 = vunpack.c.l.b16 %v271
    %v956 = vunpack.c.h.b16 %v271
    %v957 = vunpack.c.l.b16 %v272
    %v958 = vunpack.c.h.b16 %v272
    %v959 = vunpack.c.l.b16 %v273
    %v960 = vunpack.c.h.b16 %v273
    %v961 = vunpack.c.l.b16 %v274
    %v962 = vunpack.c.h.b16 %v274
    %v963 = vunpack.c.l.b16 %v275
    %v964 = vunpack.c.h.b16 %v275
    %v965 = vunpack.c.l.b16 %v276
    %v966 = vunpack.c.h.b16 %v276
    %v967 = vunpack.c.l.b16 %v277
    %v968 = vunpack.c.h.b16 %v277
    %v969 = vunpack.c.l.b16 %v278
    %v970 = vunpack.c.h.b16 %v278
    %v971 = vunpack.c.l.b16 %v279
    %v972 = vunpack.c.h.b16 %v279
    %v973 = vunpack.c.l.b16 %v280
    %v974 = vunpack.c.h.b16 %v280
    %v975 = vunpack.c.l.b16 %v281
    %v976 = vunpack.c.h.b16 %v281
    %v977 = vunpack.c.l.b16 %v282
    %v978 = vunpack.c.h.b16 %v282
    %v979 = vunpack.c.l.b16 %v283
    %v980 = vunpack.c.h.b16 %v283
    %v981 = vunpack.c.l.b16 %v284
    %v982 = vunpack.c.h.b16 %v284
    %v983 = vunpack.c.l.b16 %v285
    %v984 = vunpack.c.h.b16 %v285
    %v985 = vunpack.c.l.b16 %v286
    %v986 = vunpack.c.h.b16 %v286
    %v987 = vunpack.c.l.b16 %v287
    %v988 = vunpack.c.h.b16 %v287
    %v989 = vunpack.c.l.b16 %v288
    %v990 = vunpack.c.h.b16 %v288
    %v991 = vunpack.c.l.b16 %v289
    %v992 = vunpack.c.h.b16 %v289
    %v993 = vunpack.c.l.b16 %v290
    %v994 = vunpack.c.h.b16 %v290
    %v995 = vunpack.c.l.b16 %v291
    %v996 = vunpack.c.h.b16 %v291
    %v997 = vunpack.c.l.b16 %v292
    %v998 = vunpack.c.h.b16 %v292
    %v999 = vunpack.c.l.b16 %v293
    %v1000 = vunpack.c.h.b16 %v293
    %v1001 = vunpack.c.l.b16 %v294
    %v1002 = vunpack.c.h.b16 %v294
    %v1003 = vunpack.c.l.b16 %v295
    %v1004 = vunpack.c.h.b16 %v295
    %v1005 = vunpack.c.l.b16 %v296
    %v1006 = vunpack.c.h.b16 %v296
    %v1007 = vunpack.c.l.b16 %v297
    %v1008 = vunpack.c.h.b16 %v297
    %v1009 = vunpack.c.l.b16 %v298
    %v1010 = vunpack.c.h.b16 %v298
    %v1011 = vunpack.c.l.b16 %v299
    %v1012 = vunpack.c.h.b16 %v299
    %v1013 = vunpack.c.l.b16 %v300
    %v1014 = vunpack.c.h.b16 %v300
    %v1015 = vunpack.c.l.b16 %v301
    %v1016 = vunpack.c.h.b16 %v301
    %v1017 = vunpack.c.l.b16 %v302
    %v1018 = vunpack.c.h.b16 %v302
    %v1019 = vunpack.c.l.b16 %v303
    %v1020 = vunpack.c.h.b16 %v303
    %v1021 = vunpack.c.l.b16 %v304
    %v1022 = vunpack.c.h.b16 %v304
    %v1023 = vunpack.c.l.b16 %v305
    %v1024 = vunpack.c.h.b16 %v305
    %v1025 = vunpack.c.l.b16 %v306
    %v1026 = vunpack.c.h.b16 %v306
    %v1027 = vunpack.c.l.b16 %v307
    %v1028 = vunpack.c.h.b16 %v307
    %v1029 = vunpack.c.l.b16 %v308
    %v1030 = vunpack.c.h.b16 %v308
    %v1031 = vunpack.c.l.b16 %v309
    %v1032 = vunpack.c.h.b16 %v309
    %v1033 = vunpack.c.l.b16 %v310
    %v1034 = vunpack.c.h.b16 %v310
    %v1035 = vunpack.c.l.b16 %v311
    %v1036 = vunpack.c.h.b16 %v311
    %v1037 = vunpack.c.l.b16 %v312
    %v1038 = vunpack.c.h.b16 %v312
    %v1039 = vunpack.c.l.b16 %v313
    %v1040 = vunpack.c.h.b16 %v313
    %v1041 = vunpack.c.l.b16 %v314
    %v1042 = vunpack.c.h.b16 %v314
    %v1043 = vunpack.c.l.b16 %v315
    %v1044 = vunpack.c.h.b16 %v315
    %v1045 = vunpack.c.l.b16 %v316
    %v1046 = vunpack.c.h.b16 %v316
    %v1047 = vunpack.c.l.b16 %v317
    %v1048 = vunpack.c.h.b16 %v317
    %v1049 = vunpack.c.l.b16 %v318
    %v1050 = vunpack.c.h.b16 %v318
    %v1051 = vunpack.c.l.b16 %v319
    %v1052 = vunpack.c.h.b16 %v319
    %v1053 = vunpack.c.l.b16 %v320
    %v1054 = vunpack.c.h.b16 %v320
    %v1055 = vunpack.c.l.b16 %v321
    %v1056 = vunpack.c.h.b16 %v321
    %v1057 = vunpack.c.l.b16 %v322
    %v1058 = vunpack.c.h.b16 %v322
    %v1059 = vunpack.c.l.b16 %v323
    %v1060 = vunpack.c.h.b16 %v323
    %v1061 = vunpack.c.l.b16 %v324
    %v1062 = vunpack.c.h.b16 %v324
    %v1063 = vunpack.c.l.b16 %v325
    %v1064 = vunpack.c.h.b16 %v325
    %v1065 = vunpack.c.l.b16 %v326
    %v1066 = vunpack.c.h.b16 %v326
    %v1067 = vunpack.c.l.b16 %v327
    %v1068 = vunpack.c.h.b16 %v327
    %v1069 = vunpack.c.l.b16 %v328
    %v1070 = vunpack.c.h.b16 %v328
    %v1071 = vunpack.c.l.b16 %v329
    %v1072 = vunpack.c.h.b16 %v329
    %v1073 = vunpack.c.l.b16 %v330
    %v1074 = vunpack.c.h.b16 %v330
    %v1075 = vunpack.c.l.b16 %v331
    %v1076 = vunpack.c.h.b16 %v331
    %v1077 = vunpack.c.l.b16 %v332
    %v1078 = vunpack.c.h.b16 %v332
    %v1079 = vunpack.c.l.b16 %v333
    %v1080 = vunpack.c.h.b16 %v333
    %v1081 = vunpack.c.l.b16 %v334
    %v1082 = vunpack.c.h.b16 %v334
    %v1083 = vunpack.c.l.b16 %v335
    %v1084 = vunpack.c.h.b16 %v335
    %v1085 = vunpack.c.l.b16 %v336
    %v1086 = vunpack.c.h.b16 %v336
    %v1087 = vunpack.c.l.b16 %v337
    %v1088 = vunpack.c.h.b16 %v337
    %v1089 = vunpack.c.l.b16 %v338
    %v1090 = vunpack.c.h.b16 %v338
    %v1091 = vunpack.c.l.b16 %v339
    %v1092 = vunpack.c.h.b16 %v339
    %v1093 = vunpack.c.l.b16 %v340
    %v1094 = vunpack.c.h.b16 %v340
    %v1095 = vunpack.c.l.b16 %v341
    %v1096 = vunpack.c.h.b16 %v341
    %v1097 = vunpack.c.l.b16 %v342
    %v1098 = vunpack.c.h.b16 %v342
    %v1099 = vunpack.c.l.b16 %v343
    %v1100 = vunpack.c.h.b16 %v343
    %v1101 = vunpack.c.l.b16 %v344
    %v1102 = vunpack.c.h.b16 %v344
    %v1103 = vunpack.c.l.b16 %v345
    %v1104 = vunpack.c.h.b16 %v345
    %v1105 = vunpack.c.l.b16 %v346
    %v1106 = vunpack.c.h.b16 %v346
    %v1107 = vunpack.c.l.b16 %v347
    %v1108 = vunpack.c.h.b16 %v347
    %v1109 = vunpack.c.l.b16 %v348
    %v1110 = vunpack.c.h.b16 %v348
    %v1111 = vunpack.c.l.b16 %v349
    %v1112 = vunpack.c.h.b16 %v349
    %v1113 = vunpack.c.l.b16 %v350
    %v1114 = vunpack.c.h.b16 %v350
    %v1115 = vunpack.c.l.b16 %v351
    %v1116 = vunpack.c.h.b16 %v351
    %v1117 = vunpack.c.l.b16 %v352
    %v1118 = vunpack.c.h.b16 %v352
    %v1119 = vunpack.c.l.b16 %v353
    %v1120 = vunpack.c.h.b16 %v353
    %v1121 = vunpack.c.l.b16 %v354
    %v1122 = vunpack.c.h.b16 %v354
    %v1123 = vunpack.c.l.b16 %v355
    %v1124 = vunpack.c.h.b16 %v355
    %v1125 = vunpack.c.l.b16 %v356
    %v1126 = vunpack.c.h.b16 %v356
    %v1127 = vunpack.c.l.b16 %v357
    %v1128 = vunpack.c.h.b16 %v357
    %v1129 = vunpack.c.l.b16 %v358
    %v1130 = vunpack.c.h.b16 %v358
    %v1131 = vunpack.c.l.b16 %v359
    %v1132 = vunpack.c.h.b16 %v359
    %v1133 = vunpack.c.l.b16 %v360
    %v1134 = vunpack.c.h.b16 %v360
    %v1135 = vunpack.c.l.b16 %v361
    %v1136 = vunpack.c.h.b16 %v361
    %v1137 = vunpack.c.l.b16 %v362
    %v1138 = vunpack.c.h.b16 %v362
    %v1139 = vunpack.c.l.b16 %v363
    %v1140 = vunpack.c.h.b16 %v363
    %v1141 = vunpack.c.l.b16 %v364
    %v1142 = vunpack.c.h.b16 %v364
    %v1143 = vunpack.c.l.b16 %v365
    %v1144 = vunpack.c.h.b16 %v365
    %v1145 = vunpack.c.l.b16 %v366
    %v1146 = vunpack.c.h.b16 %v366
    %v1147 = vunpack.c.l.b16 %v367
    %v1148 = vunpack.c.h.b16 %v367
    %v1149 = vunpack.c.l.b16 %v368
    %v1150 = vunpack.c.h.b16 %v368
    %v1151 = vunpack.c.l.b16 %v369
    %v1152 = vunpack.c.h.b16 %v369
    %v1153 = vunpack.c.l.b16 %v370
    %v1154 = vunpack.c.h.b16 %v370
    %v1155 = vunpack.c.l.b16 %v371
    %v1156 = vunpack.c.h.b16 %v371
    %v1157 = vunpack.c.l.b16 %v372
    %v1158 = vunpack.c.h.b16 %v372
    %v1159 = vunpack.c.l.b16 %v373
    %v1160 = vunpack.c.h.b16 %v373
    %v1161 = vunpack.c.l.b16 %v374
    %v1162 = vunpack.c.h.b16 %v374
    %v1163 = vunpack.c.l.b16 %v375
    %v1164 = vunpack.c.h.b16 %v375
    %v1165 = vunpack.c.l.b16 %v376
    %v1166 = vunpack.c.h.b16 %v376
    %v1167 = vpack.c.b16 %v659, %v655
    %v1168 = vpack.c.b16 %v660, %v656
    %v1169 = vpack.c.b16 %v661, %v657
    %v1170 = vpack.c.b16 %v662, %v658
    %v1171 = vpack.c.b16 %v667, %v663
    %v1172 = vpack.c.b16 %v668, %v664
    %v1173 = vpack.c.b16 %v669, %v665
    %v1174 = vpack.c.b16 %v670, %v666
    %v1175 = vpack.c.b16 %v675, %v671
    %v1176 = vpack.c.b16 %v676, %v672
    %v1177 = vpack.c.b16 %v677, %v673
    %v1178 = vpack.c.b16 %v678, %v674
    %v1179 = vpack.c.b16 %v683, %v679
    %v1180 = vpack.c.b16 %v684, %v680
    %v1181 = vpack.c.b16 %v685, %v681
    %v1182 = vpack.c.b16 %v686, %v682
    %v1183 = vpack.c.b16 %v691, %v687
    %v1184 = vpack.c.b16 %v692, %v688
    %v1185 = vpack.c.b16 %v693, %v689
    %v1186 = vpack.c.b16 %v694, %v690
    %v1187 = vpack.c.b16 %v699, %v695
    %v1188 = vpack.c.b16 %v700, %v696
    %v1189 = vpack.c.b16 %v701, %v697
    %v1190 = vpack.c.b16 %v702, %v698
    %v1191 = vpack.c.b16 %v707, %v703
    %v1192 = vpack.c.b16 %v708, %v704
    %v1193 = vpack.c.b16 %v709, %v705
    %v1194 = vpack.c.b16 %v710, %v706
    %v1195 = vpack.c.b16 %v715, %v711
    %v1196 = vpack.c.b16 %v716, %v712
    %v1197 = vpack.c.b16 %v717, %v713
    %v1198 = vpack.c.b16 %v718, %v714
    %v1199 = vpack.c.b16 %v723, %v719
    %v1200 = vpack.c.b16 %v724, %v720
    %v1201 = vpack.c.b16 %v725, %v721
    %v1202 = vpack.c.b16 %v726, %v722
    %v1203 = vpack.c.b16 %v731, %v727
    %v1204 = vpack.c.b16 %v732, %v728
    %v1205 = vpack.c.b16 %v733, %v729
    %v1206 = vpack.c.b16 %v734, %v730
    %v1207 = vpack.c.b16 %v739, %v735
    %v1208 = vpack.c.b16 %v740, %v736
    %v1209 = vpack.c.b16 %v741, %v737
    %v1210 = vpack.c.b16 %v742, %v738
    %v1211 = vpack.c.b16 %v747, %v743
    %v1212 = vpack.c.b16 %v748, %v744
    %v1213 = vpack.c.b16 %v749, %v745
    %v1214 = vpack.c.b16 %v750, %v746
    %v1215 = vpack.c.b16 %v755, %v751
    %v1216 = vpack.c.b16 %v756, %v752
    %v1217 = vpack.c.b16 %v757, %v753
    %v1218 = vpack.c.b16 %v758, %v754
    %v1219 = vpack.c.b16 %v763, %v759
    %v1220 = vpack.c.b16 %v764, %v760
    %v1221 = vpack.c.b16 %v765, %v761
    %v1222 = vpack.c.b16 %v766, %v762
    %v1223 = vpack.c.b16 %v771, %v767
    %v1224 = vpack.c.b16 %v772, %v768
    %v1225 = vpack.c.b16 %v773, %v769
    %v1226 = vpack.c.b16 %v774, %v770
    %v1227 = vpack.c.b16 %v779, %v775
    %v1228 = vpack.c.b16 %v780, %v776
    %v1229 = vpack.c.b16 %v781, %v777
    %v1230 = vpack.c.b16 %v782, %v778
    %v1231 = vpack.c.b16 %v787, %v783
    %v1232 = vpack.c.b16 %v788, %v784
    %v1233 = vpack.c.b16 %v789, %v785
    %v1234 = vpack.c.b16 %v790, %v786
    %v1235 = vpack.c.b16 %v795, %v791
    %v1236 = vpack.c.b16 %v796, %v792
    %v1237 = vpack.c.b16 %v797, %v793
    %v1238 = vpack.c.b16 %v798, %v794
    %v1239 = vpack.c.b16 %v803, %v799
    %v1240 = vpack.c.b16 %v804, %v800
    %v1241 = vpack.c.b16 %v805, %v801
    %v1242 = vpack.c.b16 %v806, %v802
    %v1243 = vpack.c.b16 %v811, %v807
    %v1244 = vpack.c.b16 %v812, %v808
    %v1245 = vpack.c.b16 %v813, %v809
    %v1246 = vpack.c.b16 %v814, %v810
    %v1247 = vpack.c.b16 %v819, %v815
    %v1248 = vpack.c.b16 %v820, %v816
    %v1249 = vpack.c.b16 %v821, %v817
    %v1250 = vpack.c.b16 %v822, %v818
    %v1251 = vpack.c.b16 %v827, %v823
    %v1252 = vpack.c.b16 %v828, %v824
    %v1253 = vpack.c.b16 %v829, %v825
    %v1254 = vpack.c.b16 %v830, %v826
    %v1255 = vpack.c.b16 %v835, %v831
    %v1256 = vpack.c.b16 %v836, %v832
    %v1257 = vpack.c.b16 %v837, %v833
    %v1258 = vpack.c.b16 %v838, %v834
    %v1259 = vpack.c.b16 %v843, %v839
    %v1260 = vpack.c.b16 %v844, %v840
    %v1261 = vpack.c.b16 %v845, %v841
    %v1262 = vpack.c.b16 %v846, %v842
    %v1263 = vpack.c.b16 %v851, %v847
    %v1264 = vpack.c.b16 %v852, %v848
    %v1265 = vpack.c.b16 %v853, %v849
    %v1266 = vpack.c.b16 %v854, %v850
    %v1267 = vpack.c.b16 %v859, %v855
    %v1268 = vpack.c.b16 %v860, %v856
    %v1269 = vpack.c.b16 %v861, %v857
    %v1270 = vpack.c.b16 %v862, %v858
    %v1271 = vpack.c.b16 %v867, %v863
    %v1272 = vpack.c.b16 %v868, %v864
    %v1273 = vpack.c.b16 %v869, %v865
    %v1274 = vpack.c.b16 %v870, %v866
    %v1275 = vpack.c.b16 %v875, %v871
    %v1276 = vpack.c.b16 %v876, %v872
    %v1277 = vpack.c.b16 %v877, %v873
    %v1278 = vpack.c.b16 %v878, %v874
    %v1279 = vpack.c.b16 %v883, %v879
    %v1280 = vpack.c.b16 %v884, %v880
    %v1281 = vpack.c.b16 %v885, %v881
    %v1282 = vpack.c.b16 %v886, %v882
    %v1283 = vpack.c.b16 %v891, %v887
    %v1284 = vpack.c.b16 %v892, %v888
    %v1285 = vpack.c.b16 %v893, %v889
    %v1286 = vpack.c.b16 %v894, %v890
    %v1287 = vpack.c.b16 %v899, %v895
    %v1288 = vpack.c.b16 %v900, %v896
    %v1289 = vpack.c.b16 %v901, %v897
    %v1290 = vpack.c.b16 %v902, %v898
    %v1291 = vpack.c.b16 %v907, %v903
    %v1292 = vpack.c.b16 %v908, %v904
    %v1293 = vpack.c.b16 %v909, %v905
    %v1294 = vpack.c.b16 %v910, %v906
    %v1295 = vpack.c.b16 %v915, %v911
    %v1296 = vpack.c.b16 %v916, %v912
    %v1297 = vpack.c.b16 %v917, %v913
    %v1298 = vpack.c.b16 %v918, %v914
    %v1299 = vpack.c.b16 %v923, %v919
    %v1300 = vpack.c.b16 %v924, %v920
    %v1301 = vpack.c.b16 %v925, %v921
    %v1302 = vpack.c.b16 %v926, %v922
    %v1303 = vpack.c.b16 %v931, %v927
    %v1304 = vpack.c.b16 %v932, %v928
    %v1305 = vpack.c.b16 %v933, %v929
    %v1306 = vpack.c.b16 %v934, %v930
    %v1307 = vpack.c.b16 %v939, %v935
    %v1308 = vpack.c.b16 %v940, %v936
    %v1309 = vpack.c.b16 %v941, %v937
    %v1310 = vpack.c.b16 %v942, %v938
    %v1311 = vpack.c.b16 %v947, %v943
    %v1312 = vpack.c.b16 %v948, %v944
    %v1313 = vpack.c.b16 %v949, %v945
    %v1314 = vpack.c.b16 %v950, %v946
    %v1315 = vpack.c.b16 %v955, %v951
    %v1316 = vpack.c.b16 %v956, %v952
    %v1317 = vpack.c.b16 %v957, %v953
    %v1318 = vpack.c.b16 %v958, %v954
    %v1319 = vpack.c.b16 %v963, %v959
    %v1320 = vpack.c.b16 %v964, %v960
    %v1321 = vpack.c.b16 %v965, %v961
    %v1322 = vpack.c.b16 %v966, %v962
    %v1323 = vpack.c.b16 %v971, %v967
    %v1324 = vpack.c.b16 %v972, %v968
    %v1325 = vpack.c.b16 %v973, %v969
    %v1326 = vpack.c.b16 %v974, %v970
    %v1327 = vpack.c.b16 %v979, %v975
    %v1328 = vpack.c.b16 %v980, %v976
    %v1329 = vpack.c.b16 %v981, %v977
    %v1330 = vpack.c.b16 %v982, %v978
    %v1331 = vpack.c.b16 %v987, %v983
    %v1332 = vpack.c.b16 %v988, %v984
    %v1333 = vpack.c.b16 %v989, %v985
    %v1334 = vpack.c.b16 %v990, %v986
    %v1335 = vpack.c.b16 %v995, %v991
    %v1336 = vpack.c.b16 %v996, %v992
    %v1337 = vpack.c.b16 %v997, %v993
    %v1338 = vpack.c.b16 %v998, %v994
    %v1339 = vpack.c.b16 %v1003, %v999
    %v1340 = vpack.c.b16 %v1004, %v1000
    %v1341 = vpack.c.b16 %v1005, %v1001
    %v1342 = vpack.c.b16 %v1006, %v1002
    %v1343 = vpack.c.b16 %v1011, %v1007
    %v1344 = vpack.c.b16 %v1012, %v1008
    %v1345 = vpack.c.b16 %v1013, %v1009
    %v1346 = vpack.c.b16 %v1014, %v1010
    %v1347 = vpack.c.b16 %v1019, %v1015
    %v1348 = vpack.c.b16 %v1020, %v1016
    %v1349 = vpack.c.b16 %v1021, %v1017
    %v1350 = vpack.c.b16 %v1022, %v1018
    %v1351 = vpack.c.b16 %v1027, %v1023
    %v1352 = vpack.c.b16 %v1028, %v1024
    %v1353 = vpack.c.b16 %v1029, %v1025
    %v1354 = vpack.c.b16 %v1030, %v1026
    %v1355 = vpack.c.b16 %v1035, %v1031
    %v1356 = vpack.c.b16 %v1036, %v1032
    %v1357 = vpack.c.b16 %v1037, %v1033
    %v1358 = vpack.c.b16 %v1038, %v1034
    %v1359 = vpack.c.b16 %v1043, %v1039
    %v1360 = vpack.c.b16 %v1044, %v1040
    %v1361 = vpack.c.b16 %v1045, %v1041
    %v1362 = vpack.c.b16 %v1046, %v1042
    %v1363 = vpack.c.b16 %v1051, %v1047
    %v1364 = vpack.c.b16 %v1052, %v1048
    %v1365 = vpack.c.b16 %v1053, %v1049
    %v1366 = vpack.c.b16 %v1054, %v1050
    %v1367 = vpack.c.b16 %v1059, %v1055
    %v1368 = vpack.c.b16 %v1060, %v1056
    %v1369 = vpack.c.b16 %v1061, %v1057
    %v1370 = vpack.c.b16 %v1062, %v1058
    %v1371 = vpack.c.b16 %v1067, %v1063
    %v1372 = vpack.c.b16 %v1068, %v1064
    %v1373 = vpack.c.b16 %v1069, %v1065
    %v1374 = vpack.c.b16 %v1070, %v1066
    %v1375 = vpack.c.b16 %v1075, %v1071
    %v1376 = vpack.c.b16 %v1076, %v1072
    %v1377 = vpack.c.b16 %v1077, %v1073
    %v1378 = vpack.c.b16 %v1078, %v1074
    %v1379 = vpack.c.b16 %v1083, %v1079
    %v1380 = vpack.c.b16 %v1084, %v1080
    %v1381 = vpack.c.b16 %v1085, %v1081
    %v1382 = vpack.c.b16 %v1086, %v1082
    %v1383 = vpack.c.b16 %v1091, %v1087
    %v1384 = vpack.c.b16 %v1092, %v1088
    %v1385 = vpack.c.b16 %v1093, %v1089
    %v1386 = vpack.c.b16 %v1094, %v1090
    %v1387 = vpack.c.b16 %v1099, %v1095
    %v1388 = vpack.c.b16 %v1100, %v1096
    %v1389 = vpack.c.b16 %v1101, %v1097
    %v1390 = vpack.c.b16 %v1102, %v1098
    %v1391 = vpack.c.b16 %v1107, %v1103
    %v1392 = vpack.c.b16 %v1108, %v1104
    %v1393 = vpack.c.b16 %v1109, %v1105
    %v1394 = vpack.c.b16 %v1110, %v1106
    %v1395 = vpack.c.b16 %v1115, %v1111
    %v1396 = vpack.c.b16 %v1116, %v1112
    %v1397 = vpack.c.b16 %v1117, %v1113
    %v1398 = vpack.c.b16 %v1118, %v1114
    %v1399 = vpack.c.b16 %v1123, %v1119
    %v1400 = vpack.c.b16 %v1124, %v1120
    %v1401 = vpack.c.b16 %v1125, %v1121
    %v1402 = vpack.c.b16 %v1126, %v1122
    %v1403 = vpack.c.b16 %v1131, %v1127
    %v1404 = vpack.c.b16 %v1132, %v1128
    %v1405 = vpack.c.b16 %v1133, %v1129
    %v1406 = vpack.c.b16 %v1134, %v1130
    %v1407 = vpack.c.b16 %v1139, %v1135
    %v1408 = vpack.c.b16 %v1140, %v1136
    %v1409 = vpack.c.b16 %v1141, %v1137
    %v1410 = vpack.c.b16 %v1142, %v1138
    %v1411 = vpack.c.b16 %v1147, %v1143
    %v1412 = vpack.c.b16 %v1148, %v1144
    %v1413 = vpack.c.b16 %v1149, %v1145
    %v1414 = vpack.c.b16 %v1150, %v1146
    %v1415 = vpack.c.b16 %v1155, %v1151
    %v1416 = vpack.c.b16 %v1156, %v1152
    %v1417 = vpack.c.b16 %v1157, %v1153
    %v1418 = vpack.c.b16 %v1158, %v1154
    %v1419 = vpack.c.b16 %v1163, %v1159
    %v1420 = vpack.c.b16 %v1164, %v1160
    %v1421 = vpack.c.b16 %v1165, %v1161
    %v1422 = vpack.c.b16 %v1166, %v1162
    %1679 = vmatprep.subr.bf16.mxu0 %v1168
    %1680 = vmatpush1.bf16.msra.mxu0 %v1167
    %1681 = vmatprep.subr.bf16.mxu0 %v1172
    %1682 = vmatpush1.bf16.msra.mxu0 %v1171
    %1683 = vmatprep.subr.bf16.mxu0 %v1176
    %1684 = vmatpush1.bf16.msra.mxu0 %v1175
    %1685 = vmatprep.subr.bf16.mxu0 %v1180
    %1686 = vmatpush1.bf16.msra.mxu0 %v1179
    %1687 = vmatprep.subr.bf16.mxu0 %v1184
    %1688 = vmatpush1.bf16.msra.mxu0 %v1183
    %1689 = vmatprep.subr.bf16.mxu0 %v1188
    %1690 = vmatpush1.bf16.msra.mxu0 %v1187
    %1691 = vmatprep.subr.bf16.mxu0 %v1192
    %1692 = vmatpush1.bf16.msra.mxu0 %v1191
    %1693 = vmatprep.subr.bf16.mxu0 %v1196
    %1694 = vmatpush1.bf16.msra.mxu0 %v1195
    %1695 = vmatprep.subr.bf16.mxu0 %v1200
    %1696 = vmatpush1.bf16.msra.mxu0 %v1199
    %1697 = vmatprep.subr.bf16.mxu0 %v1204
    %1698 = vmatpush1.bf16.msra.mxu0 %v1203
    %1699 = vmatprep.subr.bf16.mxu0 %v1208
    %1700 = vmatpush1.bf16.msra.mxu0 %v1207
    %1701 = vmatprep.subr.bf16.mxu0 %v1212
    %1702 = vmatpush1.bf16.msra.mxu0 %v1211
    %1703 = vmatprep.subr.bf16.mxu0 %v1216
    %1704 = vmatpush1.bf16.msra.mxu0 %v1215
    %1705 = vmatprep.subr.bf16.mxu0 %v1220
    %1706 = vmatpush1.bf16.msra.mxu0 %v1219
    %1707 = vmatprep.subr.bf16.mxu0 %v1224
    %1708 = vmatpush1.bf16.msra.mxu0 %v1223
    %1709 = vmatprep.subr.bf16.mxu0 %v1228
    %1710 = vmatpush1.bf16.msra.mxu0 %v1227
    %1711 = vmatprep.mubr.bf16.mxu0 %v114
    %1712 = vmatmul.mubr.bf16.gmra.mrb[0].mxu0 %v113
    %v1713 = vpop.f32.mrb[0].mxu0
    %v1714 = vadd.f32 %v382, %v1713
    %v1715 = vpop.f32.mrb[0].mxu0
    %v1716 = vadd.f32 %v386, %v1715
    %v1717 = vpop.f32.mrb[0].mxu0
    %v1718 = vpop.f32.mrb[0].mxu0
    %1719 = vdwg.mxu0
    %1720 = vmatprep.subr.bf16.mxu0 %v1232
    %1721 = vmatpush1.bf16.msra.mxu0 %v1231
    %1722 = vmatprep.subr.bf16.mxu0 %v1236
    %1723 = vmatpush1.bf16.msra.mxu0 %v1235
    %1724 = vmatprep.subr.bf16.mxu0 %v1240
    %1725 = vmatpush1.bf16.msra.mxu0 %v1239
    %1726 = vmatprep.subr.bf16.mxu0 %v1244
    %1727 = vmatpush1.bf16.msra.mxu0 %v1243
    %1728 = vmatprep.subr.bf16.mxu0 %v1248
    %1729 = vmatpush1.bf16.msra.mxu0 %v1247
    %1730 = vmatprep.subr.bf16.mxu0 %v1252
    %1731 = vmatpush1.bf16.msra.mxu0 %v1251
    %1732 = vmatprep.subr.bf16.mxu0 %v1256
    %1733 = vmatpush1.bf16.msra.mxu0 %v1255
    %1734 = vmatprep.subr.bf16.mxu0 %v1260
    %1735 = vmatpush1.bf16.msra.mxu0 %v1259
    %1736 = vmatprep.subr.bf16.mxu0 %v1264
    %1737 = vmatpush1.bf16.msra.mxu0 %v1263
    %1738 = vmatprep.subr.bf16.mxu0 %v1268
    %1739 = vmatpush1.bf16.msra.mxu0 %v1267
    %1740 = vmatprep.subr.bf16.mxu0 %v1272
    %1741 = vmatpush1.bf16.msra.mxu0 %v1271
    %1742 = vmatprep.subr.bf16.mxu0 %v1276
    %1743 = vmatpush1.bf16.msra.mxu0 %v1275
    %1744 = vmatprep.subr.bf16.mxu0 %v1280
    %1745 = vmatpush1.bf16.msra.mxu0 %v1279
    %1746 = vmatprep.subr.bf16.mxu0 %v1284
    %1747 = vmatpush1.bf16.msra.mxu0 %v1283
    %1748 = vmatprep.subr.bf16.mxu0 %v1288
    %1749 = vmatpush1.bf16.msra.mxu0 %v1287
    %1750 = vmatprep.subr.bf16.mxu0 %v1292
    %1751 = vmatpush1.bf16.msra.mxu0 %v1291
    %1752 = vmatprep.mubr.bf16.mxu0 %v116
    %1753 = vmatmul.mubr.bf16.gmra.mrb[0].mxu0 %v115
    %v1754 = vpop.f32.mrb[0].mxu0
    %v1755 = vadd.f32 %v1714, %v1754
    %v1756 = vpop.f32.mrb[0].mxu0
    %v1757 = vadd.f32 %v1716, %v1756
    %v1758 = vpop.f32.mrb[0].mxu0
    %v1759 = vpop.f32.mrb[0].mxu0
    %1760 = vdwg.mxu0
    %1761 = vmatprep.subr.bf16.mxu0 %v1296
    %1762 = vmatpush1.bf16.msra.mxu0 %v1295
    %1763 = vmatprep.subr.bf16.mxu0 %v1300
    %1764 = vmatpush1.bf16.msra.mxu0 %v1299
    %1765 = vmatprep.subr.bf16.mxu0 %v1304
    %1766 = vmatpush1.bf16.msra.mxu0 %v1303
    %1767 = vmatprep.subr.bf16.mxu0 %v1308
    %1768 = vmatpush1.bf16.msra.mxu0 %v1307
    %1769 = vmatprep.subr.bf16.mxu0 %v1312
    %1770 = vmatpush1.bf16.msra.mxu0 %v1311
    %1771 = vmatprep.subr.bf16.mxu0 %v1316
    %1772 = vmatpush1.bf16.msra.mxu0 %v1315
    %1773 = vmatprep.subr.bf16.mxu0 %v1320
    %1774 = vmatpush1.bf16.msra.mxu0 %v1319
    %1775 = vmatprep.subr.bf16.mxu0 %v1324
    %1776 = vmatpush1.bf16.msra.mxu0 %v1323
    %1777 = vmatprep.subr.bf16.mxu0 %v1328
    %1778 = vmatpush1.bf16.msra.mxu0 %v1327
    %1779 = vmatprep.subr.bf16.mxu0 %v1332
    %1780 = vmatpush1.bf16.msra.mxu0 %v1331
    %1781 = vmatprep.subr.bf16.mxu0 %v1336
    %1782 = vmatpush1.bf16.msra.mxu0 %v1335
    %1783 = vmatprep.subr.bf16.mxu0 %v1340
    %1784 = vmatpush1.bf16.msra.mxu0 %v1339
    %1785 = vmatprep.subr.bf16.mxu0 %v1344
    %1786 = vmatpush1.bf16.msra.mxu0 %v1343
    %1787 = vmatprep.subr.bf16.mxu0 %v1348
    %1788 = vmatpush1.bf16.msra.mxu0 %v1347
    %1789 = vmatprep.subr.bf16.mxu0 %v1352
    %1790 = vmatpush1.bf16.msra.mxu0 %v1351
    %1791 = vmatprep.subr.bf16.mxu0 %v1356
    %1792 = vmatpush1.bf16.msra.mxu0 %v1355
    %1793 = vmatprep.mubr.bf16.mxu0 %v118
    %1794 = vmatmul.mubr.bf16.gmra.mrb[0].mxu0 %v117
    %v1795 = vpop.f32.mrb[0].mxu0
    %v1796 = vadd.f32 %v1755, %v1795
    %v1797 = vpop.f32.mrb[0].mxu0
    %v1798 = vadd.f32 %v1757, %v1797
    %v1799 = vpop.f32.mrb[0].mxu0
    %v1800 = vpop.f32.mrb[0].mxu0
    %1801 = vdwg.mxu0
    %1802 = vmatprep.subr.bf16.mxu0 %v1360
    %1803 = vmatpush1.bf16.msra.mxu0 %v1359
    %1804 = vmatprep.subr.bf16.mxu0 %v1364
    %1805 = vmatpush1.bf16.msra.mxu0 %v1363
    %1806 = vmatprep.subr.bf16.mxu0 %v1368
    %1807 = vmatpush1.bf16.msra.mxu0 %v1367
    %1808 = vmatprep.subr.bf16.mxu0 %v1372
    %1809 = vmatpush1.bf16.msra.mxu0 %v1371
    %1810 = vmatprep.subr.bf16.mxu0 %v1376
    %1811 = vmatpush1.bf16.msra.mxu0 %v1375
    %1812 = vmatprep.subr.bf16.mxu0 %v1380
    %1813 = vmatpush1.bf16.msra.mxu0 %v1379
    %1814 = vmatprep.subr.bf16.mxu0 %v1384
    %1815 = vmatpush1.bf16.msra.mxu0 %v1383
    %1816 = vmatprep.subr.bf16.mxu0 %v1388
    %1817 = vmatpush1.bf16.msra.mxu0 %v1387
    %1818 = vmatprep.subr.bf16.mxu0 %v1392
    %1819 = vmatpush1.bf16.msra.mxu0 %v1391
    %1820 = vmatprep.subr.bf16.mxu0 %v1396
    %1821 = vmatpush1.bf16.msra.mxu0 %v1395
    %1822 = vmatprep.subr.bf16.mxu0 %v1400
    %1823 = vmatpush1.bf16.msra.mxu0 %v1399
    %1824 = vmatprep.subr.bf16.mxu0 %v1404
    %1825 = vmatpush1.bf16.msra.mxu0 %v1403
    %1826 = vmatprep.subr.bf16.mxu0 %v1408
    %1827 = vmatpush1.bf16.msra.mxu0 %v1407
    %1828 = vmatprep.subr.bf16.mxu0 %v1412
    %1829 = vmatpush1.bf16.msra.mxu0 %v1411
    %1830 = vmatprep.subr.bf16.mxu0 %v1416
    %1831 = vmatpush1.bf16.msra.mxu0 %v1415
    %1832 = vmatprep.subr.bf16.mxu0 %v1420
    %1833 = vmatpush1.bf16.msra.mxu0 %v1419
    %1834 = vmatprep.mubr.bf16.mxu0 %v120
    %1835 = vmatmul.mubr.bf16.gmra.mrb[0].mxu0 %v119
    %v1836 = vpop.f32.mrb[0].mxu0
    %v1837 = vadd.f32 %v1796, %v1836
    %v1838 = vpop.f32.mrb[0].mxu0
    %v1839 = vadd.f32 %v1798, %v1838
    %v1840 = vpop.f32.mrb[0].mxu0
    %v1841 = vpop.f32.mrb[0].mxu0
    %1842 = vdwg.mxu0
    %1843 = vmatprep.subr.bf16.mxu0 %v1170
    %1844 = vmatpush1.bf16.msra.mxu0 %v1169
    %1845 = vmatprep.subr.bf16.mxu0 %v1174
    %1846 = vmatpush1.bf16.msra.mxu0 %v1173
    %1847 = vmatprep.subr.bf16.mxu0 %v1178
    %1848 = vmatpush1.bf16.msra.mxu0 %v1177
    %1849 = vmatprep.subr.bf16.mxu0 %v1182
    %1850 = vmatpush1.bf16.msra.mxu0 %v1181
    %1851 = vmatprep.subr.bf16.mxu0 %v1186
    %1852 = vmatpush1.bf16.msra.mxu0 %v1185
    %1853 = vmatprep.subr.bf16.mxu0 %v1190
    %1854 = vmatpush1.bf16.msra.mxu0 %v1189
    %1855 = vmatprep.subr.bf16.mxu0 %v1194
    %1856 = vmatpush1.bf16.msra.mxu0 %v1193
    %1857 = vmatprep.subr.bf16.mxu0 %v1198
    %1858 = vmatpush1.bf16.msra.mxu0 %v1197
    %1859 = vmatprep.subr.bf16.mxu0 %v1202
    %1860 = vmatpush1.bf16.msra.mxu0 %v1201
    %1861 = vmatprep.subr.bf16.mxu0 %v1206
    %1862 = vmatpush1.bf16.msra.mxu0 %v1205
    %1863 = vmatprep.subr.bf16.mxu0 %v1210
    %1864 = vmatpush1.bf16.msra.mxu0 %v1209
    %1865 = vmatprep.subr.bf16.mxu0 %v1214
    %1866 = vmatpush1.bf16.msra.mxu0 %v1213
    %1867 = vmatprep.subr.bf16.mxu0 %v1218
    %1868 = vmatpush1.bf16.msra.mxu0 %v1217
    %1869 = vmatprep.subr.bf16.mxu0 %v1222
    %1870 = vmatpush1.bf16.msra.mxu0 %v1221
    %1871 = vmatprep.subr.bf16.mxu0 %v1226
    %1872 = vmatpush1.bf16.msra.mxu0 %v1225
    %1873 = vmatprep.subr.bf16.mxu0 %v1230
    %1874 = vmatpush1.bf16.msra.mxu0 %v1229
    %1875 = vmatprep.mubr.bf16.mxu0 %v114
    %1876 = vmatmul.mubr.bf16.gmra.mrb[0].mxu0 %v113
    %v1877 = vpop.f32.mrb[0].mxu0
    %v1878 = vadd.f32 %v390, %v1877
    %v1879 = vpop.f32.mrb[0].mxu0
    %v1880 = vadd.f32 %v394, %v1879
    %v1881 = vpop.f32.mrb[0].mxu0
    %v1882 = vpop.f32.mrb[0].mxu0
    %1883 = vdwg.mxu0
    %1884 = vmatprep.subr.bf16.mxu0 %v1234
    %1885 = vmatpush1.bf16.msra.mxu0 %v1233
    %1886 = vmatprep.subr.bf16.mxu0 %v1238
    %1887 = vmatpush1.bf16.msra.mxu0 %v1237
    %1888 = vmatprep.subr.bf16.mxu0 %v1242
    %1889 = vmatpush1.bf16.msra.mxu0 %v1241
    %1890 = vmatprep.subr.bf16.mxu0 %v1246
    %1891 = vmatpush1.bf16.msra.mxu0 %v1245
    %1892 = vmatprep.subr.bf16.mxu0 %v1250
    %1893 = vmatpush1.bf16.msra.mxu0 %v1249
    %1894 = vmatprep.subr.bf16.mxu0 %v1254
    %1895 = vmatpush1.bf16.msra.mxu0 %v1253
    %1896 = vmatprep.subr.bf16.mxu0 %v1258
    %1897 = vmatpush1.bf16.msra.mxu0 %v1257
    %1898 = vmatprep.subr.bf16.mxu0 %v1262
    %1899 = vmatpush1.bf16.msra.mxu0 %v1261
    %1900 = vmatprep.subr.bf16.mxu0 %v1266
    %1901 = vmatpush1.bf16.msra.mxu0 %v1265
    %1902 = vmatprep.subr.bf16.mxu0 %v1270
    %1903 = vmatpush1.bf16.msra.mxu0 %v1269
    %1904 = vmatprep.subr.bf16.mxu0 %v1274
    %1905 = vmatpush1.bf16.msra.mxu0 %v1273
    %1906 = vmatprep.subr.bf16.mxu0 %v1278
    %1907 = vmatpush1.bf16.msra.mxu0 %v1277
    %1908 = vmatprep.subr.bf16.mxu0 %v1282
    %1909 = vmatpush1.bf16.msra.mxu0 %v1281
    %1910 = vmatprep.subr.bf16.mxu0 %v1286
    %1911 = vmatpush1.bf16.msra.mxu0 %v1285
    %1912 = vmatprep.subr.bf16.mxu0 %v1290
    %1913 = vmatpush1.bf16.msra.mxu0 %v1289
    %1914 = vmatprep.subr.bf16.mxu0 %v1294
    %1915 = vmatpush1.bf16.msra.mxu0 %v1293
    %1916 = vmatprep.mubr.bf16.mxu0 %v116
    %1917 = vmatmul.mubr.bf16.gmra.mrb[0].mxu0 %v115
    %v1918 = vpop.f32.mrb[0].mxu0
    %v1919 = vadd.f32 %v1878, %v1918
    %v1920 = vpop.f32.mrb[0].mxu0
    %v1921 = vadd.f32 %v1880, %v1920
    %v1922 = vpop.f32.mrb[0].mxu0
    %v1923 = vpop.f32.mrb[0].mxu0
    %1924 = vdwg.mxu0
    %1925 = vmatprep.subr.bf16.mxu0 %v1298
    %1926 = vmatpush1.bf16.msra.mxu0 %v1297
    %1927 = vmatprep.subr.bf16.mxu0 %v1302
    %1928 = vmatpush1.bf16.msra.mxu0 %v1301
    %1929 = vmatprep.subr.bf16.mxu0 %v1306
    %1930 = vmatpush1.bf16.msra.mxu0 %v1305
    %1931 = vmatprep.subr.bf16.mxu0 %v1310
    %1932 = vmatpush1.bf16.msra.mxu0 %v1309
    %1933 = vmatprep.subr.bf16.mxu0 %v1314
    %1934 = vmatpush1.bf16.msra.mxu0 %v1313
    %1935 = vmatprep.subr.bf16.mxu0 %v1318
    %1936 = vmatpush1.bf16.msra.mxu0 %v1317
    %1937 = vmatprep.subr.bf16.mxu0 %v1322
    %1938 = vmatpush1.bf16.msra.mxu0 %v1321
    %1939 = vmatprep.subr.bf16.mxu0 %v1326
    %1940 = vmatpush1.bf16.msra.mxu0 %v1325
    %1941 = vmatprep.subr.bf16.mxu0 %v1330
    %1942 = vmatpush1.bf16.msra.mxu0 %v1329
    %1943 = vmatprep.subr.bf16.mxu0 %v1334
    %1944 = vmatpush1.bf16.msra.mxu0 %v1333
    %1945 = vmatprep.subr.bf16.mxu0 %v1338
    %1946 = vmatpush1.bf16.msra.mxu0 %v1337
    %1947 = vmatprep.subr.bf16.mxu0 %v1342
    %1948 = vmatpush1.bf16.msra.mxu0 %v1341
    %1949 = vmatprep.subr.bf16.mxu0 %v1346
    %1950 = vmatpush1.bf16.msra.mxu0 %v1345
    %1951 = vmatprep.subr.bf16.mxu0 %v1350
    %1952 = vmatpush1.bf16.msra.mxu0 %v1349
    %1953 = vmatprep.subr.bf16.mxu0 %v1354
    %1954 = vmatpush1.bf16.msra.mxu0 %v1353
    %1955 = vmatprep.subr.bf16.mxu0 %v1358
    %1956 = vmatpush1.bf16.msra.mxu0 %v1357
    %1957 = vmatprep.mubr.bf16.mxu0 %v118
    %1958 = vmatmul.mubr.bf16.gmra.mrb[0].mxu0 %v117
    %v1959 = vpop.f32.mrb[0].mxu0
    %v1960 = vadd.f32 %v1919, %v1959
    %v1961 = vpop.f32.mrb[0].mxu0
    %v1962 = vadd.f32 %v1921, %v1961
    %v1963 = vpop.f32.mrb[0].mxu0
    %v1964 = vpop.f32.mrb[0].mxu0
    %1965 = vdwg.mxu0
    %1966 = vmatprep.subr.bf16.mxu0 %v1362
    %1967 = vmatpush1.bf16.msra.mxu0 %v1361
    %1968 = vmatprep.subr.bf16.mxu0 %v1366
    %1969 = vmatpush1.bf16.msra.mxu0 %v1365
    %1970 = vmatprep.subr.bf16.mxu0 %v1370
    %1971 = vmatpush1.bf16.msra.mxu0 %v1369
    %1972 = vmatprep.subr.bf16.mxu0 %v1374
    %1973 = vmatpush1.bf16.msra.mxu0 %v1373
    %1974 = vmatprep.subr.bf16.mxu0 %v1378
    %1975 = vmatpush1.bf16.msra.mxu0 %v1377
    %1976 = vmatprep.subr.bf16.mxu0 %v1382
    %1977 = vmatpush1.bf16.msra.mxu0 %v1381
    %1978 = vmatprep.subr.bf16.mxu0 %v1386
    %1979 = vmatpush1.bf16.msra.mxu0 %v1385
    %1980 = vmatprep.subr.bf16.mxu0 %v1390
    %1981 = vmatpush1.bf16.msra.mxu0 %v1389
    %1982 = vmatprep.subr.bf16.mxu0 %v1394
    %1983 = vmatpush1.bf16.msra.mxu0 %v1393
    %1984 = vmatprep.subr.bf16.mxu0 %v1398
    %1985 = vmatpush1.bf16.msra.mxu0 %v1397
    %1986 = vmatprep.subr.bf16.mxu0 %v1402
    %1987 = vmatpush1.bf16.msra.mxu0 %v1401
    %1988 = vmatprep.subr.bf16.mxu0 %v1406
    %1989 = vmatpush1.bf16.msra.mxu0 %v1405
    %1990 = vmatprep.subr.bf16.mxu0 %v1410
    %1991 = vmatpush1.bf16.msra.mxu0 %v1409
    %1992 = vmatprep.subr.bf16.mxu0 %v1414
    %1993 = vmatpush1.bf16.msra.mxu0 %v1413
    %1994 = vmatprep.subr.bf16.mxu0 %v1418
    %1995 = vmatpush1.bf16.msra.mxu0 %v1417
    %1996 = vmatprep.subr.bf16.mxu0 %v1422
    %1997 = vmatpush1.bf16.msra.mxu0 %v1421
    %1998 = vmatprep.mubr.bf16.mxu0 %v120
    %1999 = vmatmul.mubr.bf16.gmra.mrb[0].mxu0 %v119
    %v2000 = vpop.f32.mrb[0].mxu0
    %v2001 = vadd.f32 %v1960, %v2000
    %v2002 = vpop.f32.mrb[0].mxu0
    %v2003 = vadd.f32 %v1962, %v2002
    %v2004 = vpop.f32.mrb[0].mxu0
    %v2005 = vpop.f32.mrb[0].mxu0
    %2006 = vdwg.mxu0
    %v2007 = vmax.f32 %v1837, 0.0
    %v2008 = vmax.f32 %v1839, 0.0
    %v2009 = vmax.f32 %v2001, 0.0
    %v2010 = vmax.f32 %v2003, 0.0
    %v2011 = vpack.c.bf16 %v2007, %v2007
    %v2012 = vpack.c.bf16 %v2008, %v2008
    %v2013 = vpack.c.bf16 %v2009, %v2009
    %v2014 = vpack.c.bf16 %v2010, %v2010
    %v2015 = vld [vmem:[#allocation8] sm:$0xff]
    %v2016 = vld [vmem:[#allocation8 + $0x8] sm:$0xff]
    %v2017 = vld [vmem:[#allocation8 + $0x10] sm:$0xff]
    %v2018 = vld [vmem:[#allocation8 + $0x18] sm:$0xff]
    %v2019 = vld [vmem:[#allocation8 + $0x20] sm:$0xff]
    %v2020 = vld [vmem:[#allocation8 + $0x28] sm:$0xff]
    %v2021 = vld [vmem:[#allocation8 + $0x30] sm:$0xff]
    %v2022 = vld [vmem:[#allocation8 + $0x38] sm:$0xff]
    %v2023 = vld [vmem:[#allocation8 + $0x40] sm:$0xff]
    %v2024 = vld [vmem:[#allocation8 + $0x48] sm:$0xff]
    %v2025 = vld [vmem:[#allocation8 + $0x50] sm:$0xff]
    %v2026 = vld [vmem:[#allocation8 + $0x58] sm:$0xff]
    %v2027 = vld [vmem:[#allocation8 + $0x60] sm:$0xff]
    %v2028 = vld [vmem:[#allocation8 + $0x68] sm:$0xff]
    %v2029 = vld [vmem:[#allocation8 + $0x70] sm:$0xff]
    %v2030 = vld [vmem:[#allocation8 + $0x78] sm:$0xff]
    %v2031 = vld [vmem:[#allocation8 + $0x80] sm:$0xff]
    %v2032 = vld [vmem:[#allocation8 + $0x88] sm:$0xff]
    %v2033 = vld [vmem:[#allocation8 + $0x90] sm:$0xff]
    %v2034 = vld [vmem:[#allocation8 + $0x98] sm:$0xff]
    %v2035 = vld [vmem:[#allocation8 + $0xa0] sm:$0xff]
    %v2036 = vld [vmem:[#allocation8 + $0xa8] sm:$0xff]
    %v2037 = vld [vmem:[#allocation8 + $0xb0] sm:$0xff]
    %v2038 = vld [vmem:[#allocation8 + $0xb8] sm:$0xff]
    %v2039 = vld [vmem:[#allocation8 + $0xc0] sm:$0xff]
    %v2040 = vld [vmem:[#allocation8 + $0xc8] sm:$0xff]
    %v2041 = vld [vmem:[#allocation8 + $0xd0] sm:$0xff]
    %v2042 = vld [vmem:[#allocation8 + $0xd8] sm:$0xff]
    %v2043 = vld [vmem:[#allocation8 + $0xe0] sm:$0xff]
    %v2044 = vld [vmem:[#allocation8 + $0xe8] sm:$0xff]
    %v2045 = vld [vmem:[#allocation8 + $0xf0] sm:$0xff]
    %v2046 = vld [vmem:[#allocation8 + $0xf8] sm:$0xff]
    %v2047 = vld [vmem:[#allocation8 + $0x100] sm:$0xff]
    %v2048 = vld [vmem:[#allocation8 + $0x108] sm:$0xff]
    %v2049 = vld [vmem:[#allocation8 + $0x110] sm:$0xff]
    %v2050 = vld [vmem:[#allocation8 + $0x118] sm:$0xff]
    %v2051 = vld [vmem:[#allocation8 + $0x120] sm:$0xff]
    %v2052 = vld [vmem:[#allocation8 + $0x128] sm:$0xff]
    %v2053 = vld [vmem:[#allocation8 + $0x130] sm:$0xff]
    %v2054 = vld [vmem:[#allocation8 + $0x138] sm:$0xff]
    %v2055 = vld [vmem:[#allocation8 + $0x140] sm:$0xff]
    %v2056 = vld [vmem:[#allocation8 + $0x148] sm:$0xff]
    %v2057 = vld [vmem:[#allocation8 + $0x150] sm:$0xff]
    %v2058 = vld [vmem:[#allocation8 + $0x158] sm:$0xff]
    %v2059 = vld [vmem:[#allocation8 + $0x160] sm:$0xff]
    %v2060 = vld [vmem:[#allocation8 + $0x168] sm:$0xff]
    %v2061 = vld [vmem:[#allocation8 + $0x170] sm:$0xff]
    %v2062 = vld [vmem:[#allocation8 + $0x178] sm:$0xff]
    %v2063 = vld [vmem:[#allocation8 + $0x180] sm:$0xff]
    %v2064 = vld [vmem:[#allocation8 + $0x188] sm:$0xff]
    %v2065 = vld [vmem:[#allocation8 + $0x190] sm:$0xff]
    %v2066 = vld [vmem:[#allocation8 + $0x198] sm:$0xff]
    %v2067 = vld [vmem:[#allocation8 + $0x1a0] sm:$0xff]
    %v2068 = vld [vmem:[#allocation8 + $0x1a8] sm:$0xff]
    %v2069 = vld [vmem:[#allocation8 + $0x1b0] sm:$0xff]
    %v2070 = vld [vmem:[#allocation8 + $0x1b8] sm:$0xff]
    %v2071 = vld [vmem:[#allocation8 + $0x1c0] sm:$0xff]
    %v2072 = vld [vmem:[#allocation8 + $0x1c8] sm:$0xff]
    %v2073 = vld [vmem:[#allocation8 + $0x1d0] sm:$0xff]
    %v2074 = vld [vmem:[#allocation8 + $0x1d8] sm:$0xff]
    %v2075 = vld [vmem:[#allocation8 + $0x1e0] sm:$0xff]
    %v2076 = vld [vmem:[#allocation8 + $0x1e8] sm:$0xff]
    %v2077 = vld [vmem:[#allocation8 + $0x1f0] sm:$0xff]
    %v2078 = vld [vmem:[#allocation8 + $0x1f8] sm:$0xff]
    %v2079 = vld [vmem:[%s4] sm:$0x3]
    %v2081 = vlaneseq
    %v2082 = vshrl.u32 %v2081, 7
    %v2083 = vsub.s32 0, %v2082
    %v2084 = vrot.slane %v2079, %v2083
    %v2085 = vlaneseq
    %v2086 = vshrl.u32 %v2085, 7
    %v2087 = vsub.s32 1, %v2086
    %v2088 = vrot.slane %v2079, %v2087
    %v2155 = vunpack.c.l.b16 %v2015
    %v2156 = vunpack.c.h.b16 %v2015
    %v2157 = vunpack.c.l.b16 %v2016
    %v2158 = vunpack.c.h.b16 %v2016
    %v2159 = vunpack.c.l.b16 %v2017
    %v2160 = vunpack.c.h.b16 %v2017
    %v2161 = vunpack.c.l.b16 %v2018
    %v2162 = vunpack.c.h.b16 %v2018
    %v2163 = vunpack.c.l.b16 %v2019
    %v2164 = vunpack.c.h.b16 %v2019
    %v2165 = vunpack.c.l.b16 %v2020
    %v2166 = vunpack.c.h.b16 %v2020
    %v2167 = vunpack.c.l.b16 %v2021
    %v2168 = vunpack.c.h.b16 %v2021
    %v2169 = vunpack.c.l.b16 %v2022
    %v2170 = vunpack.c.h.b16 %v2022
    %v2171 = vunpack.c.l.b16 %v2023
    %v2172 = vunpack.c.h.b16 %v2023
    %v2173 = vunpack.c.l.b16 %v2024
    %v2174 = vunpack.c.h.b16 %v2024
    %v2175 = vunpack.c.l.b16 %v2025
    %v2176 = vunpack.c.h.b16 %v2025
    %v2177 = vunpack.c.l.b16 %v2026
    %v2178 = vunpack.c.h.b16 %v2026
    %v2179 = vunpack.c.l.b16 %v2027
    %v2180 = vunpack.c.h.b16 %v2027
    %v2181 = vunpack.c.l.b16 %v2028
    %v2182 = vunpack.c.h.b16 %v2028
    %v2183 = vunpack.c.l.b16 %v2029
    %v2184 = vunpack.c.h.b16 %v2029
    %v2185 = vunpack.c.l.b16 %v2030
    %v2186 = vunpack.c.h.b16 %v2030
    %v2187 = vunpack.c.l.b16 %v2031
    %v2188 = vunpack.c.h.b16 %v2031
    %v2189 = vunpack.c.l.b16 %v2032
    %v2190 = vunpack.c.h.b16 %v2032
    %v2191 = vunpack.c.l.b16 %v2033
    %v2192 = vunpack.c.h.b16 %v2033
    %v2193 = vunpack.c.l.b16 %v2034
    %v2194 = vunpack.c.h.b16 %v2034
    %v2195 = vunpack.c.l.b16 %v2035
    %v2196 = vunpack.c.h.b16 %v2035
    %v2197 = vunpack.c.l.b16 %v2036
    %v2198 = vunpack.c.h.b16 %v2036
    %v2199 = vunpack.c.l.b16 %v2037
    %v2200 = vunpack.c.h.b16 %v2037
    %v2201 = vunpack.c.l.b16 %v2038
    %v2202 = vunpack.c.h.b16 %v2038
    %v2203 = vunpack.c.l.b16 %v2039
    %v2204 = vunpack.c.h.b16 %v2039
    %v2205 = vunpack.c.l.b16 %v2040
    %v2206 = vunpack.c.h.b16 %v2040
    %v2207 = vunpack.c.l.b16 %v2041
    %v2208 = vunpack.c.h.b16 %v2041
    %v2209 = vunpack.c.l.b16 %v2042
    %v2210 = vunpack.c.h.b16 %v2042
    %v2211 = vunpack.c.l.b16 %v2043
    %v2212 = vunpack.c.h.b16 %v2043
    %v2213 = vunpack.c.l.b16 %v2044
    %v2214 = vunpack.c.h.b16 %v2044
    %v2215 = vunpack.c.l.b16 %v2045
    %v2216 = vunpack.c.h.b16 %v2045
    %v2217 = vunpack.c.l.b16 %v2046
    %v2218 = vunpack.c.h.b16 %v2046
    %v2219 = vunpack.c.l.b16 %v2047
    %v2220 = vunpack.c.h.b16 %v2047
    %v2221 = vunpack.c.l.b16 %v2048
    %v2222 = vunpack.c.h.b16 %v2048
    %v2223 = vunpack.c.l.b16 %v2049
    %v2224 = vunpack.c.h.b16 %v2049
    %v2225 = vunpack.c.l.b16 %v2050
    %v2226 = vunpack.c.h.b16 %v2050
    %v2227 = vunpack.c.l.b16 %v2051
    %v2228 = vunpack.c.h.b16 %v2051
    %v2229 = vunpack.c.l.b16 %v2052
    %v2230 = vunpack.c.h.b16 %v2052
    %v2231 = vunpack.c.l.b16 %v2053
    %v2232 = vunpack.c.h.b16 %v2053
    %v2233 = vunpack.c.l.b16 %v2054
    %v2234 = vunpack.c.h.b16 %v2054
    %v2235 = vunpack.c.l.b16 %v2055
    %v2236 = vunpack.c.h.b16 %v2055
    %v2237 = vunpack.c.l.b16 %v2056
    %v2238 = vunpack.c.h.b16 %v2056
    %v2239 = vunpack.c.l.b16 %v2057
    %v2240 = vunpack.c.h.b16 %v2057
    %v2241 = vunpack.c.l.b16 %v2058
    %v2242 = vunpack.c.h.b16 %v2058
    %v2243 = vunpack.c.l.b16 %v2059
    %v2244 = vunpack.c.h.b16 %v2059
    %v2245 = vunpack.c.l.b16 %v2060
    %v2246 = vunpack.c.h.b16 %v2060
    %v2247 = vunpack.c.l.b16 %v2061
    %v2248 = vunpack.c.h.b16 %v2061
    %v2249 = vunpack.c.l.b16 %v2062
    %v2250 = vunpack.c.h.b16 %v2062
    %v2251 = vunpack.c.l.b16 %v2063
    %v2252 = vunpack.c.h.b16 %v2063
    %v2253 = vunpack.c.l.b16 %v2064
    %v2254 = vunpack.c.h.b16 %v2064
    %v2255 = vunpack.c.l.b16 %v2065
    %v2256 = vunpack.c.h.b16 %v2065
    %v2257 = vunpack.c.l.b16 %v2066
    %v2258 = vunpack.c.h.b16 %v2066
    %v2259 = vunpack.c.l.b16 %v2067
    %v2260 = vunpack.c.h.b16 %v2067
    %v2261 = vunpack.c.l.b16 %v2068
    %v2262 = vunpack.c.h.b16 %v2068
    %v2263 = vunpack.c.l.b16 %v2069
    %v2264 = vunpack.c.h.b16 %v2069
    %v2265 = vunpack.c.l.b16 %v2070
    %v2266 = vunpack.c.h.b16 %v2070
    %v2267 = vunpack.c.l.b16 %v2071
    %v2268 = vunpack.c.h.b16 %v2071
    %v2269 = vunpack.c.l.b16 %v2072
    %v2270 = vunpack.c.h.b16 %v2072
    %v2271 = vunpack.c.l.b16 %v2073
    %v2272 = vunpack.c.h.b16 %v2073
    %v2273 = vunpack.c.l.b16 %v2074
    %v2274 = vunpack.c.h.b16 %v2074
    %v2275 = vunpack.c.l.b16 %v2075
    %v2276 = vunpack.c.h.b16 %v2075
    %v2277 = vunpack.c.l.b16 %v2076
    %v2278 = vunpack.c.h.b16 %v2076
    %v2279 = vunpack.c.l.b16 %v2077
    %v2280 = vunpack.c.h.b16 %v2077
    %v2281 = vunpack.c.l.b16 %v2078
    %v2282 = vunpack.c.h.b16 %v2078
    %v2283 = vpack.c.b16 %v2157, %v2155
    %v2284 = vpack.c.b16 %v2158, %v2156
    %v2285 = vpack.c.b16 %v2161, %v2159
    %v2286 = vpack.c.b16 %v2162, %v2160
    %v2287 = vpack.c.b16 %v2165, %v2163
    %v2288 = vpack.c.b16 %v2166, %v2164
    %v2289 = vpack.c.b16 %v2169, %v2167
    %v2290 = vpack.c.b16 %v2170, %v2168
    %v2291 = vpack.c.b16 %v2173, %v2171
    %v2292 = vpack.c.b16 %v2174, %v2172
    %v2293 = vpack.c.b16 %v2177, %v2175
    %v2294 = vpack.c.b16 %v2178, %v2176
    %v2295 = vpack.c.b16 %v2181, %v2179
    %v2296 = vpack.c.b16 %v2182, %v2180
    %v2297 = vpack.c.b16 %v2185, %v2183
    %v2298 = vpack.c.b16 %v2186, %v2184
    %v2299 = vpack.c.b16 %v2189, %v2187
    %v2300 = vpack.c.b16 %v2190, %v2188
    %v2301 = vpack.c.b16 %v2193, %v2191
    %v2302 = vpack.c.b16 %v2194, %v2192
    %v2303 = vpack.c.b16 %v2197, %v2195
    %v2304 = vpack.c.b16 %v2198, %v2196
    %v2305 = vpack.c.b16 %v2201, %v2199
    %v2306 = vpack.c.b16 %v2202, %v2200
    %v2307 = vpack.c.b16 %v2205, %v2203
    %v2308 = vpack.c.b16 %v2206, %v2204
    %v2309 = vpack.c.b16 %v2209, %v2207
    %v2310 = vpack.c.b16 %v2210, %v2208
    %v2311 = vpack.c.b16 %v2213, %v2211
    %v2312 = vpack.c.b16 %v2214, %v2212
    %v2313 = vpack.c.b16 %v2217, %v2215
    %v2314 = vpack.c.b16 %v2218, %v2216
    %v2315 = vpack.c.b16 %v2221, %v2219
    %v2316 = vpack.c.b16 %v2222, %v2220
    %v2317 = vpack.c.b16 %v2225, %v2223
    %v2318 = vpack.c.b16 %v2226, %v2224
    %v2319 = vpack.c.b16 %v2229, %v2227
    %v2320 = vpack.c.b16 %v2230, %v2228
    %v2321 = vpack.c.b16 %v2233, %v2231
    %v2322 = vpack.c.b16 %v2234, %v2232
    %v2323 = vpack.c.b16 %v2237, %v2235
    %v2324 = vpack.c.b16 %v2238, %v2236
    %v2325 = vpack.c.b16 %v2241, %v2239
    %v2326 = vpack.c.b16 %v2242, %v2240
    %v2327 = vpack.c.b16 %v2245, %v2243
    %v2328 = vpack.c.b16 %v2246, %v2244
    %v2329 = vpack.c.b16 %v2249, %v2247
    %v2330 = vpack.c.b16 %v2250, %v2248
    %v2331 = vpack.c.b16 %v2253, %v2251
    %v2332 = vpack.c.b16 %v2254, %v2252
    %v2333 = vpack.c.b16 %v2257, %v2255
    %v2334 = vpack.c.b16 %v2258, %v2256
    %v2335 = vpack.c.b16 %v2261, %v2259
    %v2336 = vpack.c.b16 %v2262, %v2260
    %v2337 = vpack.c.b16 %v2265, %v2263
    %v2338 = vpack.c.b16 %v2266, %v2264
    %v2339 = vpack.c.b16 %v2269, %v2267
    %v2340 = vpack.c.b16 %v2270, %v2268
    %v2341 = vpack.c.b16 %v2273, %v2271
    %v2342 = vpack.c.b16 %v2274, %v2272
    %v2343 = vpack.c.b16 %v2277, %v2275
    %v2344 = vpack.c.b16 %v2278, %v2276
    %v2345 = vpack.c.b16 %v2281, %v2279
    %v2346 = vpack.c.b16 %v2282, %v2280
    %2411 = vmatprep.subr.bf16.mxu0 %v2284
    %2412 = vmatpush1.bf16.msra.mxu0 %v2283
    %2413 = vmatprep.subr.bf16.mxu0 %v2286
    %2414 = vmatpush1.bf16.msra.mxu0 %v2285
    %2415 = vmatprep.subr.bf16.mxu0 %v2288
    %2416 = vmatpush1.bf16.msra.mxu0 %v2287
    %2417 = vmatprep.subr.bf16.mxu0 %v2290
    %2418 = vmatpush1.bf16.msra.mxu0 %v2289
    %2419 = vmatprep.subr.bf16.mxu0 %v2292
    %2420 = vmatpush1.bf16.msra.mxu0 %v2291
    %2421 = vmatprep.subr.bf16.mxu0 %v2294
    %2422 = vmatpush1.bf16.msra.mxu0 %v2293
    %2423 = vmatprep.subr.bf16.mxu0 %v2296
    %2424 = vmatpush1.bf16.msra.mxu0 %v2295
    %2425 = vmatprep.subr.bf16.mxu0 %v2298
    %2426 = vmatpush1.bf16.msra.mxu0 %v2297
    %2427 = vmatprep.subr.bf16.mxu0 %v2300
    %2428 = vmatpush1.bf16.msra.mxu0 %v2299
    %2429 = vmatprep.subr.bf16.mxu0 %v2302
    %2430 = vmatpush1.bf16.msra.mxu0 %v2301
    %2431 = vmatprep.subr.bf16.mxu0 %v2304
    %2432 = vmatpush1.bf16.msra.mxu0 %v2303
    %2433 = vmatprep.subr.bf16.mxu0 %v2306
    %2434 = vmatpush1.bf16.msra.mxu0 %v2305
    %2435 = vmatprep.subr.bf16.mxu0 %v2308
    %2436 = vmatpush1.bf16.msra.mxu0 %v2307
    %2437 = vmatprep.subr.bf16.mxu0 %v2310
    %2438 = vmatpush1.bf16.msra.mxu0 %v2309
    %2439 = vmatprep.subr.bf16.mxu0 %v2312
    %2440 = vmatpush1.bf16.msra.mxu0 %v2311
    %2441 = vmatprep.subr.bf16.mxu0 %v2314
    %2442 = vmatpush1.bf16.msra.mxu0 %v2313
    %2443 = vmatprep.mubr.bf16.mxu0 %v2012
    %2444 = vmatmul.mubr.bf16.gmra.mrb[0].mxu0 %v2011
    %v2445 = vpop.f32.mrb[0].mxu0
    %v2446 = vadd.f32 %v2084, %v2445
    %v2447 = vpop.f32.mrb[0].mxu0
    %v2448 = vadd.f32 %v2088, %v2447
    %v2449 = vpop.f32.mrb[0].mxu0
    %v2450 = vpop.f32.mrb[0].mxu0
    %2451 = vdwg.mxu0
    %2452 = vmatprep.subr.bf16.mxu0 %v2316
    %2453 = vmatpush1.bf16.msra.mxu0 %v2315
    %2454 = vmatprep.subr.bf16.mxu0 %v2318
    %2455 = vmatpush1.bf16.msra.mxu0 %v2317
    %2456 = vmatprep.subr.bf16.mxu0 %v2320
    %2457 = vmatpush1.bf16.msra.mxu0 %v2319
    %2458 = vmatprep.subr.bf16.mxu0 %v2322
    %2459 = vmatpush1.bf16.msra.mxu0 %v2321
    %2460 = vmatprep.subr.bf16.mxu0 %v2324
    %2461 = vmatpush1.bf16.msra.mxu0 %v2323
    %2462 = vmatprep.subr.bf16.mxu0 %v2326
    %2463 = vmatpush1.bf16.msra.mxu0 %v2325
    %2464 = vmatprep.subr.bf16.mxu0 %v2328
    %2465 = vmatpush1.bf16.msra.mxu0 %v2327
    %2466 = vmatprep.subr.bf16.mxu0 %v2330
    %2467 = vmatpush1.bf16.msra.mxu0 %v2329
    %2468 = vmatprep.subr.bf16.mxu0 %v2332
    %2469 = vmatpush1.bf16.msra.mxu0 %v2331
    %2470 = vmatprep.subr.bf16.mxu0 %v2334
    %2471 = vmatpush1.bf16.msra.mxu0 %v2333
    %2472 = vmatprep.subr.bf16.mxu0 %v2336
    %2473 = vmatpush1.bf16.msra.mxu0 %v2335
    %2474 = vmatprep.subr.bf16.mxu0 %v2338
    %2475 = vmatpush1.bf16.msra.mxu0 %v2337
    %2476 = vmatprep.subr.bf16.mxu0 %v2340
    %2477 = vmatpush1.bf16.msra.mxu0 %v2339
    %2478 = vmatprep.subr.bf16.mxu0 %v2342
    %2479 = vmatpush1.bf16.msra.mxu0 %v2341
    %2480 = vmatprep.subr.bf16.mxu0 %v2344
    %2481 = vmatpush1.bf16.msra.mxu0 %v2343
    %2482 = vmatprep.subr.bf16.mxu0 %v2346
    %2483 = vmatpush1.bf16.msra.mxu0 %v2345
    %2484 = vmatprep.mubr.bf16.mxu0 %v2014
    %2485 = vmatmul.mubr.bf16.gmra.mrb[0].mxu0 %v2013
    %v2486 = vpop.f32.mrb[0].mxu0
    %v2487 = vadd.f32 %v2446, %v2486
    %v2488 = vpop.f32.mrb[0].mxu0
    %v2489 = vadd.f32 %v2448, %v2488
    %v2490 = vpop.f32.mrb[0].mxu0
    %v2491 = vpop.f32.mrb[0].mxu0
    %2492 = vdwg.mxu0
    %v2493 = vmax.f32 %v2487, 0.0
    %v2494 = vmax.f32 %v2489, 0.0
    %v2495 = vld [vmem:[%s5] sm:$0x3]
    %s2496 = sld [smem:[#allocation2]]
    %v2497 = vstv %s2496
    %v2499 = vlaneseq
    %v2500 = vshrl.u32 %v2499, 7
    %v2501 = vsub.s32 0, %v2500
    %v2502 = vrot.slane %v2495, %v2501
    %v2503 = vlaneseq
    %v2504 = vshrl.u32 %v2503, 7
    %v2505 = vsub.s32 1, %v2504
    %v2506 = vrot.slane %v2495, %v2505
    %2509 = vmatprep.subr.mxu0 %v2494
    %2510 = vmatpush1.xpose.msra.mxu0 %v2493
    %2511 = vmatprep.subr.mxu0 0.0
    %2512 = vmatpush1.xpose.msra.mxu0 0.0
    %2513 = vmatprep.subr.mxu0 0.0
    %2514 = vmatpush1.xpose.msra.mxu0 0.0
    %2515 = vmatprep.subr.mxu0 0.0
    %2516 = vmatpush1.xpose.msra.mxu0 0.0
    %2517 = vmatprep.subr.mxu0 0.0
    %2518 = vmatpush1.xpose.msra.mxu0 0.0
    %2519 = vmatprep.subr.mxu0 0.0
    %2520 = vmatpush1.xpose.msra.mxu0 0.0
    %2521 = vmatprep.subr.mxu0 0.0
    %2522 = vmatpush1.xpose.msra.mxu0 0.0
    %2523 = vmatprep.subr.mxu0 0.0
    %2524 = vmatpush1.xpose.msra.mxu0 0.0
    %2525 = vmatprep.subr.mxu0 0.0
    %2526 = vmatpush1.xpose.msra.mxu0 0.0
    %2527 = vmatprep.subr.mxu0 0.0
    %2528 = vmatpush1.xpose.msra.mxu0 0.0
    %2529 = vmatprep.subr.mxu0 0.0
    %2530 = vmatpush1.xpose.msra.mxu0 0.0
    %2531 = vmatprep.subr.mxu0 0.0
    %2532 = vmatpush1.xpose.msra.mxu0 0.0
    %2533 = vmatprep.subr.mxu0 0.0
    %2534 = vmatpush1.xpose.msra.mxu0 0.0
    %2535 = vmatprep.subr.mxu0 0.0
    %2536 = vmatpush1.xpose.msra.mxu0 0.0
    %2537 = vmatprep.subr.mxu0 0.0
    %2538 = vmatpush1.xpose.msra.mxu0 0.0
    %2539 = vmatprep.subr.mxu0 0.0
    %2540 = vmatpush1.xpose.msra.mxu0 0.0
    %2541 = vmatprep.subr.mxu0 0.0
    %2542 = vmatpush1.xpose.msra.mxu0 0.0
    %2543 = vmatprep.subr.mxu0 0.0
    %2544 = vmatpush1.xpose.msra.mxu0 0.0
    %2545 = vmatprep.subr.mxu0 0.0
    %2546 = vmatpush1.xpose.msra.mxu0 0.0
    %2547 = vmatprep.subr.mxu0 0.0
    %2548 = vmatpush1.xpose.msra.mxu0 0.0
    %2549 = vmatprep.subr.mxu0 0.0
    %2550 = vmatpush1.xpose.msra.mxu0 0.0
    %2551 = vmatprep.subr.mxu0 0.0
    %2552 = vmatpush1.xpose.msra.mxu0 0.0
    %2553 = vmatprep.subr.mxu0 0.0
    %2554 = vmatpush1.xpose.msra.mxu0 0.0
    %2555 = vmatprep.subr.mxu0 0.0
    %2556 = vmatpush1.xpose.msra.mxu0 0.0
    %2557 = vmatprep.subr.mxu0 0.0
    %2558 = vmatpush1.xpose.msra.mxu0 0.0
    %2559 = vmatprep.subr.mxu0 0.0
    %2560 = vmatpush1.xpose.msra.mxu0 0.0
    %2561 = vmatprep.subr.mxu0 0.0
    %2562 = vmatpush1.xpose.msra.mxu0 0.0
    %2563 = vmatprep.subr.mxu0 0.0
    %2564 = vmatpush1.xpose.msra.mxu0 0.0
    %2565 = vmatprep.subr.mxu0 0.0
    %2566 = vmatpush1.xpose.msra.mxu0 0.0
    %2567 = vmatprep.subr.mxu0 0.0
    %2568 = vmatpush1.xpose.msra.mxu0 0.0
    %2569 = vmatprep.subr.mxu0 0.0
    %2570 = vmatpush1.xpose.msra.mxu0 0.0
    %2571 = vmatprep.subr.mxu0 0.0
    %2572 = vmatpush1.xpose.msra.mxu0 0.0
    %2573 = vmatprep.mubr.f32.mxu0 %v2506
    %2574 = vmatmul.mubr.f32.gmra.mrb[0].mxu0 %v2502
    %v2575 = vpop.f32.mrb[0].mxu0
    %v2576 = vadd.f32 %v2497, %v2575
    %v2577 = vpop.f32.mrb[0].mxu0
    %2578 = vdwg.mxu0
    %vm2579 = vcmask 8192
    %2580 = vst.msk [vmem:[#allocation9] sm:$0x1] %vm2579, %v2576
    // Predicated region
    $region42: #{tpu_custom_call.1} parent=1 // pred_check
      _
    $region43: #{tpu_custom_call.1} parent=1 // pred_check_branch
      %2582 = sbr.rel (0) target = $region45
    $region44: #{tpu_custom_call.1} parent=1 // pred_region
      %s2584 = ssub.s32 16, 16
      %2585 = vsyncadd [#allocation5], %s2584
      %s2587 = sshll.u32 [#allocation9], 4
      %s2588 = int_to_ptr.vmem [resolvable:$true] %s2587
      %2590 = dma.vmem_to_hbm [thread:$0]  %s2588, 16, %s7, [#allocation5]
    $region45: #{tpu_custom_call.1} parent=1 // pred_fallthru
      _
    // Predicated region
    $region46: #{tpu_custom_call.1} parent=1 // pred_check
      _
    $region47: #{tpu_custom_call.1} parent=1 // pred_check_branch
      %2592 = sbr.rel (0) target = $region49
    $region48: #{tpu_custom_call.1} parent=1 // pred_region
      %2593 = dma.done [#allocation5], 16
    $region49: #{tpu_custom_call.1} parent=1 // pred_fallthru
      _
    %2594 = vsyncpa [#allocation4], 1
    %2595 = vsyncpa [#allocation7], 1
    %2596 = vsyncpa [#allocation5], 1

// kernel: tpu_custom_call.1
$region0: #{tpu_custom_call.1}
  #allocation0 [shape = 'u32[]', space=smem, size = 0x4, offset = 0x4, fixed_abs, tag = 'smem constant byte address 0x4 - core index']
  #allocation1 [shape = 'u32[144,128]{1,0:T(1,128)}', space=vmem, size = 0x12000, scoped, tag = 'internal scratch']
  #allocation2 [shape = 'f32[1,1]{1,0:T(1,128)S(6)}', space=smem, size = 0x200, scoped, tag = 'scoped memory for tpu_custom_call.1']
  %s0 = inlined_call_operand.hbm [shape: f32[2,1024], index: 0, kind: input, shape index: {}]
  %s1 = inlined_call_operand.hbm [shape: bf16[1024,512], index: 1, kind: input, shape index: {}]
  %s2 = inlined_call_operand.vmem [shape: f32[1,512], index: 2, kind: input, shape index: {}]
  %s3 = inlined_call_operand.hbm [shape: bf16[512,256], index: 3, kind: input, shape index: {}]
  %s4 = inlined_call_operand.vmem [shape: f32[1,256], index: 4, kind: input, shape index: {}]
  %s5 = inlined_call_operand.vmem [shape: f32[1,256], index: 5, kind: input, shape index: {}]
  %s6 = inlined_call_operand.<no memory space> [shape: f32[1,1], index: 6, kind: input, shape index: {}]
  %s7 = inlined_call_operand.hbm [shape: f32[1,2], index: 7, kind: output, shape index: {}]
  %s8 = sld [smem:[#allocation0]]
  $region50: #{tpu_custom_call.1} parent=0
    _
  %s10 = ssub.s32 1, %s8
  %s11 = scalar_select 0, %s10, %s8
  %12 = sst [smem:[#allocation2]] %s6
  $region1: #{tpu_custom_call.1} parent=0
    #allocation3 [shape = 'u8[8192]{0}', space=vmem, size = 0x2000, scoped, tag = 'input window, operand 0, single buffered']
    #allocation4 [shape = 's32[1]{0}', space=sflag, size = 0x4, scoped, tag = 'scoped memory for tpu_custom_call.1']
    #allocation5 [shape = 's32[1]{0}', space=sflag, size = 0x4, scoped, tag = 'scoped memory for tpu_custom_call.1']
    #allocation6 [shape = 'u8[1048576]{0}', space=vmem, size = 0x100000, scoped, tag = 'input window, operand 1, single buffered']
    #allocation7 [shape = 's32[1]{0}', space=sflag, size = 0x4, scoped, tag = 'scoped memory for tpu_custom_call.1']
    #allocation8 [shape = 'u8[262144]{0}', space=vmem, size = 0x40000, scoped, tag = 'input window, operand 3, single buffered']
    #allocation9 [shape = 'u8[512]{0}', space=vmem, size = 0x400, scoped, tag = 'output window, operand 0, single buffered']
    %13 = vsyncpa [#allocation4], 0
    %14 = vsyncpa [#allocation7], 0
    %15 = vsyncpa [#allocation5], 0
    // Predicated region
    $region2: #{tpu_custom_call.1} parent=1 // pred_check
      _
    $region3: #{tpu_custom_call.1} parent=1 // pred_check_branch
      %17 = sbr.rel (0) target = $region5
    $region4: #{tpu_custom_call.1} parent=1 // pred_region
      %s19 = ssub.s32 256, 256
      %20 = vsyncadd [#allocation4], %s19
      %s22 = sshll.u32 [#allocation3], 4
      %s23 = int_to_ptr.vmem [resolvable:$true] %s22
      %25 = dma.hbm_to_vmem [thread:$0]  %s0, 256, %s23, [#allocation4]
    $region5: #{tpu_custom_call.1} parent=1 // pred_fallthru
      _
    // Predicated region
    $region6: #{tpu_custom_call.1} parent=1 // pred_check
      _
    $region7: #{tpu_custom_call.1} parent=1 // pred_check_branch
      %27 = sbr.rel (0) target = $region9
    $region8: #{tpu_custom_call.1} parent=1 // pred_region
      %s29 = ssub.s32 32768, 32768
      %30 = vsyncadd [#allocation7], %s29
      %s31 = sshll.u32 [#allocation6], 4
      %s32 = int_to_ptr.vmem [resolvable:$true] %s31
      %37 = dma.hbm_to_vmem [thread:$0]  %s1, 32768, %s32, [#allocation7], 256, 256, 16
    $region9: #{tpu_custom_call.1} parent=1 // pred_fallthru
      _
    // Predicated region
    $region10: #{tpu_custom_call.1} parent=1 // pred_check
      _
    $region11: #{tpu_custom_call.1} parent=1 // pred_check_branch
      %39 = sbr.rel (0) target = $region13
    $region12: #{tpu_custom_call.1} parent=1 // pred_region
      _
    $region13: #{tpu_custom_call.1} parent=1 // pred_fallthru
      _
    // Predicated region
    $region14: #{tpu_custom_call.1} parent=1 // pred_check
      _
    $region15: #{tpu_custom_call.1} parent=1 // pred_check_branch
      %41 = sbr.rel (0) target = $region17
    $region16: #{tpu_custom_call.1} parent=1 // pred_region
      %s43 = ssub.s32 8192, 8192
      %44 = vsyncadd [#allocation7], %s43
      %s45 = sshll.u32 [#allocation8], 4
      %s46 = int_to_ptr.vmem [resolvable:$true] %s45
      %51 = dma.hbm_to_vmem [thread:$0]  %s3, 8192, %s46, [#allocation7], 128, 128, 8
    $region17: #{tpu_custom_call.1} parent=1 // pred_fallthru
      _
    // Predicated region
    $region18: #{tpu_custom_call.1} parent=1 // pred_check
      _
    $region19: #{tpu_custom_call.1} parent=1 // pred_check_branch
      %53 = sbr.rel (0) target = $region21
    $region20: #{tpu_custom_call.1} parent=1 // pred_region
      _
    $region21: #{tpu_custom_call.1} parent=1 // pred_fallthru
      _
    // Predicated region
    $region22: #{tpu_custom_call.1} parent=1 // pred_check
      _
    $region23: #{tpu_custom_call.1} parent=1 // pred_check_branch
      %55 = sbr.rel (0) target = $region25
    $region24: #{tpu_custom_call.1} parent=1 // pred_region
      _
    $region25: #{tpu_custom_call.1} parent=1 // pred_fallthru
      _
    // Predicated region
    $region26: #{tpu_custom_call.1} parent=1 // pred_check
      _
    $region27: #{tpu_custom_call.1} parent=1 // pred_check_branch
      %57 = sbr.rel (0) target = $region29
    $region28: #{tpu_custom_call.1} parent=1 // pred_region
      _
    $region29: #{tpu_custom_call.1} parent=1 // pred_fallthru
      _
    // Predicated region
    $region30: #{tpu_custom_call.1} parent=1 // pred_check
      _
    $region31: #{tpu_custom_call.1} parent=1 // pred_check_branch
      %59 = sbr.rel (0) target = $region33
    $region32: #{tpu_custom_call.1} parent=1 // pred_region
      %60 = dma.done [#allocation4], 256
    $region33: #{tpu_custom_call.1} parent=1 // pred_fallthru
      _
    // Predicated region
    $region34: #{tpu_custom_call.1} parent=1 // pred_check
      _
    $region35: #{tpu_custom_call.1} parent=1 // pred_check_branch
      %62 = sbr.rel (0) target = $region37
    $region36: #{tpu_custom_call.1} parent=1 // pred_region
      %63 = dma.done [#allocation7], 32768
    $region37: #{tpu_custom_call.1} parent=1 // pred_fallthru
      _
    // Predicated region
    $region38: #{tpu_custom_call.1} parent=1 // pred_check
      _
    $region39: #{tpu_custom_call.1} parent=1 // pred_check_branch
      %65 = sbr.rel (0) target = $region41
    $region40: #{tpu_custom_call.1} parent=1 // pred_region
      %66 = dma.done [#allocation7], 8192
    $region41: #{tpu_custom_call.1} parent=1 // pred_fallthru
      _
    %v67 = vld [vmem:[#allocation3] sm:$0xff]
    %v68 = vld [vmem:[#allocation3 + $0x8] sm:$0xff]
    %v71 = vcombine.high %v67, %v67
    %v73 = vunpack.c.l.s4 1983009808
    %v74 = vunpack.c.0.s8 %v73
    %v75 = vlaneseq
    %v76 = vshrl.u32 %v75, 7
    %v77 = vsub.s32 %v74, %v76
    %v78 = vrot.slane %v67, %v77
    %v80 = vunpack.c.l.s4 1983009808
    %v81 = vunpack.c.0.s8 %v80
    %v82 = vlaneseq
    %v83 = vshrl.u32 %v82, 7
    %v84 = vsub.s32 %v81, %v83
    %v85 = vrot.slane %v71, %v84
    %v86 = vcombine.high %v78, %v78
    %v87 = vcombine.high %v85, %v85
    %v88 = vcombine.high %v68, %v68
    %v90 = vunpack.c.l.s4 1983009808
    %v91 = vunpack.c.0.s8 %v90
    %v92 = vlaneseq
    %v93 = vshrl.u32 %v92, 7
    %v94 = vsub.s32 %v91, %v93
    %v95 = vrot.slane %v68, %v94
    %v97 = vunpack.c.l.s4 1983009808
    %v98 = vunpack.c.0.s8 %v97
    %v99 = vlaneseq
    %v100 = vshrl.u32 %v99, 7
    %v101 = vsub.s32 %v98, %v100
    %v102 = vrot.slane %v88, %v101
    %v103 = vcombine.high %v95, %v95
    %v104 = vcombine.high %v102, %v102
    %v113 = vpack.c.bf16 %v78, %v78
    %v114 = vpack.c.bf16 %v86, %v86
    %v115 = vpack.c.bf16 %v85, %v85
    %v116 = vpack.c.bf16 %v87, %v87
    %v117 = vpack.c.bf16 %v95, %v95
    %v118 = vpack.c.bf16 %v103, %v103
    %v119 = vpack.c.bf16 %v102, %v102
    %v120 = vpack.c.bf16 %v104, %v104
    %v121 = vld [vmem:[#allocation6] sm:$0xff]
    %v122 = vld [vmem:[#allocation6 + $0x8] sm:$0xff]
    %v123 = vld [vmem:[#allocation6 + $0x10] sm:$0xff]
    %v124 = vld [vmem:[#allocation6 + $0x18] sm:$0xff]
    %v125 = vld [vmem:[#allocation6 + $0x20] sm:$0xff]
    %v126 = vld [vmem:[#allocation6 + $0x28] sm:$0xff]
    %v127 = vld [vmem:[#allocation6 + $0x30] sm:$0xff]
    %v128 = vld [vmem:[#allocation6 + $0x38] sm:$0xff]
    %v129 = vld [vmem:[#allocation6 + $0x40] sm:$0xff]
    %v130 = vld [vmem:[#allocation6 + $0x48] sm:$0xff]
    %v131 = vld [vmem:[#allocation6 + $0x50] sm:$0xff]
    %v132 = vld [vmem:[#allocation6 + $0x58] sm:$0xff]
    %v133 = vld [vmem:[#allocation6 + $0x60] sm:$0xff]
    %v134 = vld [vmem:[#allocation6 + $0x68] sm:$0xff]
    %v135 = vld [vmem:[#allocation6 + $0x70] sm:$0xff]
    %v136 = vld [vmem:[#allocation6 + $0x78] sm:$0xff]
    %v137 = vld [vmem:[#allocation6 + $0x80] sm:$0xff]
    %v138 = vld [vmem:[#allocation6 + $0x88] sm:$0xff]
    %v139 = vld [vmem:[#allocation6 + $0x90] sm:$0xff]
    %v140 = vld [vmem:[#allocation6 + $0x98] sm:$0xff]
    %v141 = vld [vmem:[#allocation6 + $0xa0] sm:$0xff]
    %v142 = vld [vmem:[#allocation6 + $0xa8] sm:$0xff]
    %v143 = vld [vmem:[#allocation6 + $0xb0] sm:$0xff]
    %v144 = vld [vmem:[#allocation6 + $0xb8] sm:$0xff]
    %v145 = vld [vmem:[#allocation6 + $0xc0] sm:$0xff]
    %v146 = vld [vmem:[#allocation6 + $0xc8] sm:$0xff]
    %v147 = vld [vmem:[#allocation6 + $0xd0] sm:$0xff]
    %v148 = vld [vmem:[#allocation6 + $0xd8] sm:$0xff]
    %v149 = vld [vmem:[#allocation6 + $0xe0] sm:$0xff]
    %v150 = vld [vmem:[#allocation6 + $0xe8] sm:$0xff]
    %v151 = vld [vmem:[#allocation6 + $0xf0] sm:$0xff]
    %v152 = vld [vmem:[#allocation6 + $0xf8] sm:$0xff]
    %v153 = vld [vmem:[#allocation6 + $0x100] sm:$0xff]
    %v154 = vld [vmem:[#allocation6 + $0x108] sm:$0xff]
    %v155 = vld [vmem:[#allocation6 + $0x110] sm:$0xff]
    %v156 = vld [vmem:[#allocation6 + $0x118] sm:$0xff]
    %v157 = vld [vmem:[#allocation6 + $0x120] sm:$0xff]
    %v158 = vld [vmem:[#allocation6 + $0x128] sm:$0xff]
    %v159 = vld [vmem:[#allocation6 + $0x130] sm:$0xff]
    %v160 = vld [vmem:[#allocation6 + $0x138] sm:$0xff]
    %v161 = vld [vmem:[#allocation6 + $0x140] sm:$0xff]
    %v162 = vld [vmem:[#allocation6 + $0x148] sm:$0xff]
    %v163 = vld [vmem:[#allocation6 + $0x150] sm:$0xff]
    %v164 = vld [vmem:[#allocation6 + $0x158] sm:$0xff]
    %v165 = vld [vmem:[#allocation6 + $0x160] sm:$0xff]
    %v166 = vld [vmem:[#allocation6 + $0x168] sm:$0xff]
    %v167 = vld [vmem:[#allocation6 + $0x170] sm:$0xff]
    %v168 = vld [vmem:[#allocation6 + $0x178] sm:$0xff]
    %v169 = vld [vmem:[#allocation6 + $0x180] sm:$0xff]
    %v170 = vld [vmem:[#allocation6 + $0x188] sm:$0xff]
    %v171 = vld [vmem:[#allocation6 + $0x190] sm:$0xff]
    %v172 = vld [vmem:[#allocation6 + $0x198] sm:$0xff]
    %v173 = vld [vmem:[#allocation6 + $0x1a0] sm:$0xff]
    %v174 = vld [vmem:[#allocation6 + $0x1a8] sm:$0xff]
    %v175 = vld [vmem:[#allocation6 + $0x1b0] sm:$0xff]
    %v176 = vld [vmem:[#allocation6 + $0x1b8] sm:$0xff]
    %v177 = vld [vmem:[#allocation6 + $0x1c0] sm:$0xff]
    %v178 = vld [vmem:[#allocation6 + $0x1c8] sm:$0xff]
    %v179 = vld [vmem:[#allocation6 + $0x1d0] sm:$0xff]
    %v180 = vld [vmem:[#allocation6 + $0x1d8] sm:$0xff]
    %v181 = vld [vmem:[#allocation6 + $0x1e0] sm:$0xff]
    %v182 = vld [vmem:[#allocation6 + $0x1e8] sm:$0xff]
    %v183 = vld [vmem:[#allocation6 + $0x1f0] sm:$0xff]
    %v184 = vld [vmem:[#allocation6 + $0x1f8] sm:$0xff]
    %v185 = vld [vmem:[#allocation6 + $0x200] sm:$0xff]
    %v186 = vld [vmem:[#allocation6 + $0x208] sm:$0xff]
    %v187 = vld [vmem:[#allocation6 + $0x210] sm:$0xff]
    %v188 = vld [vmem:[#allocation6 + $0x218] sm:$0xff]
    %v189 = vld [vmem:[#allocation6 + $0x220] sm:$0xff]
    %v190 = vld [vmem:[#allocation6 + $0x228] sm:$0xff]
    %v191 = vld [vmem:[#allocation6 + $0x230] sm:$0xff]
    %v192 = vld [vmem:[#allocation6 + $0x238] sm:$0xff]
    %v193 = vld [vmem:[#allocation6 + $0x240] sm:$0xff]
    %v194 = vld [vmem:[#allocation6 + $0x248] sm:$0xff]
    %v195 = vld [vmem:[#allocation6 + $0x250] sm:$0xff]
    %v196 = vld [vmem:[#allocation6 + $0x258] sm:$0xff]
    %v197 = vld [vmem:[#allocation6 + $0x260] sm:$0xff]
    %v198 = vld [vmem:[#allocation6 + $0x268] sm:$0xff]
    %v199 = vld [vmem:[#allocation6 + $0x270] sm:$0xff]
    %v200 = vld [vmem:[#allocation6 + $0x278] sm:$0xff]
    %v201 = vld [vmem:[#allocation6 + $0x280] sm:$0xff]
    %v202 = vld [vmem:[#allocation6 + $0x288] sm:$0xff]
    %v203 = vld [vmem:[#allocation6 + $0x290] sm:$0xff]
    %v204 = vld [vmem:[#allocation6 + $0x298] sm:$0xff]
    %v205 = vld [vmem:[#allocation6 + $0x2a0] sm:$0xff]
    %v206 = vld [vmem:[#allocation6 + $0x2a8] sm:$0xff]
    %v207 = vld [vmem:[#allocation6 + $0x2b0] sm:$0xff]
    %v208 = vld [vmem:[#allocation6 + $0x2b8] sm:$0xff]
    %v209 = vld [vmem:[#allocation6 + $0x2c0] sm:$0xff]
    %v210 = vld [vmem:[#allocation6 + $0x2c8] sm:$0xff]
    %v211 = vld [vmem:[#allocation6 + $0x2d0] sm:$0xff]
    %v212 = vld [vmem:[#allocation6 + $0x2d8] sm:$0xff]
    %v213 = vld [vmem:[#allocation6 + $0x2e0] sm:$0xff]
    %v214 = vld [vmem:[#allocation6 + $0x2e8] sm:$0xff]
    %v215 = vld [vmem:[#allocation6 + $0x2f0] sm:$0xff]
    %v216 = vld [vmem:[#allocation6 + $0x2f8] sm:$0xff]
    %v217 = vld [vmem:[#allocation6 + $0x300] sm:$0xff]
    %v218 = vld [vmem:[#allocation6 + $0x308] sm:$0xff]
    %v219 = vld [vmem:[#allocation6 + $0x310] sm:$0xff]
    %v220 = vld [vmem:[#allocation6 + $0x318] sm:$0xff]
    %v221 = vld [vmem:[#allocation6 + $0x320] sm:$0xff]
    %v222 = vld [vmem:[#allocation6 + $0x328] sm:$0xff]
    %v223 = vld [vmem:[#allocation6 + $0x330] sm:$0xff]
    %v224 = vld [vmem:[#allocation6 + $0x338] sm:$0xff]
    %v225 = vld [vmem:[#allocation6 + $0x340] sm:$0xff]
    %v226 = vld [vmem:[#allocation6 + $0x348] sm:$0xff]
    %v227 = vld [vmem:[#allocation6 + $0x350] sm:$0xff]
    %v228 = vld [vmem:[#allocation6 + $0x358] sm:$0xff]
    %v229 = vld [vmem:[#allocation6 + $0x360] sm:$0xff]
    %v230 = vld [vmem:[#allocation6 + $0x368] sm:$0xff]
    %v231 = vld [vmem:[#allocation6 + $0x370] sm:$0xff]
    %v232 = vld [vmem:[#allocation6 + $0x378] sm:$0xff]
    %v233 = vld [vmem:[#allocation6 + $0x380] sm:$0xff]
    %v234 = vld [vmem:[#allocation6 + $0x388] sm:$0xff]
    %v235 = vld [vmem:[#allocation6 + $0x390] sm:$0xff]
    %v236 = vld [vmem:[#allocation6 + $0x398] sm:$0xff]
    %v237 = vld [vmem:[#allocation6 + $0x3a0] sm:$0xff]
    %v238 = vld [vmem:[#allocation6 + $0x3a8] sm:$0xff]
    %v239 = vld [vmem:[#allocation6 + $0x3b0] sm:$0xff]
    %v240 = vld [vmem:[#allocation6 + $0x3b8] sm:$0xff]
    %v241 = vld [vmem:[#allocation6 + $0x3c0] sm:$0xff]
    %v242 = vld [vmem:[#allocation6 + $0x3c8] sm:$0xff]
    %v243 = vld [vmem:[#allocation6 + $0x3d0] sm:$0xff]
    %v244 = vld [vmem:[#allocation6 + $0x3d8] sm:$0xff]
    %v245 = vld [vmem:[#allocation6 + $0x3e0] sm:$0xff]
    %v246 = vld [vmem:[#allocation6 + $0x3e8] sm:$0xff]
    %v247 = vld [vmem:[#allocation6 + $0x3f0] sm:$0xff]
    %v248 = vld [vmem:[#allocation6 + $0x3f8] sm:$0xff]
    %v249 = vld [vmem:[#allocation6 + $0x400] sm:$0xff]
    %v250 = vld [vmem:[#allocation6 + $0x408] sm:$0xff]
    %v251 = vld [vmem:[#allocation6 + $0x410] sm:$0xff]
    %v252 = vld [vmem:[#allocation6 + $0x418] sm:$0xff]
    %v253 = vld [vmem:[#allocation6 + $0x420] sm:$0xff]
    %v254 = vld [vmem:[#allocation6 + $0x428] sm:$0xff]
    %v255 = vld [vmem:[#allocation6 + $0x430] sm:$0xff]
    %v256 = vld [vmem:[#allocation6 + $0x438] sm:$0xff]
    %v257 = vld [vmem:[#allocation6 + $0x440] sm:$0xff]
    %v258 = vld [vmem:[#allocation6 + $0x448] sm:$0xff]
    %v259 = vld [vmem:[#allocation6 + $0x450] sm:$0xff]
    %v260 = vld [vmem:[#allocation6 + $0x458] sm:$0xff]
    %v261 = vld [vmem:[#allocation6 + $0x460] sm:$0xff]
    %v262 = vld [vmem:[#allocation6 + $0x468] sm:$0xff]
    %v263 = vld [vmem:[#allocation6 + $0x470] sm:$0xff]
    %v264 = vld [vmem:[#allocation6 + $0x478] sm:$0xff]
    %v265 = vld [vmem:[#allocation6 + $0x480] sm:$0xff]
    %v266 = vld [vmem:[#allocation6 + $0x488] sm:$0xff]
    %v267 = vld [vmem:[#allocation6 + $0x490] sm:$0xff]
    %v268 = vld [vmem:[#allocation6 + $0x498] sm:$0xff]
    %v269 = vld [vmem:[#allocation6 + $0x4a0] sm:$0xff]
    %v270 = vld [vmem:[#allocation6 + $0x4a8] sm:$0xff]
    %v271 = vld [vmem:[#allocation6 + $0x4b0] sm:$0xff]
    %v272 = vld [vmem:[#allocation6 + $0x4b8] sm:$0xff]
    %v273 = vld [vmem:[#allocation6 + $0x4c0] sm:$0xff]
    %v274 = vld [vmem:[#allocation6 + $0x4c8] sm:$0xff]
    %v275 = vld [vmem:[#allocation6 + $0x4d0] sm:$0xff]
    %v276 = vld [vmem:[#allocation6 + $0x4d8] sm:$0xff]
    %v277 = vld [vmem:[#allocation6 + $0x4e0] sm:$0xff]
    %v278 = vld [vmem:[#allocation6 + $0x4e8] sm:$0xff]
    %v279 = vld [vmem:[#allocation6 + $0x4f0] sm:$0xff]
    %v280 = vld [vmem:[#allocation6 + $0x4f8] sm:$0xff]
    %v281 = vld [vmem:[#allocation6 + $0x500] sm:$0xff]
    %v282 = vld [vmem:[#allocation6 + $0x508] sm:$0xff]
    %v283 = vld [vmem:[#allocation6 + $0x510] sm:$0xff]
    %v284 = vld [vmem:[#allocation6 + $0x518] sm:$0xff]
    %v285 = vld [vmem:[#allocation6 + $0x520] sm:$0xff]
    %v286 = vld [vmem:[#allocation6 + $0x528] sm:$0xff]
    %v287 = vld [vmem:[#allocation6 + $0x530] sm:$0xff]
    %v288 = vld [vmem:[#allocation6 + $0x538] sm:$0xff]
    %v289 = vld [vmem:[#allocation6 + $0x540] sm:$0xff]
    %v290 = vld [vmem:[#allocation6 + $0x548] sm:$0xff]
    %v291 = vld [vmem:[#allocation6 + $0x550] sm:$0xff]
    %v292 = vld [vmem:[#allocation6 + $0x558] sm:$0xff]
    %v293 = vld [vmem:[#allocation6 + $0x560] sm:$0xff]
    %v294 = vld [vmem:[#allocation6 + $0x568] sm:$0xff]
    %v295 = vld [vmem:[#allocation6 + $0x570] sm:$0xff]
    %v296 = vld [vmem:[#allocation6 + $0x578] sm:$0xff]
    %v297 = vld [vmem:[#allocation6 + $0x580] sm:$0xff]
    %v298 = vld [vmem:[#allocation6 + $0x588] sm:$0xff]
    %v299 = vld [vmem:[#allocation6 + $0x590] sm:$0xff]
    %v300 = vld [vmem:[#allocation6 + $0x598] sm:$0xff]
    %v301 = vld [vmem:[#allocation6 + $0x5a0] sm:$0xff]
    %v302 = vld [vmem:[#allocation6 + $0x5a8] sm:$0xff]
    %v303 = vld [vmem:[#allocation6 + $0x5b0] sm:$0xff]
    %v304 = vld [vmem:[#allocation6 + $0x5b8] sm:$0xff]
    %v305 = vld [vmem:[#allocation6 + $0x5c0] sm:$0xff]
    %v306 = vld [vmem:[#allocation6 + $0x5c8] sm:$0xff]
    %v307 = vld [vmem:[#allocation6 + $0x5d0] sm:$0xff]
    %v308 = vld [vmem:[#allocation6 + $0x5d8] sm:$0xff]
    %v309 = vld [vmem:[#allocation6 + $0x5e0] sm:$0xff]
    %v310 = vld [vmem:[#allocation6 + $0x5e8] sm:$0xff]
    %v311 = vld [vmem:[#allocation6 + $0x5f0] sm:$0xff]
    %v312 = vld [vmem:[#allocation6 + $0x5f8] sm:$0xff]
    %v313 = vld [vmem:[#allocation6 + $0x600] sm:$0xff]
    %v314 = vld [vmem:[#allocation6 + $0x608] sm:$0xff]
    %v315 = vld [vmem:[#allocation6 + $0x610] sm:$0xff]
    %v316 = vld [vmem:[#allocation6 + $0x618] sm:$0xff]
    %v317 = vld [vmem:[#allocation6 + $0x620] sm:$0xff]
    %v318 = vld [vmem:[#allocation6 + $0x628] sm:$0xff]
    %v319 = vld [vmem:[#allocation6 + $0x630] sm:$0xff]
    %v320 = vld [vmem:[#allocation6 + $0x638] sm:$0xff]
    %v321 = vld [vmem:[#allocation6 + $0x640] sm:$0xff]
    %v322 = vld [vmem:[#allocation6 + $0x648] sm:$0xff]
    %v323 = vld [vmem:[#allocation6 + $0x650] sm:$0xff]
    %v324 = vld [vmem:[#allocation6 + $0x658] sm:$0xff]
    %v325 = vld [vmem:[#allocation6 + $0x660] sm:$0xff]
    %v326 = vld [vmem:[#allocation6 + $0x668] sm:$0xff]
    %v327 = vld [vmem:[#allocation6 + $0x670] sm:$0xff]
    %v328 = vld [vmem:[#allocation6 + $0x678] sm:$0xff]
    %v329 = vld [vmem:[#allocation6 + $0x680] sm:$0xff]
    %v330 = vld [vmem:[#allocation6 + $0x688] sm:$0xff]
    %v331 = vld [vmem:[#allocation6 + $0x690] sm:$0xff]
    %v332 = vld [vmem:[#allocation6 + $0x698] sm:$0xff]
    %v333 = vld [vmem:[#allocation6 + $0x6a0] sm:$0xff]
    %v334 = vld [vmem:[#allocation6 + $0x6a8] sm:$0xff]
    %v335 = vld [vmem:[#allocation6 + $0x6b0] sm:$0xff]
    %v336 = vld [vmem:[#allocation6 + $0x6b8] sm:$0xff]
    %v337 = vld [vmem:[#allocation6 + $0x6c0] sm:$0xff]
    %v338 = vld [vmem:[#allocation6 + $0x6c8] sm:$0xff]
    %v339 = vld [vmem:[#allocation6 + $0x6d0] sm:$0xff]
    %v340 = vld [vmem:[#allocation6 + $0x6d8] sm:$0xff]
    %v341 = vld [vmem:[#allocation6 + $0x6e0] sm:$0xff]
    %v342 = vld [vmem:[#allocation6 + $0x6e8] sm:$0xff]
    %v343 = vld [vmem:[#allocation6 + $0x6f0] sm:$0xff]
    %v344 = vld [vmem:[#allocation6 + $0x6f8] sm:$0xff]
    %v345 = vld [vmem:[#allocation6 + $0x700] sm:$0xff]
    %v346 = vld [vmem:[#allocation6 + $0x708] sm:$0xff]
    %v347 = vld [vmem:[#allocation6 + $0x710] sm:$0xff]
    %v348 = vld [vmem:[#allocation6 + $0x718] sm:$0xff]
    %v349 = vld [vmem:[#allocation6 + $0x720] sm:$0xff]
    %v350 = vld [vmem:[#allocation6 + $0x728] sm:$0xff]
    %v351 = vld [vmem:[#allocation6 + $0x730] sm:$0xff]
    %v352 = vld [vmem:[#allocation6 + $0x738] sm:$0xff]
    %v353 = vld [vmem:[#allocation6 + $0x740] sm:$0xff]
    %v354 = vld [vmem:[#allocation6 + $0x748] sm:$0xff]
    %v355 = vld [vmem:[#allocation6 + $0x750] sm:$0xff]
    %v356 = vld [vmem:[#allocation6 + $0x758] sm:$0xff]
    %v357 = vld [vmem:[#allocation6 + $0x760] sm:$0xff]
    %v358 = vld [vmem:[#allocation6 + $0x768] sm:$0xff]
    %v359 = vld [vmem:[#allocation6 + $0x770] sm:$0xff]
    %v360 = vld [vmem:[#allocation6 + $0x778] sm:$0xff]
    %v361 = vld [vmem:[#allocation6 + $0x780] sm:$0xff]
    %v362 = vld [vmem:[#allocation6 + $0x788] sm:$0xff]
    %v363 = vld [vmem:[#allocation6 + $0x790] sm:$0xff]
    %v364 = vld [vmem:[#allocation6 + $0x798] sm:$0xff]
    %v365 = vld [vmem:[#allocation6 + $0x7a0] sm:$0xff]
    %v366 = vld [vmem:[#allocation6 + $0x7a8] sm:$0xff]
    %v367 = vld [vmem:[#allocation6 + $0x7b0] sm:$0xff]
    %v368 = vld [vmem:[#allocation6 + $0x7b8] sm:$0xff]
    %v369 = vld [vmem:[#allocation6 + $0x7c0] sm:$0xff]
    %v370 = vld [vmem:[#allocation6 + $0x7c8] sm:$0xff]
    %v371 = vld [vmem:[#allocation6 + $0x7d0] sm:$0xff]
    %v372 = vld [vmem:[#allocation6 + $0x7d8] sm:$0xff]
    %v373 = vld [vmem:[#allocation6 + $0x7e0] sm:$0xff]
    %v374 = vld [vmem:[#allocation6 + $0x7e8] sm:$0xff]
    %v375 = vld [vmem:[#allocation6 + $0x7f0] sm:$0xff]
    %v376 = vld [vmem:[#allocation6 + $0x7f8] sm:$0xff]
    %v377 = vld [vmem:[%s2] sm:$0xf]
    %v379 = vlaneseq
    %v380 = vshrl.u32 %v379, 7
    %v381 = vsub.s32 0, %v380
    %v382 = vrot.slane %v377, %v381
    %v383 = vlaneseq
    %v384 = vshrl.u32 %v383, 7
    %v385 = vsub.s32 1, %v384
    %v386 = vrot.slane %v377, %v385
    %v387 = vlaneseq
    %v388 = vshrl.u32 %v387, 7
    %v389 = vsub.s32 2, %v388
    %v390 = vrot.slane %v377, %v389
    %v391 = vlaneseq
    %v392 = vshrl.u32 %v391, 7
    %v393 = vsub.s32 3, %v392
    %v394 = vrot.slane %v377, %v393
    %v655 = vunpack.c.l.b16 %v121
    %v656 = vunpack.c.h.b16 %v121
    %v657 = vunpack.c.l.b16 %v122
    %v658 = vunpack.c.h.b16 %v122
    %v659 = vunpack.c.l.b16 %v123
    %v660 = vunpack.c.h.b16 %v123
    %v661 = vunpack.c.l.b16 %v124
    %v662 = vunpack.c.h.b16 %v124
    %v663 = vunpack.c.l.b16 %v125
    %v664 = vunpack.c.h.b16 %v125
    %v665 = vunpack.c.l.b16 %v126
    %v666 = vunpack.c.h.b16 %v126
    %v667 = vunpack.c.l.b16 %v127
    %v668 = vunpack.c.h.b16 %v127
    %v669 = vunpack.c.l.b16 %v128
    %v670 = vunpack.c.h.b16 %v128
    %v671 = vunpack.c.l.b16 %v129
    %v672 = vunpack.c.h.b16 %v129
    %v673 = vunpack.c.l.b16 %v130
    %v674 = vunpack.c.h.b16 %v130
    %v675 = vunpack.c.l.b16 %v131
    %v676 = vunpack.c.h.b16 %v131
    %v677 = vunpack.c.l.b16 %v132
    %v678 = vunpack.c.h.b16 %v132
    %v679 = vunpack.c.l.b16 %v133
    %v680 = vunpack.c.h.b16 %v133
    %v681 = vunpack.c.l.b16 %v134
    %v682 = vunpack.c.h.b16 %v134
    %v683 = vunpack.c.l.b16 %v135
    %v684 = vunpack.c.h.b16 %v135
    %v685 = vunpack.c.l.b16 %v136
    %v686 = vunpack.c.h.b16 %v136
    %v687 = vunpack.c.l.b16 %v137
    %v688 = vunpack.c.h.b16 %v137
    %v689 = vunpack.c.l.b16 %v138
    %v690 = vunpack.c.h.b16 %v138
    %v691 = vunpack.c.l.b16 %v139
    %v692 = vunpack.c.h.b16 %v139
    %v693 = vunpack.c.l.b16 %v140
    %v694 = vunpack.c.h.b16 %v140
    %v695 = vunpack.c.l.b16 %v141
    %v696 = vunpack.c.h.b16 %v141
    %v697 = vunpack.c.l.b16 %v142
    %v698 = vunpack.c.h.b16 %v142
    %v699 = vunpack.c.l.b16 %v143
    %v700 = vunpack.c.h.b16 %v143
    %v701 = vunpack.c.l.b16 %v144
    %v702 = vunpack.c.h.b16 %v144
    %v703 = vunpack.c.l.b16 %v145
    %v704 = vunpack.c.h.b16 %v145
    %v705 = vunpack.c.l.b16 %v146
    %v706 = vunpack.c.h.b16 %v146
    %v707 = vunpack.c.l.b16 %v147
    %v708 = vunpack.c.h.b16 %v147
    %v709 = vunpack.c.l.b16 %v148
    %v710 = vunpack.c.h.b16 %v148
    %v711 = vunpack.c.l.b16 %v149
    %v712 = vunpack.c.h.b16 %v149
    %v713 = vunpack.c.l.b16 %v150
    %v714 = vunpack.c.h.b16 %v150
    %v715 = vunpack.c.l.b16 %v151
    %v716 = vunpack.c.h.b16 %v151
    %v717 = vunpack.c.l.b16 %v152
    %v718 = vunpack.c.h.b16 %v152
    %v719 = vunpack.c.l.b16 %v153
    %v720 = vunpack.c.h.b16 %v153
    %v721 = vunpack.c.l.b16 %v154
    %v722 = vunpack.c.h.b16 %v154
    %v723 = vunpack.c.l.b16 %v155
    %v724 = vunpack.c.h.b16 %v155
    %v725 = vunpack.c.l.b16 %v156
    %v726 = vunpack.c.h.b16 %v156
    %v727 = vunpack.c.l.b16 %v157
    %v728 = vunpack.c.h.b16 %v157
    %v729 = vunpack.c.l.b16 %v158
    %v730 = vunpack.c.h.b16 %v158
    %v731 = vunpack.c.l.b16 %v159
    %v732 = vunpack.c.h.b16 %v159
    %v733 = vunpack.c.l.b16 %v160
    %v734 = vunpack.c.h.b16 %v160
    %v735 = vunpack.c.l.b16 %v161
    %v736 = vunpack.c.h.b16 %v161
    %v737 = vunpack.c.l.b16 %v162
    %v738 = vunpack.c.h.b16 %v162
    %v739 = vunpack.c.l.b16 %v163
    %v740 = vunpack.c.h.b16 %v163
    %v741 = vunpack.c.l.b16 %v164
    %v742 = vunpack.c.h.b16 %v164
    %v743 = vunpack.c.l.b16 %v165
    %v744 = vunpack.c.h.b16 %v165
    %v745 = vunpack.c.l.b16 %v166
    %v746 = vunpack.c.h.b16 %v166
    %v747 = vunpack.c.l.b16 %v167
    %v748 = vunpack.c.h.b16 %v167
    %v749 = vunpack.c.l.b16 %v168
    %v750 = vunpack.c.h.b16 %v168
    %v751 = vunpack.c.l.b16 %v169
    %v752 = vunpack.c.h.b16 %v169
    %v753 = vunpack.c.l.b16 %v170
    %v754 = vunpack.c.h.b16 %v170
    %v755 = vunpack.c.l.b16 %v171
    %v756 = vunpack.c.h.b16 %v171
    %v757 = vunpack.c.l.b16 %v172
    %v758 = vunpack.c.h.b16 %v172
    %v759 = vunpack.c.l.b16 %v173
    %v760 = vunpack.c.h.b16 %v173
    %v761 = vunpack.c.l.b16 %v174
    %v762 = vunpack.c.h.b16 %v174
    %v763 = vunpack.c.l.b16 %v175
    %v764 = vunpack.c.h.b16 %v175
    %v765 = vunpack.c.l.b16 %v176
    %v766 = vunpack.c.h.b16 %v176
    %v767 = vunpack.c.l.b16 %v177
    %v768 = vunpack.c.h.b16 %v177
    %v769 = vunpack.c.l.b16 %v178
    %v770 = vunpack.c.h.b16 %v178
    %v771 = vunpack.c.l.b16 %v179
    %v772 = vunpack.c.h.b16 %v179
    %v773 = vunpack.c.l.b16 %v180
    %v774 = vunpack.c.h.b16 %v180
    %v775 = vunpack.c.l.b16 %v181
    %v776 = vunpack.c.h.b16 %v181
    %v777 = vunpack.c.l.b16 %v182
    %v778 = vunpack.c.h.b16 %v182
    %v779 = vunpack.c.l.b16 %v183
    %v780 = vunpack.c.h.b16 %v183
    %v781 = vunpack.c.l.b16 %v184
    %v782 = vunpack.c.h.b16 %v184
    %v783 = vunpack.c.l.b16 %v185
    %v784 = vunpack.c.h.b16 %v185
    %v785 = vunpack.c.l.b16 %v186
    %v786 = vunpack.c.h.b16 %v186
    %v787 = vunpack.c.l.b16 %v187
    %v788 = vunpack.c.h.b16 %v187
    %v789 = vunpack.c.l.b16 %v188
    %v790 = vunpack.c.h.b16 %v188
    %v791 = vunpack.c.l.b16 %v189
    %v792 = vunpack.c.h.b16 %v189
    %v793 = vunpack.c.l.b16 %v190
    %v794 = vunpack.c.h.b16 %v190
    %v795 = vunpack.c.l.b16 %v191
    %v796 = vunpack.c.h.b16 %v191
    %v797 = vunpack.c.l.b16 %v192
    %v798 = vunpack.c.h.b16 %v192
    %v799 = vunpack.c.l.b16 %v193
    %v800 = vunpack.c.h.b16 %v193
    %v801 = vunpack.c.l.b16 %v194
    %v802 = vunpack.c.h.b16 %v194
    %v803 = vunpack.c.l.b16 %v195
    %v804 = vunpack.c.h.b16 %v195
    %v805 = vunpack.c.l.b16 %v196
    %v806 = vunpack.c.h.b16 %v196
    %v807 = vunpack.c.l.b16 %v197
    %v808 = vunpack.c.h.b16 %v197
    %v809 = vunpack.c.l.b16 %v198
    %v810 = vunpack.c.h.b16 %v198
    %v811 = vunpack.c.l.b16 %v199
    %v812 = vunpack.c.h.b16 %v199
    %v813 = vunpack.c.l.b16 %v200
    %v814 = vunpack.c.h.b16 %v200
    %v815 = vunpack.c.l.b16 %v201
    %v816 = vunpack.c.h.b16 %v201
    %v817 = vunpack.c.l.b16 %v202
    %v818 = vunpack.c.h.b16 %v202
    %v819 = vunpack.c.l.b16 %v203
    %v820 = vunpack.c.h.b16 %v203
    %v821 = vunpack.c.l.b16 %v204
    %v822 = vunpack.c.h.b16 %v204
    %v823 = vunpack.c.l.b16 %v205
    %v824 = vunpack.c.h.b16 %v205
    %v825 = vunpack.c.l.b16 %v206
    %v826 = vunpack.c.h.b16 %v206
    %v827 = vunpack.c.l.b16 %v207
    %v828 = vunpack.c.h.b16 %v207
    %v829 = vunpack.c.l.b16 %v208
    %v830 = vunpack.c.h.b16 %v208
    %v831 = vunpack.c.l.b16 %v209
    %v832 = vunpack.c.h.b16 %v209
    %v833 = vunpack.c.l.b16 %v210
    %v834 = vunpack.c.h.b16 %v210
    %v835 = vunpack.c.l.b16 %v211
    %v836 = vunpack.c.h.b16 %v211
    %v837 = vunpack.c.l.b16 %v212
    %v838 = vunpack.c.h.b16 %v212
    %v839 = vunpack.c.l.b16 %v213
    %v840 = vunpack.c.h.b16 %v213
    %v841 = vunpack.c.l.b16 %v214
    %v842 = vunpack.c.h.b16 %v214
    %v843 = vunpack.c.l.b16 %v215
    %v844 = vunpack.c.h.b16 %v215
    %v845 = vunpack.c.l.b16 %v216
    %v846 = vunpack.c.h.b16 %v216
    %v847 = vunpack.c.l.b16 %v217
    %v848 = vunpack.c.h.b16 %v217
    %v849 = vunpack.c.l.b16 %v218
    %v850 = vunpack.c.h.b16 %v218
    %v851 = vunpack.c.l.b16 %v219
    %v852 = vunpack.c.h.b16 %v219
    %v853 = vunpack.c.l.b16 %v220
    %v854 = vunpack.c.h.b16 %v220
    %v855 = vunpack.c.l.b16 %v221
    %v856 = vunpack.c.h.b16 %v221
    %v857 = vunpack.c.l.b16 %v222
    %v858 = vunpack.c.h.b16 %v222
    %v859 = vunpack.c.l.b16 %v223
    %v860 = vunpack.c.h.b16 %v223
    %v861 = vunpack.c.l.b16 %v224
    %v862 = vunpack.c.h.b16 %v224
    %v863 = vunpack.c.l.b16 %v225
    %v864 = vunpack.c.h.b16 %v225
    %v865 = vunpack.c.l.b16 %v226
    %v866 = vunpack.c.h.b16 %v226
    %v867 = vunpack.c.l.b16 %v227
    %v868 = vunpack.c.h.b16 %v227
    %v869 = vunpack.c.l.b16 %v228
    %v870 = vunpack.c.h.b16 %v228
    %v871 = vunpack.c.l.b16 %v229
    %v872 = vunpack.c.h.b16 %v229
    %v873 = vunpack.c.l.b16 %v230
    %v874 = vunpack.c.h.b16 %v230
    %v875 = vunpack.c.l.b16 %v231
    %v876 = vunpack.c.h.b16 %v231
    %v877 = vunpack.c.l.b16 %v232
    %v878 = vunpack.c.h.b16 %v232
    %v879 = vunpack.c.l.b16 %v233
    %v880 = vunpack.c.h.b16 %v233
    %v881 = vunpack.c.l.b16 %v234
    %v882 = vunpack.c.h.b16 %v234
    %v883 = vunpack.c.l.b16 %v235
    %v884 = vunpack.c.h.b16 %v235
    %v885 = vunpack.c.l.b16 %v236
    %v886 = vunpack.c.h.b16 %v236
    %v887 = vunpack.c.l.b16 %v237
    %v888 = vunpack.c.h.b16 %v237
    %v889 = vunpack.c.l.b16 %v238
    %v890 = vunpack.c.h.b16 %v238
    %v891 = vunpack.c.l.b16 %v239
    %v892 = vunpack.c.h.b16 %v239
    %v893 = vunpack.c.l.b16 %v240
    %v894 = vunpack.c.h.b16 %v240
    %v895 = vunpack.c.l.b16 %v241
    %v896 = vunpack.c.h.b16 %v241
    %v897 = vunpack.c.l.b16 %v242
    %v898 = vunpack.c.h.b16 %v242
    %v899 = vunpack.c.l.b16 %v243
    %v900 = vunpack.c.h.b16 %v243
    %v901 = vunpack.c.l.b16 %v244
    %v902 = vunpack.c.h.b16 %v244
    %v903 = vunpack.c.l.b16 %v245
    %v904 = vunpack.c.h.b16 %v245
    %v905 = vunpack.c.l.b16 %v246
    %v906 = vunpack.c.h.b16 %v246
    %v907 = vunpack.c.l.b16 %v247
    %v908 = vunpack.c.h.b16 %v247
    %v909 = vunpack.c.l.b16 %v248
    %v910 = vunpack.c.h.b16 %v248
    %v911 = vunpack.c.l.b16 %v249
    %v912 = vunpack.c.h.b16 %v249
    %v913 = vunpack.c.l.b16 %v250
    %v914 = vunpack.c.h.b16 %v250
    %v915 = vunpack.c.l.b16 %v251
    %v916 = vunpack.c.h.b16 %v251
    %v917 = vunpack.c.l.b16 %v252
    %v918 = vunpack.c.h.b16 %v252
    %v919 = vunpack.c.l.b16 %v253
    %v920 = vunpack.c.h.b16 %v253
    %v921 = vunpack.c.l.b16 %v254
    %v922 = vunpack.c.h.b16 %v254
    %v923 = vunpack.c.l.b16 %v255
    %v924 = vunpack.c.h.b16 %v255
    %v925 = vunpack.c.l.b16 %v256
    %v926 = vunpack.c.h.b16 %v256
    %v927 = vunpack.c.l.b16 %v257
    %v928 = vunpack.c.h.b16 %v257
    %v929 = vunpack.c.l.b16 %v258
    %v930 = vunpack.c.h.b16 %v258
    %v931 = vunpack.c.l.b16 %v259
    %v932 = vunpack.c.h.b16 %v259
    %v933 = vunpack.c.l.b16 %v260
    %v934 = vunpack.c.h.b16 %v260
    %v935 = vunpack.c.l.b16 %v261
    %v936 = vunpack.c.h.b16 %v261
    %v937 = vunpack.c.l.b16 %v262
    %v938 = vunpack.c.h.b16 %v262
    %v939 = vunpack.c.l.b16 %v263
    %v940 = vunpack.c.h.b16 %v263
    %v941 = vunpack.c.l.b16 %v264
    %v942 = vunpack.c.h.b16 %v264
    %v943 = vunpack.c.l.b16 %v265
    %v944 = vunpack.c.h.b16 %v265
    %v945 = vunpack.c.l.b16 %v266
    %v946 = vunpack.c.h.b16 %v266
    %v947 = vunpack.c.l.b16 %v267
    %v948 = vunpack.c.h.b16 %v267
    %v949 = vunpack.c.l.b16 %v268
    %v950 = vunpack.c.h.b16 %v268
    %v951 = vunpack.c.l.b16 %v269
    %v952 = vunpack.c.h.b16 %v269
    %v953 = vunpack.c.l.b16 %v270
    %v954 = vunpack.c.h.b16 %v270
    %v955 = vunpack.c.l.b16 %v271
    %v956 = vunpack.c.h.b16 %v271
    %v957 = vunpack.c.l.b16 %v272
    %v958 = vunpack.c.h.b16 %v272
    %v959 = vunpack.c.l.b16 %v273
    %v960 = vunpack.c.h.b16 %v273
    %v961 = vunpack.c.l.b16 %v274
    %v962 = vunpack.c.h.b16 %v274
    %v963 = vunpack.c.l.b16 %v275
    %v964 = vunpack.c.h.b16 %v275
    %v965 = vunpack.c.l.b16 %v276
    %v966 = vunpack.c.h.b16 %v276
    %v967 = vunpack.c.l.b16 %v277
    %v968 = vunpack.c.h.b16 %v277
    %v969 = vunpack.c.l.b16 %v278
    %v970 = vunpack.c.h.b16 %v278
    %v971 = vunpack.c.l.b16 %v279
    %v972 = vunpack.c.h.b16 %v279
    %v973 = vunpack.c.l.b16 %v280
    %v974 = vunpack.c.h.b16 %v280
    %v975 = vunpack.c.l.b16 %v281
    %v976 = vunpack.c.h.b16 %v281
    %v977 = vunpack.c.l.b16 %v282
    %v978 = vunpack.c.h.b16 %v282
    %v979 = vunpack.c.l.b16 %v283
    %v980 = vunpack.c.h.b16 %v283
    %v981 = vunpack.c.l.b16 %v284
    %v982 = vunpack.c.h.b16 %v284
    %v983 = vunpack.c.l.b16 %v285
    %v984 = vunpack.c.h.b16 %v285
    %v985 = vunpack.c.l.b16 %v286
    %v986 = vunpack.c.h.b16 %v286
    %v987 = vunpack.c.l.b16 %v287
    %v988 = vunpack.c.h.b16 %v287
    %v989 = vunpack.c.l.b16 %v288
    %v990 = vunpack.c.h.b16 %v288
    %v991 = vunpack.c.l.b16 %v289
    %v992 = vunpack.c.h.b16 %v289
    %v993 = vunpack.c.l.b16 %v290
    %v994 = vunpack.c.h.b16 %v290
    %v995 = vunpack.c.l.b16 %v291
    %v996 = vunpack.c.h.b16 %v291
    %v997 = vunpack.c.l.b16 %v292
    %v998 = vunpack.c.h.b16 %v292
    %v999 = vunpack.c.l.b16 %v293
    %v1000 = vunpack.c.h.b16 %v293
    %v1001 = vunpack.c.l.b16 %v294
    %v1002 = vunpack.c.h.b16 %v294
    %v1003 = vunpack.c.l.b16 %v295
    %v1004 = vunpack.c.h.b16 %v295
    %v1005 = vunpack.c.l.b16 %v296
    %v1006 = vunpack.c.h.b16 %v296
    %v1007 = vunpack.c.l.b16 %v297
    %v1008 = vunpack.c.h.b16 %v297
    %v1009 = vunpack.c.l.b16 %v298
    %v1010 = vunpack.c.h.b16 %v298
    %v1011 = vunpack.c.l.b16 %v299
    %v1012 = vunpack.c.h.b16 %v299
    %v1013 = vunpack.c.l.b16 %v300
    %v1014 = vunpack.c.h.b16 %v300
    %v1015 = vunpack.c.l.b16 %v301
    %v1016 = vunpack.c.h.b16 %v301
    %v1017 = vunpack.c.l.b16 %v302
    %v1018 = vunpack.c.h.b16 %v302
    %v1019 = vunpack.c.l.b16 %v303
    %v1020 = vunpack.c.h.b16 %v303
    %v1021 = vunpack.c.l.b16 %v304
    %v1022 = vunpack.c.h.b16 %v304
    %v1023 = vunpack.c.l.b16 %v305
    %v1024 = vunpack.c.h.b16 %v305
    %v1025 = vunpack.c.l.b16 %v306
    %v1026 = vunpack.c.h.b16 %v306
    %v1027 = vunpack.c.l.b16 %v307
    %v1028 = vunpack.c.h.b16 %v307
    %v1029 = vunpack.c.l.b16 %v308
    %v1030 = vunpack.c.h.b16 %v308
    %v1031 = vunpack.c.l.b16 %v309
    %v1032 = vunpack.c.h.b16 %v309
    %v1033 = vunpack.c.l.b16 %v310
    %v1034 = vunpack.c.h.b16 %v310
    %v1035 = vunpack.c.l.b16 %v311
    %v1036 = vunpack.c.h.b16 %v311
    %v1037 = vunpack.c.l.b16 %v312
    %v1038 = vunpack.c.h.b16 %v312
    %v1039 = vunpack.c.l.b16 %v313
    %v1040 = vunpack.c.h.b16 %v313
    %v1041 = vunpack.c.l.b16 %v314
    %v1042 = vunpack.c.h.b16 %v314
    %v1043 = vunpack.c.l.b16 %v315
    %v1044 = vunpack.c.h.b16 %v315
    %v1045 = vunpack.c.l.b16 %v316
    %v1046 = vunpack.c.h.b16 %v316
    %v1047 = vunpack.c.l.b16 %v317
    %v1048 = vunpack.c.h.b16 %v317
    %v1049 = vunpack.c.l.b16 %v318
    %v1050 = vunpack.c.h.b16 %v318
    %v1051 = vunpack.c.l.b16 %v319
    %v1052 = vunpack.c.h.b16 %v319
    %v1053 = vunpack.c.l.b16 %v320
    %v1054 = vunpack.c.h.b16 %v320
    %v1055 = vunpack.c.l.b16 %v321
    %v1056 = vunpack.c.h.b16 %v321
    %v1057 = vunpack.c.l.b16 %v322
    %v1058 = vunpack.c.h.b16 %v322
    %v1059 = vunpack.c.l.b16 %v323
    %v1060 = vunpack.c.h.b16 %v323
    %v1061 = vunpack.c.l.b16 %v324
    %v1062 = vunpack.c.h.b16 %v324
    %v1063 = vunpack.c.l.b16 %v325
    %v1064 = vunpack.c.h.b16 %v325
    %v1065 = vunpack.c.l.b16 %v326
    %v1066 = vunpack.c.h.b16 %v326
    %v1067 = vunpack.c.l.b16 %v327
    %v1068 = vunpack.c.h.b16 %v327
    %v1069 = vunpack.c.l.b16 %v328
    %v1070 = vunpack.c.h.b16 %v328
    %v1071 = vunpack.c.l.b16 %v329
    %v1072 = vunpack.c.h.b16 %v329
    %v1073 = vunpack.c.l.b16 %v330
    %v1074 = vunpack.c.h.b16 %v330
    %v1075 = vunpack.c.l.b16 %v331
    %v1076 = vunpack.c.h.b16 %v331
    %v1077 = vunpack.c.l.b16 %v332
    %v1078 = vunpack.c.h.b16 %v332
    %v1079 = vunpack.c.l.b16 %v333
    %v1080 = vunpack.c.h.b16 %v333
    %v1081 = vunpack.c.l.b16 %v334
    %v1082 = vunpack.c.h.b16 %v334
    %v1083 = vunpack.c.l.b16 %v335
    %v1084 = vunpack.c.h.b16 %v335
    %v1085 = vunpack.c.l.b16 %v336
    %v1086 = vunpack.c.h.b16 %v336
    %v1087 = vunpack.c.l.b16 %v337
    %v1088 = vunpack.c.h.b16 %v337
    %v1089 = vunpack.c.l.b16 %v338
    %v1090 = vunpack.c.h.b16 %v338
    %v1091 = vunpack.c.l.b16 %v339
    %v1092 = vunpack.c.h.b16 %v339
    %v1093 = vunpack.c.l.b16 %v340
    %v1094 = vunpack.c.h.b16 %v340
    %v1095 = vunpack.c.l.b16 %v341
    %v1096 = vunpack.c.h.b16 %v341
    %v1097 = vunpack.c.l.b16 %v342
    %v1098 = vunpack.c.h.b16 %v342
    %v1099 = vunpack.c.l.b16 %v343
    %v1100 = vunpack.c.h.b16 %v343
    %v1101 = vunpack.c.l.b16 %v344
    %v1102 = vunpack.c.h.b16 %v344
    %v1103 = vunpack.c.l.b16 %v345
    %v1104 = vunpack.c.h.b16 %v345
    %v1105 = vunpack.c.l.b16 %v346
    %v1106 = vunpack.c.h.b16 %v346
    %v1107 = vunpack.c.l.b16 %v347
    %v1108 = vunpack.c.h.b16 %v347
    %v1109 = vunpack.c.l.b16 %v348
    %v1110 = vunpack.c.h.b16 %v348
    %v1111 = vunpack.c.l.b16 %v349
    %v1112 = vunpack.c.h.b16 %v349
    %v1113 = vunpack.c.l.b16 %v350
    %v1114 = vunpack.c.h.b16 %v350
    %v1115 = vunpack.c.l.b16 %v351
    %v1116 = vunpack.c.h.b16 %v351
    %v1117 = vunpack.c.l.b16 %v352
    %v1118 = vunpack.c.h.b16 %v352
    %v1119 = vunpack.c.l.b16 %v353
    %v1120 = vunpack.c.h.b16 %v353
    %v1121 = vunpack.c.l.b16 %v354
    %v1122 = vunpack.c.h.b16 %v354
    %v1123 = vunpack.c.l.b16 %v355
    %v1124 = vunpack.c.h.b16 %v355
    %v1125 = vunpack.c.l.b16 %v356
    %v1126 = vunpack.c.h.b16 %v356
    %v1127 = vunpack.c.l.b16 %v357
    %v1128 = vunpack.c.h.b16 %v357
    %v1129 = vunpack.c.l.b16 %v358
    %v1130 = vunpack.c.h.b16 %v358
    %v1131 = vunpack.c.l.b16 %v359
    %v1132 = vunpack.c.h.b16 %v359
    %v1133 = vunpack.c.l.b16 %v360
    %v1134 = vunpack.c.h.b16 %v360
    %v1135 = vunpack.c.l.b16 %v361
    %v1136 = vunpack.c.h.b16 %v361
    %v1137 = vunpack.c.l.b16 %v362
    %v1138 = vunpack.c.h.b16 %v362
    %v1139 = vunpack.c.l.b16 %v363
    %v1140 = vunpack.c.h.b16 %v363
    %v1141 = vunpack.c.l.b16 %v364
    %v1142 = vunpack.c.h.b16 %v364
    %v1143 = vunpack.c.l.b16 %v365
    %v1144 = vunpack.c.h.b16 %v365
    %v1145 = vunpack.c.l.b16 %v366
    %v1146 = vunpack.c.h.b16 %v366
    %v1147 = vunpack.c.l.b16 %v367
    %v1148 = vunpack.c.h.b16 %v367
    %v1149 = vunpack.c.l.b16 %v368
    %v1150 = vunpack.c.h.b16 %v368
    %v1151 = vunpack.c.l.b16 %v369
    %v1152 = vunpack.c.h.b16 %v369
    %v1153 = vunpack.c.l.b16 %v370
    %v1154 = vunpack.c.h.b16 %v370
    %v1155 = vunpack.c.l.b16 %v371
    %v1156 = vunpack.c.h.b16 %v371
    %v1157 = vunpack.c.l.b16 %v372
    %v1158 = vunpack.c.h.b16 %v372
    %v1159 = vunpack.c.l.b16 %v373
    %v1160 = vunpack.c.h.b16 %v373
    %v1161 = vunpack.c.l.b16 %v374
    %v1162 = vunpack.c.h.b16 %v374
    %v1163 = vunpack.c.l.b16 %v375
    %v1164 = vunpack.c.h.b16 %v375
    %v1165 = vunpack.c.l.b16 %v376
    %v1166 = vunpack.c.h.b16 %v376
    %v1167 = vpack.c.b16 %v659, %v655
    %v1168 = vpack.c.b16 %v660, %v656
    %v1169 = vpack.c.b16 %v661, %v657
    %v1170 = vpack.c.b16 %v662, %v658
    %v1171 = vpack.c.b16 %v667, %v663
    %v1172 = vpack.c.b16 %v668, %v664
    %v1173 = vpack.c.b16 %v669, %v665
    %v1174 = vpack.c.b16 %v670, %v666
    %v1175 = vpack.c.b16 %v675, %v671
    %v1176 = vpack.c.b16 %v676, %v672
    %v1177 = vpack.c.b16 %v677, %v673
    %v1178 = vpack.c.b16 %v678, %v674
    %v1179 = vpack.c.b16 %v683, %v679
    %v1180 = vpack.c.b16 %v684, %v680
    %v1181 = vpack.c.b16 %v685, %v681
    %v1182 = vpack.c.b16 %v686, %v682
    %v1183 = vpack.c.b16 %v691, %v687
    %v1184 = vpack.c.b16 %v692, %v688
    %v1185 = vpack.c.b16 %v693, %v689
    %v1186 = vpack.c.b16 %v694, %v690
    %v1187 = vpack.c.b16 %v699, %v695
    %v1188 = vpack.c.b16 %v700, %v696
    %v1189 = vpack.c.b16 %v701, %v697
    %v1190 = vpack.c.b16 %v702, %v698
    %v1191 = vpack.c.b16 %v707, %v703
    %v1192 = vpack.c.b16 %v708, %v704
    %v1193 = vpack.c.b16 %v709, %v705
    %v1194 = vpack.c.b16 %v710, %v706
    %v1195 = vpack.c.b16 %v715, %v711
    %v1196 = vpack.c.b16 %v716, %v712
    %v1197 = vpack.c.b16 %v717, %v713
    %v1198 = vpack.c.b16 %v718, %v714
    %v1199 = vpack.c.b16 %v723, %v719
    %v1200 = vpack.c.b16 %v724, %v720
    %v1201 = vpack.c.b16 %v725, %v721
    %v1202 = vpack.c.b16 %v726, %v722
    %v1203 = vpack.c.b16 %v731, %v727
    %v1204 = vpack.c.b16 %v732, %v728
    %v1205 = vpack.c.b16 %v733, %v729
    %v1206 = vpack.c.b16 %v734, %v730
    %v1207 = vpack.c.b16 %v739, %v735
    %v1208 = vpack.c.b16 %v740, %v736
    %v1209 = vpack.c.b16 %v741, %v737
    %v1210 = vpack.c.b16 %v742, %v738
    %v1211 = vpack.c.b16 %v747, %v743
    %v1212 = vpack.c.b16 %v748, %v744
    %v1213 = vpack.c.b16 %v749, %v745
    %v1214 = vpack.c.b16 %v750, %v746
    %v1215 = vpack.c.b16 %v755, %v751
    %v1216 = vpack.c.b16 %v756, %v752
    %v1217 = vpack.c.b16 %v757, %v753
    %v1218 = vpack.c.b16 %v758, %v754
    %v1219 = vpack.c.b16 %v763, %v759
    %v1220 = vpack.c.b16 %v764, %v760
    %v1221 = vpack.c.b16 %v765, %v761
    %v1222 = vpack.c.b16 %v766, %v762
    %v1223 = vpack.c.b16 %v771, %v767
    %v1224 = vpack.c.b16 %v772, %v768
    %v1225 = vpack.c.b16 %v773, %v769
    %v1226 = vpack.c.b16 %v774, %v770
    %v1227 = vpack.c.b16 %v779, %v775
    %v1228 = vpack.c.b16 %v780, %v776
    %v1229 = vpack.c.b16 %v781, %v777
    %v1230 = vpack.c.b16 %v782, %v778
    %v1231 = vpack.c.b16 %v787, %v783
    %v1232 = vpack.c.b16 %v788, %v784
    %v1233 = vpack.c.b16 %v789, %v785
    %v1234 = vpack.c.b16 %v790, %v786
    %v1235 = vpack.c.b16 %v795, %v791
    %v1236 = vpack.c.b16 %v796, %v792
    %v1237 = vpack.c.b16 %v797, %v793
    %v1238 = vpack.c.b16 %v798, %v794
    %v1239 = vpack.c.b16 %v803, %v799
    %v1240 = vpack.c.b16 %v804, %v800
    %v1241 = vpack.c.b16 %v805, %v801
    %v1242 = vpack.c.b16 %v806, %v802
    %v1243 = vpack.c.b16 %v811, %v807
    %v1244 = vpack.c.b16 %v812, %v808
    %v1245 = vpack.c.b16 %v813, %v809
    %v1246 = vpack.c.b16 %v814, %v810
    %v1247 = vpack.c.b16 %v819, %v815
    %v1248 = vpack.c.b16 %v820, %v816
    %v1249 = vpack.c.b16 %v821, %v817
    %v1250 = vpack.c.b16 %v822, %v818
    %v1251 = vpack.c.b16 %v827, %v823
    %v1252 = vpack.c.b16 %v828, %v824
    %v1253 = vpack.c.b16 %v829, %v825
    %v1254 = vpack.c.b16 %v830, %v826
    %v1255 = vpack.c.b16 %v835, %v831
    %v1256 = vpack.c.b16 %v836, %v832
    %v1257 = vpack.c.b16 %v837, %v833
    %v1258 = vpack.c.b16 %v838, %v834
    %v1259 = vpack.c.b16 %v843, %v839
    %v1260 = vpack.c.b16 %v844, %v840
    %v1261 = vpack.c.b16 %v845, %v841
    %v1262 = vpack.c.b16 %v846, %v842
    %v1263 = vpack.c.b16 %v851, %v847
    %v1264 = vpack.c.b16 %v852, %v848
    %v1265 = vpack.c.b16 %v853, %v849
    %v1266 = vpack.c.b16 %v854, %v850
    %v1267 = vpack.c.b16 %v859, %v855
    %v1268 = vpack.c.b16 %v860, %v856
    %v1269 = vpack.c.b16 %v861, %v857
    %v1270 = vpack.c.b16 %v862, %v858
    %v1271 = vpack.c.b16 %v867, %v863
    %v1272 = vpack.c.b16 %v868, %v864
    %v1273 = vpack.c.b16 %v869, %v865
    %v1274 = vpack.c.b16 %v870, %v866
    %v1275 = vpack.c.b16 %v875, %v871
    %v1276 = vpack.c.b16 %v876, %v872
    %v1277 = vpack.c.b16 %v877, %v873
    %v1278 = vpack.c.b16 %v878, %v874
    %v1279 = vpack.c.b16 %v883, %v879
    %v1280 = vpack.c.b16 %v884, %v880
    %v1281 = vpack.c.b16 %v885, %v881
    %v1282 = vpack.c.b16 %v886, %v882
    %v1283 = vpack.c.b16 %v891, %v887
    %v1284 = vpack.c.b16 %v892, %v888
    %v1285 = vpack.c.b16 %v893, %v889
    %v1286 = vpack.c.b16 %v894, %v890
    %v1287 = vpack.c.b16 %v899, %v895
    %v1288 = vpack.c.b16 %v900, %v896
    %v1289 = vpack.c.b16 %v901, %v897
    %v1290 = vpack.c.b16 %v902, %v898
    %v1291 = vpack.c.b16 %v907, %v903
    %v1292 = vpack.c.b16 %v908, %v904
    %v1293 = vpack.c.b16 %v909, %v905
    %v1294 = vpack.c.b16 %v910, %v906
    %v1295 = vpack.c.b16 %v915, %v911
    %v1296 = vpack.c.b16 %v916, %v912
    %v1297 = vpack.c.b16 %v917, %v913
    %v1298 = vpack.c.b16 %v918, %v914
    %v1299 = vpack.c.b16 %v923, %v919
    %v1300 = vpack.c.b16 %v924, %v920
    %v1301 = vpack.c.b16 %v925, %v921
    %v1302 = vpack.c.b16 %v926, %v922
    %v1303 = vpack.c.b16 %v931, %v927
    %v1304 = vpack.c.b16 %v932, %v928
    %v1305 = vpack.c.b16 %v933, %v929
    %v1306 = vpack.c.b16 %v934, %v930
    %v1307 = vpack.c.b16 %v939, %v935
    %v1308 = vpack.c.b16 %v940, %v936
    %v1309 = vpack.c.b16 %v941, %v937
    %v1310 = vpack.c.b16 %v942, %v938
    %v1311 = vpack.c.b16 %v947, %v943
    %v1312 = vpack.c.b16 %v948, %v944
    %v1313 = vpack.c.b16 %v949, %v945
    %v1314 = vpack.c.b16 %v950, %v946
    %v1315 = vpack.c.b16 %v955, %v951
    %v1316 = vpack.c.b16 %v956, %v952
    %v1317 = vpack.c.b16 %v957, %v953
    %v1318 = vpack.c.b16 %v958, %v954
    %v1319 = vpack.c.b16 %v963, %v959
    %v1320 = vpack.c.b16 %v964, %v960
    %v1321 = vpack.c.b16 %v965, %v961
    %v1322 = vpack.c.b16 %v966, %v962
    %v1323 = vpack.c.b16 %v971, %v967
    %v1324 = vpack.c.b16 %v972, %v968
    %v1325 = vpack.c.b16 %v973, %v969
    %v1326 = vpack.c.b16 %v974, %v970
    %v1327 = vpack.c.b16 %v979, %v975
    %v1328 = vpack.c.b16 %v980, %v976
    %v1329 = vpack.c.b16 %v981, %v977
    %v1330 = vpack.c.b16 %v982, %v978
    %v1331 = vpack.c.b16 %v987, %v983
    %v1332 = vpack.c.b16 %v988, %v984
    %v1333 = vpack.c.b16 %v989, %v985
    %v1334 = vpack.c.b16 %v990, %v986
    %v1335 = vpack.c.b16 %v995, %v991
    %v1336 = vpack.c.b16 %v996, %v992
    %v1337 = vpack.c.b16 %v997, %v993
    %v1338 = vpack.c.b16 %v998, %v994
    %v1339 = vpack.c.b16 %v1003, %v999
    %v1340 = vpack.c.b16 %v1004, %v1000
    %v1341 = vpack.c.b16 %v1005, %v1001
    %v1342 = vpack.c.b16 %v1006, %v1002
    %v1343 = vpack.c.b16 %v1011, %v1007
    %v1344 = vpack.c.b16 %v1012, %v1008
    %v1345 = vpack.c.b16 %v1013, %v1009
    %v1346 = vpack.c.b16 %v1014, %v1010
    %v1347 = vpack.c.b16 %v1019, %v1015
    %v1348 = vpack.c.b16 %v1020, %v1016
    %v1349 = vpack.c.b16 %v1021, %v1017
    %v1350 = vpack.c.b16 %v1022, %v1018
    %v1351 = vpack.c.b16 %v1027, %v1023
    %v1352 = vpack.c.b16 %v1028, %v1024
    %v1353 = vpack.c.b16 %v1029, %v1025
    %v1354 = vpack.c.b16 %v1030, %v1026
    %v1355 = vpack.c.b16 %v1035, %v1031
    %v1356 = vpack.c.b16 %v1036, %v1032
    %v1357 = vpack.c.b16 %v1037, %v1033
    %v1358 = vpack.c.b16 %v1038, %v1034
    %v1359 = vpack.c.b16 %v1043, %v1039
    %v1360 = vpack.c.b16 %v1044, %v1040
    %v1361 = vpack.c.b16 %v1045, %v1041
    %v1362 = vpack.c.b16 %v1046, %v1042
    %v1363 = vpack.c.b16 %v1051, %v1047
    %v1364 = vpack.c.b16 %v1052, %v1048
    %v1365 = vpack.c.b16 %v1053, %v1049
    %v1366 = vpack.c.b16 %v1054, %v1050
    %v1367 = vpack.c.b16 %v1059, %v1055
    %v1368 = vpack.c.b16 %v1060, %v1056
    %v1369 = vpack.c.b16 %v1061, %v1057
    %v1370 = vpack.c.b16 %v1062, %v1058
    %v1371 = vpack.c.b16 %v1067, %v1063
    %v1372 = vpack.c.b16 %v1068, %v1064
    %v1373 = vpack.c.b16 %v1069, %v1065
    %v1374 = vpack.c.b16 %v1070, %v1066
    %v1375 = vpack.c.b16 %v1075, %v1071
    %v1376 = vpack.c.b16 %v1076, %v1072
    %v1377 = vpack.c.b16 %v1077, %v1073
    %v1378 = vpack.c.b16 %v1078, %v1074
    %v1379 = vpack.c.b16 %v1083, %v1079
    %v1380 = vpack.c.b16 %v1084, %v1080
    %v1381 = vpack.c.b16 %v1085, %v1081
    %v1382 = vpack.c.b16 %v1086, %v1082
    %v1383 = vpack.c.b16 %v1091, %v1087
    %v1384 = vpack.c.b16 %v1092, %v1088
    %v1385 = vpack.c.b16 %v1093, %v1089
    %v1386 = vpack.c.b16 %v1094, %v1090
    %v1387 = vpack.c.b16 %v1099, %v1095
    %v1388 = vpack.c.b16 %v1100, %v1096
    %v1389 = vpack.c.b16 %v1101, %v1097
    %v1390 = vpack.c.b16 %v1102, %v1098
    %v1391 = vpack.c.b16 %v1107, %v1103
    %v1392 = vpack.c.b16 %v1108, %v1104
    %v1393 = vpack.c.b16 %v1109, %v1105
    %v1394 = vpack.c.b16 %v1110, %v1106
    %v1395 = vpack.c.b16 %v1115, %v1111
    %v1396 = vpack.c.b16 %v1116, %v1112
    %v1397 = vpack.c.b16 %v1117, %v1113
    %v1398 = vpack.c.b16 %v1118, %v1114
    %v1399 = vpack.c.b16 %v1123, %v1119
    %v1400 = vpack.c.b16 %v1124, %v1120
    %v1401 = vpack.c.b16 %v1125, %v1121
    %v1402 = vpack.c.b16 %v1126, %v1122
    %v1403 = vpack.c.b16 %v1131, %v1127
    %v1404 = vpack.c.b16 %v1132, %v1128
    %v1405 = vpack.c.b16 %v1133, %v1129
    %v1406 = vpack.c.b16 %v1134, %v1130
    %v1407 = vpack.c.b16 %v1139, %v1135
    %v1408 = vpack.c.b16 %v1140, %v1136
    %v1409 = vpack.c.b16 %v1141, %v1137
    %v1410 = vpack.c.b16 %v1142, %v1138
    %v1411 = vpack.c.b16 %v1147, %v1143
    %v1412 = vpack.c.b16 %v1148, %v1144
    %v1413 = vpack.c.b16 %v1149, %v1145
    %v1414 = vpack.c.b16 %v1150, %v1146
    %v1415 = vpack.c.b16 %v1155, %v1151
    %v1416 = vpack.c.b16 %v1156, %v1152
    %v1417 = vpack.c.b16 %v1157, %v1153
    %v1418 = vpack.c.b16 %v1158, %v1154
    %v1419 = vpack.c.b16 %v1163, %v1159
    %v1420 = vpack.c.b16 %v1164, %v1160
    %v1421 = vpack.c.b16 %v1165, %v1161
    %v1422 = vpack.c.b16 %v1166, %v1162
    %1679 = vmatprep.subr.bf16.mxu0 %v1168
    %1680 = vmatpush1.bf16.msra.mxu0 %v1167
    %1681 = vmatprep.subr.bf16.mxu0 %v1172
    %1682 = vmatpush1.bf16.msra.mxu0 %v1171
    %1683 = vmatprep.subr.bf16.mxu0 %v1176
    %1684 = vmatpush1.bf16.msra.mxu0 %v1175
    %1685 = vmatprep.subr.bf16.mxu0 %v1180
    %1686 = vmatpush1.bf16.msra.mxu0 %v1179
    %1687 = vmatprep.subr.bf16.mxu0 %v1184
    %1688 = vmatpush1.bf16.msra.mxu0 %v1183
    %1689 = vmatprep.subr.bf16.mxu0 %v1188
    %1690 = vmatpush1.bf16.msra.mxu0 %v1187
    %1691 = vmatprep.subr.bf16.mxu0 %v1192
    %1692 = vmatpush1.bf16.msra.mxu0 %v1191
    %1693 = vmatprep.subr.bf16.mxu0 %v1196
    %1694 = vmatpush1.bf16.msra.mxu0 %v1195
    %1695 = vmatprep.subr.bf16.mxu0 %v1200
    %1696 = vmatpush1.bf16.msra.mxu0 %v1199
    %1697 = vmatprep.subr.bf16.mxu0 %v1204
    %1698 = vmatpush1.bf16.msra.mxu0 %v1203
    %1699 = vmatprep.subr.bf16.mxu0 %v1208
    %1700 = vmatpush1.bf16.msra.mxu0 %v1207
    %1701 = vmatprep.subr.bf16.mxu0 %v1212
    %1702 = vmatpush1.bf16.msra.mxu0 %v1211
    %1703 = vmatprep.subr.bf16.mxu0 %v1216
    %1704 = vmatpush1.bf16.msra.mxu0 %v1215
    %1705 = vmatprep.subr.bf16.mxu0 %v1220
    %1706 = vmatpush1.bf16.msra.mxu0 %v1219
    %1707 = vmatprep.subr.bf16.mxu0 %v1224
    %1708 = vmatpush1.bf16.msra.mxu0 %v1223
    %1709 = vmatprep.subr.bf16.mxu0 %v1228
    %1710 = vmatpush1.bf16.msra.mxu0 %v1227
    %1711 = vmatprep.mubr.bf16.mxu0 %v114
    %1712 = vmatmul.mubr.bf16.gmra.mrb[0].mxu0 %v113
    %v1713 = vpop.f32.mrb[0].mxu0
    %v1714 = vadd.f32 %v382, %v1713
    %v1715 = vpop.f32.mrb[0].mxu0
    %v1716 = vadd.f32 %v386, %v1715
    %v1717 = vpop.f32.mrb[0].mxu0
    %v1718 = vpop.f32.mrb[0].mxu0
    %1719 = vdwg.mxu0
    %1720 = vmatprep.subr.bf16.mxu0 %v1232
    %1721 = vmatpush1.bf16.msra.mxu0 %v1231
    %1722 = vmatprep.subr.bf16.mxu0 %v1236
    %1723 = vmatpush1.bf16.msra.mxu0 %v1235
    %1724 = vmatprep.subr.bf16.mxu0 %v1240
    %1725 = vmatpush1.bf16.msra.mxu0 %v1239
    %1726 = vmatprep.subr.bf16.mxu0 %v1244
    %1727 = vmatpush1.bf16.msra.mxu0 %v1243
    %1728 = vmatprep.subr.bf16.mxu0 %v1248
    %1729 = vmatpush1.bf16.msra.mxu0 %v1247
    %1730 = vmatprep.subr.bf16.mxu0 %v1252
    %1731 = vmatpush1.bf16.msra.mxu0 %v1251
    %1732 = vmatprep.subr.bf16.mxu0 %v1256
    %1733 = vmatpush1.bf16.msra.mxu0 %v1255
    %1734 = vmatprep.subr.bf16.mxu0 %v1260
    %1735 = vmatpush1.bf16.msra.mxu0 %v1259
    %1736 = vmatprep.subr.bf16.mxu0 %v1264
    %1737 = vmatpush1.bf16.msra.mxu0 %v1263
    %1738 = vmatprep.subr.bf16.mxu0 %v1268
    %1739 = vmatpush1.bf16.msra.mxu0 %v1267
    %1740 = vmatprep.subr.bf16.mxu0 %v1272
    %1741 = vmatpush1.bf16.msra.mxu0 %v1271
    %1742 = vmatprep.subr.bf16.mxu0 %v1276
    %1743 = vmatpush1.bf16.msra.mxu0 %v1275
    %1744 = vmatprep.subr.bf16.mxu0 %v1280
    %1745 = vmatpush1.bf16.msra.mxu0 %v1279
    %1746 = vmatprep.subr.bf16.mxu0 %v1284
    %1747 = vmatpush1.bf16.msra.mxu0 %v1283
    %1748 = vmatprep.subr.bf16.mxu0 %v1288
    %1749 = vmatpush1.bf16.msra.mxu0 %v1287
    %1750 = vmatprep.subr.bf16.mxu0 %v1292
    %1751 = vmatpush1.bf16.msra.mxu0 %v1291
    %1752 = vmatprep.mubr.bf16.mxu0 %v116
    %1753 = vmatmul.mubr.bf16.gmra.mrb[0].mxu0 %v115
    %v1754 = vpop.f32.mrb[0].mxu0
    %v1755 = vadd.f32 %v1714, %v1754
    %v1756 = vpop.f32.mrb[0].mxu0
    %v1757 = vadd.f32 %v1716, %v1756
    %v1758 = vpop.f32.mrb[0].mxu0
    %v1759 = vpop.f32.mrb[0].mxu0
    %1760 = vdwg.mxu0
    %1761 = vmatprep.subr.bf16.mxu0 %v1296
    %1762 = vmatpush1.bf16.msra.mxu0 %v1295
    %1763 = vmatprep.subr.bf16.mxu0 %v1300
    %1764 = vmatpush1.bf16.msra.mxu0 %v1299
    %1765 = vmatprep.subr.bf16.mxu0 %v1304
    %1766 = vmatpush1.bf16.msra.mxu0 %v1303
    %1767 = vmatprep.subr.bf16.mxu0 %v1308
    %1768 = vmatpush1.bf16.msra.mxu0 %v1307
    %1769 = vmatprep.subr.bf16.mxu0 %v1312
    %1770 = vmatpush1.bf16.msra.mxu0 %v1311
    %1771 = vmatprep.subr.bf16.mxu0 %v1316
    %1772 = vmatpush1.bf16.msra.mxu0 %v1315
    %1773 = vmatprep.subr.bf16.mxu0 %v1320
    %1774 = vmatpush1.bf16.msra.mxu0 %v1319
    %1775 = vmatprep.subr.bf16.mxu0 %v1324
    %1776 = vmatpush1.bf16.msra.mxu0 %v1323
    %1777 = vmatprep.subr.bf16.mxu0 %v1328
    %1778 = vmatpush1.bf16.msra.mxu0 %v1327
    %1779 = vmatprep.subr.bf16.mxu0 %v1332
    %1780 = vmatpush1.bf16.msra.mxu0 %v1331
    %1781 = vmatprep.subr.bf16.mxu0 %v1336
    %1782 = vmatpush1.bf16.msra.mxu0 %v1335
    %1783 = vmatprep.subr.bf16.mxu0 %v1340
    %1784 = vmatpush1.bf16.msra.mxu0 %v1339
    %1785 = vmatprep.subr.bf16.mxu0 %v1344
    %1786 = vmatpush1.bf16.msra.mxu0 %v1343
    %1787 = vmatprep.subr.bf16.mxu0 %v1348
    %1788 = vmatpush1.bf16.msra.mxu0 %v1347
    %1789 = vmatprep.subr.bf16.mxu0 %v1352
    %1790 = vmatpush1.bf16.msra.mxu0 %v1351
    %1791 = vmatprep.subr.bf16.mxu0 %v1356
    %1792 = vmatpush1.bf16.msra.mxu0 %v1355
    %1793 = vmatprep.mubr.bf16.mxu0 %v118
    %1794 = vmatmul.mubr.bf16.gmra.mrb[0].mxu0 %v117
    %v1795 = vpop.f32.mrb[0].mxu0
    %v1796 = vadd.f32 %v1755, %v1795
    %v1797 = vpop.f32.mrb[0].mxu0
    %v1798 = vadd.f32 %v1757, %v1797
    %v1799 = vpop.f32.mrb[0].mxu0
    %v1800 = vpop.f32.mrb[0].mxu0
    %1801 = vdwg.mxu0
    %1802 = vmatprep.subr.bf16.mxu0 %v1360
    %1803 = vmatpush1.bf16.msra.mxu0 %v1359
    %1804 = vmatprep.subr.bf16.mxu0 %v1364
    %1805 = vmatpush1.bf16.msra.mxu0 %v1363
    %1806 = vmatprep.subr.bf16.mxu0 %v1368
    %1807 = vmatpush1.bf16.msra.mxu0 %v1367
    %1808 = vmatprep.subr.bf16.mxu0 %v1372
    %1809 = vmatpush1.bf16.msra.mxu0 %v1371
    %1810 = vmatprep.subr.bf16.mxu0 %v1376
    %1811 = vmatpush1.bf16.msra.mxu0 %v1375
    %1812 = vmatprep.subr.bf16.mxu0 %v1380
    %1813 = vmatpush1.bf16.msra.mxu0 %v1379
    %1814 = vmatprep.subr.bf16.mxu0 %v1384
    %1815 = vmatpush1.bf16.msra.mxu0 %v1383
    %1816 = vmatprep.subr.bf16.mxu0 %v1388
    %1817 = vmatpush1.bf16.msra.mxu0 %v1387
    %1818 = vmatprep.subr.bf16.mxu0 %v1392
    %1819 = vmatpush1.bf16.msra.mxu0 %v1391
    %1820 = vmatprep.subr.bf16.mxu0 %v1396
    %1821 = vmatpush1.bf16.msra.mxu0 %v1395
    %1822 = vmatprep.subr.bf16.mxu0 %v1400
    %1823 = vmatpush1.bf16.msra.mxu0 %v1399
    %1824 = vmatprep.subr.bf16.mxu0 %v1404
    %1825 = vmatpush1.bf16.msra.mxu0 %v1403
    %1826 = vmatprep.subr.bf16.mxu0 %v1408
    %1827 = vmatpush1.bf16.msra.mxu0 %v1407
    %1828 = vmatprep.subr.bf16.mxu0 %v1412
    %1829 = vmatpush1.bf16.msra.mxu0 %v1411
    %1830 = vmatprep.subr.bf16.mxu0 %v1416
    %1831 = vmatpush1.bf16.msra.mxu0 %v1415
    %1832 = vmatprep.subr.bf16.mxu0 %v1420
    %1833 = vmatpush1.bf16.msra.mxu0 %v1419
    %1834 = vmatprep.mubr.bf16.mxu0 %v120
    %1835 = vmatmul.mubr.bf16.gmra.mrb[0].mxu0 %v119
    %v1836 = vpop.f32.mrb[0].mxu0
    %v1837 = vadd.f32 %v1796, %v1836
    %v1838 = vpop.f32.mrb[0].mxu0
    %v1839 = vadd.f32 %v1798, %v1838
    %v1840 = vpop.f32.mrb[0].mxu0
    %v1841 = vpop.f32.mrb[0].mxu0
    %1842 = vdwg.mxu0
    %1843 = vmatprep.subr.bf16.mxu0 %v1170
    %1844 = vmatpush1.bf16.msra.mxu0 %v1169
    %1845 = vmatprep.subr.bf16.mxu0 %v1174
    %1846 = vmatpush1.bf16.msra.mxu0 %v1173
    %1847 = vmatprep.subr.bf16.mxu0 %v1178
    %1848 = vmatpush1.bf16.msra.mxu0 %v1177
    %1849 = vmatprep.subr.bf16.mxu0 %v1182
    %1850 = vmatpush1.bf16.msra.mxu0 %v1181
    %1851 = vmatprep.subr.bf16.mxu0 %v1186
    %1852 = vmatpush1.bf16.msra.mxu0 %v1185
    %1853 = vmatprep.subr.bf16.mxu0 %v1190
    %1854 = vmatpush1.bf16.msra.mxu0 %v1189
    %1855 = vmatprep.subr.bf16.mxu0 %v1194
    %1856 = vmatpush1.bf16.msra.mxu0 %v1193
    %1857 = vmatprep.subr.bf16.mxu0 %v1198
    %1858 = vmatpush1.bf16.msra.mxu0 %v1197
    %1859 = vmatprep.subr.bf16.mxu0 %v1202
    %1860 = vmatpush1.bf16.msra.mxu0 %v1201
    %1861 = vmatprep.subr.bf16.mxu0 %v1206
    %1862 = vmatpush1.bf16.msra.mxu0 %v1205
    %1863 = vmatprep.subr.bf16.mxu0 %v1210
    %1864 = vmatpush1.bf16.msra.mxu0 %v1209
    %1865 = vmatprep.subr.bf16.mxu0 %v1214
    %1866 = vmatpush1.bf16.msra.mxu0 %v1213
    %1867 = vmatprep.subr.bf16.mxu0 %v1218
    %1868 = vmatpush1.bf16.msra.mxu0 %v1217
    %1869 = vmatprep.subr.bf16.mxu0 %v1222
    %1870 = vmatpush1.bf16.msra.mxu0 %v1221
    %1871 = vmatprep.subr.bf16.mxu0 %v1226
    %1872 = vmatpush1.bf16.msra.mxu0 %v1225
    %1873 = vmatprep.subr.bf16.mxu0 %v1230
    %1874 = vmatpush1.bf16.msra.mxu0 %v1229
    %1875 = vmatprep.mubr.bf16.mxu0 %v114
    %1876 = vmatmul.mubr.bf16.gmra.mrb[0].mxu0 %v113
    %v1877 = vpop.f32.mrb[0].mxu0
    %v1878 = vadd.f32 %v390, %v1877
    %v1879 = vpop.f32.mrb[0].mxu0
    %v1880 = vadd.f32 %v394, %v1879
    %v1881 = vpop.f32.mrb[0].mxu0
    %v1882 = vpop.f32.mrb[0].mxu0
    %1883 = vdwg.mxu0
    %1884 = vmatprep.subr.bf16.mxu0 %v1234
    %1885 = vmatpush1.bf16.msra.mxu0 %v1233
    %1886 = vmatprep.subr.bf16.mxu0 %v1238
    %1887 = vmatpush1.bf16.msra.mxu0 %v1237
    %1888 = vmatprep.subr.bf16.mxu0 %v1242
    %1889 = vmatpush1.bf16.msra.mxu0 %v1241
    %1890 = vmatprep.subr.bf16.mxu0 %v1246
    %1891 = vmatpush1.bf16.msra.mxu0 %v1245
    %1892 = vmatprep.subr.bf16.mxu0 %v1250
    %1893 = vmatpush1.bf16.msra.mxu0 %v1249
    %1894 = vmatprep.subr.bf16.mxu0 %v1254
    %1895 = vmatpush1.bf16.msra.mxu0 %v1253
    %1896 = vmatprep.subr.bf16.mxu0 %v1258
    %1897 = vmatpush1.bf16.msra.mxu0 %v1257
    %1898 = vmatprep.subr.bf16.mxu0 %v1262
    %1899 = vmatpush1.bf16.msra.mxu0 %v1261
    %1900 = vmatprep.subr.bf16.mxu0 %v1266
    %1901 = vmatpush1.bf16.msra.mxu0 %v1265
    %1902 = vmatprep.subr.bf16.mxu0 %v1270
    %1903 = vmatpush1.bf16.msra.mxu0 %v1269
    %1904 = vmatprep.subr.bf16.mxu0 %v1274
    %1905 = vmatpush1.bf16.msra.mxu0 %v1273
    %1906 = vmatprep.subr.bf16.mxu0 %v1278
    %1907 = vmatpush1.bf16.msra.mxu0 %v1277
    %1908 = vmatprep.subr.bf16.mxu0 %v1282
    %1909 = vmatpush1.bf16.msra.mxu0 %v1281
    %1910 = vmatprep.subr.bf16.mxu0 %v1286
    %1911 = vmatpush1.bf16.msra.mxu0 %v1285
    %1912 = vmatprep.subr.bf16.mxu0 %v1290
    %1913 = vmatpush1.bf16.msra.mxu0 %v1289
    %1914 = vmatprep.subr.bf16.mxu0 %v1294
    %1915 = vmatpush1.bf16.msra.mxu0 %v1293
    %1916 = vmatprep.mubr.bf16.mxu0 %v116
    %1917 = vmatmul.mubr.bf16.gmra.mrb[0].mxu0 %v115
    %v1918 = vpop.f32.mrb[0].mxu0
    %v1919 = vadd.f32 %v1878, %v1918
    %v1920 = vpop.f32.mrb[0].mxu0
    %v1921 = vadd.f32 %v1880, %v1920
    %v1922 = vpop.f32.mrb[0].mxu0
    %v1923 = vpop.f32.mrb[0].mxu0
    %1924 = vdwg.mxu0
    %1925 = vmatprep.subr.bf16.mxu0 %v1298
    %1926 = vmatpush1.bf16.msra.mxu0 %v1297
    %1927 = vmatprep.subr.bf16.mxu0 %v1302
    %1928 = vmatpush1.bf16.msra.mxu0 %v1301
    %1929 = vmatprep.subr.bf16.mxu0 %v1306
    %1930 = vmatpush1.bf16.msra.mxu0 %v1305
    %1931 = vmatprep.subr.bf16.mxu0 %v1310
    %1932 = vmatpush1.bf16.msra.mxu0 %v1309
    %1933 = vmatprep.subr.bf16.mxu0 %v1314
    %1934 = vmatpush1.bf16.msra.mxu0 %v1313
    %1935 = vmatprep.subr.bf16.mxu0 %v1318
    %1936 = vmatpush1.bf16.msra.mxu0 %v1317
    %1937 = vmatprep.subr.bf16.mxu0 %v1322
    %1938 = vmatpush1.bf16.msra.mxu0 %v1321
    %1939 = vmatprep.subr.bf16.mxu0 %v1326
    %1940 = vmatpush1.bf16.msra.mxu0 %v1325
    %1941 = vmatprep.subr.bf16.mxu0 %v1330
    %1942 = vmatpush1.bf16.msra.mxu0 %v1329
    %1943 = vmatprep.subr.bf16.mxu0 %v1334
    %1944 = vmatpush1.bf16.msra.mxu0 %v1333
    %1945 = vmatprep.subr.bf16.mxu0 %v1338
    %1946 = vmatpush1.bf16.msra.mxu0 %v1337
    %1947 = vmatprep.subr.bf16.mxu0 %v1342
    %1948 = vmatpush1.bf16.msra.mxu0 %v1341
    %1949 = vmatprep.subr.bf16.mxu0 %v1346
    %1950 = vmatpush1.bf16.msra.mxu0 %v1345
    %1951 = vmatprep.subr.bf16.mxu0 %v1350
    %1952 = vmatpush1.bf16.msra.mxu0 %v1349
    %1953 = vmatprep.subr.bf16.mxu0 %v1354
    %1954 = vmatpush1.bf16.msra.mxu0 %v1353
    %1955 = vmatprep.subr.bf16.mxu0 %v1358
    %1956 = vmatpush1.bf16.msra.mxu0 %v1357
    %1957 = vmatprep.mubr.bf16.mxu0 %v118
    %1958 = vmatmul.mubr.bf16.gmra.mrb[0].mxu0 %v117
    %v1959 = vpop.f32.mrb[0].mxu0
    %v1960 = vadd.f32 %v1919, %v1959
    %v1961 = vpop.f32.mrb[0].mxu0
    %v1962 = vadd.f32 %v1921, %v1961
    %v1963 = vpop.f32.mrb[0].mxu0
    %v1964 = vpop.f32.mrb[0].mxu0
    %1965 = vdwg.mxu0
    %1966 = vmatprep.subr.bf16.mxu0 %v1362
    %1967 = vmatpush1.bf16.msra.mxu0 %v1361
    %1968 = vmatprep.subr.bf16.mxu0 %v1366
    %1969 = vmatpush1.bf16.msra.mxu0 %v1365
    %1970 = vmatprep.subr.bf16.mxu0 %v1370
    %1971 = vmatpush1.bf16.msra.mxu0 %v1369
    %1972 = vmatprep.subr.bf16.mxu0 %v1374
    %1973 = vmatpush1.bf16.msra.mxu0 %v1373
    %1974 = vmatprep.subr.bf16.mxu0 %v1378
    %1975 = vmatpush1.bf16.msra.mxu0 %v1377
    %1976 = vmatprep.subr.bf16.mxu0 %v1382
    %1977 = vmatpush1.bf16.msra.mxu0 %v1381
    %1978 = vmatprep.subr.bf16.mxu0 %v1386
    %1979 = vmatpush1.bf16.msra.mxu0 %v1385
    %1980 = vmatprep.subr.bf16.mxu0 %v1390
    %1981 = vmatpush1.bf16.msra.mxu0 %v1389
    %1982 = vmatprep.subr.bf16.mxu0 %v1394
    %1983 = vmatpush1.bf16.msra.mxu0 %v1393
    %1984 = vmatprep.subr.bf16.mxu0 %v1398
    %1985 = vmatpush1.bf16.msra.mxu0 %v1397
    %1986 = vmatprep.subr.bf16.mxu0 %v1402
    %1987 = vmatpush1.bf16.msra.mxu0 %v1401
    %1988 = vmatprep.subr.bf16.mxu0 %v1406
    %1989 = vmatpush1.bf16.msra.mxu0 %v1405
    %1990 = vmatprep.subr.bf16.mxu0 %v1410
    %1991 = vmatpush1.bf16.msra.mxu0 %v1409
    %1992 = vmatprep.subr.bf16.mxu0 %v1414
    %1993 = vmatpush1.bf16.msra.mxu0 %v1413
    %1994 = vmatprep.subr.bf16.mxu0 %v1418
    %1995 = vmatpush1.bf16.msra.mxu0 %v1417
    %1996 = vmatprep.subr.bf16.mxu0 %v1422
    %1997 = vmatpush1.bf16.msra.mxu0 %v1421
    %1998 = vmatprep.mubr.bf16.mxu0 %v120
    %1999 = vmatmul.mubr.bf16.gmra.mrb[0].mxu0 %v119
    %v2000 = vpop.f32.mrb[0].mxu0
    %v2001 = vadd.f32 %v1960, %v2000
    %v2002 = vpop.f32.mrb[0].mxu0
    %v2003 = vadd.f32 %v1962, %v2002
    %v2004 = vpop.f32.mrb[0].mxu0
    %v2005 = vpop.f32.mrb[0].mxu0
    %2006 = vdwg.mxu0
    %v2007 = vmax.f32 %v1837, 0.0
    %v2008 = vmax.f32 %v1839, 0.0
    %v2009 = vmax.f32 %v2001, 0.0
    %v2010 = vmax.f32 %v2003, 0.0
    %v2011 = vpack.c.bf16 %v2007, %v2007
    %v2012 = vpack.c.bf16 %v2008, %v2008
    %v2013 = vpack.c.bf16 %v2009, %v2009
    %v2014 = vpack.c.bf16 %v2010, %v2010
    %v2015 = vld [vmem:[#allocation8] sm:$0xff]
    %v2016 = vld [vmem:[#allocation8 + $0x8] sm:$0xff]
    %v2017 = vld [vmem:[#allocation8 + $0x10] sm:$0xff]
    %v2018 = vld [vmem:[#allocation8 + $0x18] sm:$0xff]
    %v2019 = vld [vmem:[#allocation8 + $0x20] sm:$0xff]
    %v2020 = vld [vmem:[#allocation8 + $0x28] sm:$0xff]
    %v2021 = vld [vmem:[#allocation8 + $0x30] sm:$0xff]
    %v2022 = vld [vmem:[#allocation8 + $0x38] sm:$0xff]
    %v2023 = vld [vmem:[#allocation8 + $0x40] sm:$0xff]
    %v2024 = vld [vmem:[#allocation8 + $0x48] sm:$0xff]
    %v2025 = vld [vmem:[#allocation8 + $0x50] sm:$0xff]
    %v2026 = vld [vmem:[#allocation8 + $0x58] sm:$0xff]
    %v2027 = vld [vmem:[#allocation8 + $0x60] sm:$0xff]
    %v2028 = vld [vmem:[#allocation8 + $0x68] sm:$0xff]
    %v2029 = vld [vmem:[#allocation8 + $0x70] sm:$0xff]
    %v2030 = vld [vmem:[#allocation8 + $0x78] sm:$0xff]
    %v2031 = vld [vmem:[#allocation8 + $0x80] sm:$0xff]
    %v2032 = vld [vmem:[#allocation8 + $0x88] sm:$0xff]
    %v2033 = vld [vmem:[#allocation8 + $0x90] sm:$0xff]
    %v2034 = vld [vmem:[#allocation8 + $0x98] sm:$0xff]
    %v2035 = vld [vmem:[#allocation8 + $0xa0] sm:$0xff]
    %v2036 = vld [vmem:[#allocation8 + $0xa8] sm:$0xff]
    %v2037 = vld [vmem:[#allocation8 + $0xb0] sm:$0xff]
    %v2038 = vld [vmem:[#allocation8 + $0xb8] sm:$0xff]
    %v2039 = vld [vmem:[#allocation8 + $0xc0] sm:$0xff]
    %v2040 = vld [vmem:[#allocation8 + $0xc8] sm:$0xff]
    %v2041 = vld [vmem:[#allocation8 + $0xd0] sm:$0xff]
    %v2042 = vld [vmem:[#allocation8 + $0xd8] sm:$0xff]
    %v2043 = vld [vmem:[#allocation8 + $0xe0] sm:$0xff]
    %v2044 = vld [vmem:[#allocation8 + $0xe8] sm:$0xff]
    %v2045 = vld [vmem:[#allocation8 + $0xf0] sm:$0xff]
    %v2046 = vld [vmem:[#allocation8 + $0xf8] sm:$0xff]
    %v2047 = vld [vmem:[#allocation8 + $0x100] sm:$0xff]
    %v2048 = vld [vmem:[#allocation8 + $0x108] sm:$0xff]
    %v2049 = vld [vmem:[#allocation8 + $0x110] sm:$0xff]
    %v2050 = vld [vmem:[#allocation8 + $0x118] sm:$0xff]
    %v2051 = vld [vmem:[#allocation8 + $0x120] sm:$0xff]
    %v2052 = vld [vmem:[#allocation8 + $0x128] sm:$0xff]
    %v2053 = vld [vmem:[#allocation8 + $0x130] sm:$0xff]
    %v2054 = vld [vmem:[#allocation8 + $0x138] sm:$0xff]
    %v2055 = vld [vmem:[#allocation8 + $0x140] sm:$0xff]
    %v2056 = vld [vmem:[#allocation8 + $0x148] sm:$0xff]
    %v2057 = vld [vmem:[#allocation8 + $0x150] sm:$0xff]
    %v2058 = vld [vmem:[#allocation8 + $0x158] sm:$0xff]
    %v2059 = vld [vmem:[#allocation8 + $0x160] sm:$0xff]
    %v2060 = vld [vmem:[#allocation8 + $0x168] sm:$0xff]
    %v2061 = vld [vmem:[#allocation8 + $0x170] sm:$0xff]
    %v2062 = vld [vmem:[#allocation8 + $0x178] sm:$0xff]
    %v2063 = vld [vmem:[#allocation8 + $0x180] sm:$0xff]
    %v2064 = vld [vmem:[#allocation8 + $0x188] sm:$0xff]
    %v2065 = vld [vmem:[#allocation8 + $0x190] sm:$0xff]
    %v2066 = vld [vmem:[#allocation8 + $0x198] sm:$0xff]
    %v2067 = vld [vmem:[#allocation8 + $0x1a0] sm:$0xff]
    %v2068 = vld [vmem:[#allocation8 + $0x1a8] sm:$0xff]
    %v2069 = vld [vmem:[#allocation8 + $0x1b0] sm:$0xff]
    %v2070 = vld [vmem:[#allocation8 + $0x1b8] sm:$0xff]
    %v2071 = vld [vmem:[#allocation8 + $0x1c0] sm:$0xff]
    %v2072 = vld [vmem:[#allocation8 + $0x1c8] sm:$0xff]
    %v2073 = vld [vmem:[#allocation8 + $0x1d0] sm:$0xff]
    %v2074 = vld [vmem:[#allocation8 + $0x1d8] sm:$0xff]
    %v2075 = vld [vmem:[#allocation8 + $0x1e0] sm:$0xff]
    %v2076 = vld [vmem:[#allocation8 + $0x1e8] sm:$0xff]
    %v2077 = vld [vmem:[#allocation8 + $0x1f0] sm:$0xff]
    %v2078 = vld [vmem:[#allocation8 + $0x1f8] sm:$0xff]
    %v2079 = vld [vmem:[%s4] sm:$0x3]
    %v2081 = vlaneseq
    %v2082 = vshrl.u32 %v2081, 7
    %v2083 = vsub.s32 0, %v2082
    %v2084 = vrot.slane %v2079, %v2083
    %v2085 = vlaneseq
    %v2086 = vshrl.u32 %v2085, 7
    %v2087 = vsub.s32 1, %v2086
    %v2088 = vrot.slane %v2079, %v2087
    %v2155 = vunpack.c.l.b16 %v2015
    %v2156 = vunpack.c.h.b16 %v2015
    %v2157 = vunpack.c.l.b16 %v2016
    %v2158 = vunpack.c.h.b16 %v2016
    %v2159 = vunpack.c.l.b16 %v2017
    %v2160 = vunpack.c.h.b16 %v2017
    %v2161 = vunpack.c.l.b16 %v2018
    %v2162 = vunpack.c.h.b16 %v2018
    %v2163 = vunpack.c.l.b16 %v2019
    %v2164 = vunpack.c.h.b16 %v2019
    %v2165 = vunpack.c.l.b16 %v2020
    %v2166 = vunpack.c.h.b16 %v2020
    %v2167 = vunpack.c.l.b16 %v2021
    %v2168 = vunpack.c.h.b16 %v2021
    %v2169 = vunpack.c.l.b16 %v2022
    %v2170 = vunpack.c.h.b16 %v2022
    %v2171 = vunpack.c.l.b16 %v2023
    %v2172 = vunpack.c.h.b16 %v2023
    %v2173 = vunpack.c.l.b16 %v2024
    %v2174 = vunpack.c.h.b16 %v2024
    %v2175 = vunpack.c.l.b16 %v2025
    %v2176 = vunpack.c.h.b16 %v2025
    %v2177 = vunpack.c.l.b16 %v2026
    %v2178 = vunpack.c.h.b16 %v2026
    %v2179 = vunpack.c.l.b16 %v2027
    %v2180 = vunpack.c.h.b16 %v2027
    %v2181 = vunpack.c.l.b16 %v2028
    %v2182 = vunpack.c.h.b16 %v2028
    %v2183 = vunpack.c.l.b16 %v2029
    %v2184 = vunpack.c.h.b16 %v2029
    %v2185 = vunpack.c.l.b16 %v2030
    %v2186 = vunpack.c.h.b16 %v2030
    %v2187 = vunpack.c.l.b16 %v2031
    %v2188 = vunpack.c.h.b16 %v2031
    %v2189 = vunpack.c.l.b16 %v2032
    %v2190 = vunpack.c.h.b16 %v2032
    %v2191 = vunpack.c.l.b16 %v2033
    %v2192 = vunpack.c.h.b16 %v2033
    %v2193 = vunpack.c.l.b16 %v2034
    %v2194 = vunpack.c.h.b16 %v2034
    %v2195 = vunpack.c.l.b16 %v2035
    %v2196 = vunpack.c.h.b16 %v2035
    %v2197 = vunpack.c.l.b16 %v2036
    %v2198 = vunpack.c.h.b16 %v2036
    %v2199 = vunpack.c.l.b16 %v2037
    %v2200 = vunpack.c.h.b16 %v2037
    %v2201 = vunpack.c.l.b16 %v2038
    %v2202 = vunpack.c.h.b16 %v2038
    %v2203 = vunpack.c.l.b16 %v2039
    %v2204 = vunpack.c.h.b16 %v2039
    %v2205 = vunpack.c.l.b16 %v2040
    %v2206 = vunpack.c.h.b16 %v2040
    %v2207 = vunpack.c.l.b16 %v2041
    %v2208 = vunpack.c.h.b16 %v2041
    %v2209 = vunpack.c.l.b16 %v2042
    %v2210 = vunpack.c.h.b16 %v2042
    %v2211 = vunpack.c.l.b16 %v2043
    %v2212 = vunpack.c.h.b16 %v2043
    %v2213 = vunpack.c.l.b16 %v2044
    %v2214 = vunpack.c.h.b16 %v2044
    %v2215 = vunpack.c.l.b16 %v2045
    %v2216 = vunpack.c.h.b16 %v2045
    %v2217 = vunpack.c.l.b16 %v2046
    %v2218 = vunpack.c.h.b16 %v2046
    %v2219 = vunpack.c.l.b16 %v2047
    %v2220 = vunpack.c.h.b16 %v2047
    %v2221 = vunpack.c.l.b16 %v2048
    %v2222 = vunpack.c.h.b16 %v2048
    %v2223 = vunpack.c.l.b16 %v2049
    %v2224 = vunpack.c.h.b16 %v2049
    %v2225 = vunpack.c.l.b16 %v2050
    %v2226 = vunpack.c.h.b16 %v2050
    %v2227 = vunpack.c.l.b16 %v2051
    %v2228 = vunpack.c.h.b16 %v2051
    %v2229 = vunpack.c.l.b16 %v2052
    %v2230 = vunpack.c.h.b16 %v2052
    %v2231 = vunpack.c.l.b16 %v2053
    %v2232 = vunpack.c.h.b16 %v2053
    %v2233 = vunpack.c.l.b16 %v2054
    %v2234 = vunpack.c.h.b16 %v2054
    %v2235 = vunpack.c.l.b16 %v2055
    %v2236 = vunpack.c.h.b16 %v2055
    %v2237 = vunpack.c.l.b16 %v2056
    %v2238 = vunpack.c.h.b16 %v2056
    %v2239 = vunpack.c.l.b16 %v2057
    %v2240 = vunpack.c.h.b16 %v2057
    %v2241 = vunpack.c.l.b16 %v2058
    %v2242 = vunpack.c.h.b16 %v2058
    %v2243 = vunpack.c.l.b16 %v2059
    %v2244 = vunpack.c.h.b16 %v2059
    %v2245 = vunpack.c.l.b16 %v2060
    %v2246 = vunpack.c.h.b16 %v2060
    %v2247 = vunpack.c.l.b16 %v2061
    %v2248 = vunpack.c.h.b16 %v2061
    %v2249 = vunpack.c.l.b16 %v2062
    %v2250 = vunpack.c.h.b16 %v2062
    %v2251 = vunpack.c.l.b16 %v2063
    %v2252 = vunpack.c.h.b16 %v2063
    %v2253 = vunpack.c.l.b16 %v2064
    %v2254 = vunpack.c.h.b16 %v2064
    %v2255 = vunpack.c.l.b16 %v2065
    %v2256 = vunpack.c.h.b16 %v2065
    %v2257 = vunpack.c.l.b16 %v2066
    %v2258 = vunpack.c.h.b16 %v2066
    %v2259 = vunpack.c.l.b16 %v2067
    %v2260 = vunpack.c.h.b16 %v2067
    %v2261 = vunpack.c.l.b16 %v2068
    %v2262 = vunpack.c.h.b16 %v2068
    %v2263 = vunpack.c.l.b16 %v2069
    %v2264 = vunpack.c.h.b16 %v2069
    %v2265 = vunpack.c.l.b16 %v2070
    %v2266 = vunpack.c.h.b16 %v2070
    %v2267 = vunpack.c.l.b16 %v2071
    %v2268 = vunpack.c.h.b16 %v2071
    %v2269 = vunpack.c.l.b16 %v2072
    %v2270 = vunpack.c.h.b16 %v2072
    %v2271 = vunpack.c.l.b16 %v2073
    %v2272 = vunpack.c.h.b16 %v2073
    %v2273 = vunpack.c.l.b16 %v2074
    %v2274 = vunpack.c.h.b16 %v2074
    %v2275 = vunpack.c.l.b16 %v2075
    %v2276 = vunpack.c.h.b16 %v2075
    %v2277 = vunpack.c.l.b16 %v2076
    %v2278 = vunpack.c.h.b16 %v2076
    %v2279 = vunpack.c.l.b16 %v2077
    %v2280 = vunpack.c.h.b16 %v2077
    %v2281 = vunpack.c.l.b16 %v2078
    %v2282 = vunpack.c.h.b16 %v2078
    %v2283 = vpack.c.b16 %v2157, %v2155
    %v2284 = vpack.c.b16 %v2158, %v2156
    %v2285 = vpack.c.b16 %v2161, %v2159
    %v2286 = vpack.c.b16 %v2162, %v2160
    %v2287 = vpack.c.b16 %v2165, %v2163
    %v2288 = vpack.c.b16 %v2166, %v2164
    %v2289 = vpack.c.b16 %v2169, %v2167
    %v2290 = vpack.c.b16 %v2170, %v2168
    %v2291 = vpack.c.b16 %v2173, %v2171
    %v2292 = vpack.c.b16 %v2174, %v2172
    %v2293 = vpack.c.b16 %v2177, %v2175
    %v2294 = vpack.c.b16 %v2178, %v2176
    %v2295 = vpack.c.b16 %v2181, %v2179
    %v2296 = vpack.c.b16 %v2182, %v2180
    %v2297 = vpack.c.b16 %v2185, %v2183
    %v2298 = vpack.c.b16 %v2186, %v2184
    %v2299 = vpack.c.b16 %v2189, %v2187
    %v2300 = vpack.c.b16 %v2190, %v2188
    %v2301 = vpack.c.b16 %v2193, %v2191
    %v2302 = vpack.c.b16 %v2194, %v2192
    %v2303 = vpack.c.b16 %v2197, %v2195
    %v2304 = vpack.c.b16 %v2198, %v2196
    %v2305 = vpack.c.b16 %v2201, %v2199
    %v2306 = vpack.c.b16 %v2202, %v2200
    %v2307 = vpack.c.b16 %v2205, %v2203
    %v2308 = vpack.c.b16 %v2206, %v2204
    %v2309 = vpack.c.b16 %v2209, %v2207
    %v2310 = vpack.c.b16 %v2210, %v2208
    %v2311 = vpack.c.b16 %v2213, %v2211
    %v2312 = vpack.c.b16 %v2214, %v2212
    %v2313 = vpack.c.b16 %v2217, %v2215
    %v2314 = vpack.c.b16 %v2218, %v2216
    %v2315 = vpack.c.b16 %v2221, %v2219
    %v2316 = vpack.c.b16 %v2222, %v2220
    %v2317 = vpack.c.b16 %v2225, %v2223
    %v2318 = vpack.c.b16 %v2226, %v2224
    %v2319 = vpack.c.b16 %v2229, %v2227
    %v2320 = vpack.c.b16 %v2230, %v2228
    %v2321 = vpack.c.b16 %v2233, %v2231
    %v2322 = vpack.c.b16 %v2234, %v2232
    %v2323 = vpack.c.b16 %v2237, %v2235
    %v2324 = vpack.c.b16 %v2238, %v2236
    %v2325 = vpack.c.b16 %v2241, %v2239
    %v2326 = vpack.c.b16 %v2242, %v2240
    %v2327 = vpack.c.b16 %v2245, %v2243
    %v2328 = vpack.c.b16 %v2246, %v2244
    %v2329 = vpack.c.b16 %v2249, %v2247
    %v2330 = vpack.c.b16 %v2250, %v2248
    %v2331 = vpack.c.b16 %v2253, %v2251
    %v2332 = vpack.c.b16 %v2254, %v2252
    %v2333 = vpack.c.b16 %v2257, %v2255
    %v2334 = vpack.c.b16 %v2258, %v2256
    %v2335 = vpack.c.b16 %v2261, %v2259
    %v2336 = vpack.c.b16 %v2262, %v2260
    %v2337 = vpack.c.b16 %v2265, %v2263
    %v2338 = vpack.c.b16 %v2266, %v2264
    %v2339 = vpack.c.b16 %v2269, %v2267
    %v2340 = vpack.c.b16 %v2270, %v2268
    %v2341 = vpack.c.b16 %v2273, %v2271
    %v2342 = vpack.c.b16 %v2274, %v2272
    %v2343 = vpack.c.b16 %v2277, %v2275
    %v2344 = vpack.c.b16 %v2278, %v2276
    %v2345 = vpack.c.b16 %v2281, %v2279
    %v2346 = vpack.c.b16 %v2282, %v2280
    %2411 = vmatprep.subr.bf16.mxu0 %v2284
    %2412 = vmatpush1.bf16.msra.mxu0 %v2283
    %2413 = vmatprep.subr.bf16.mxu0 %v2286
    %2414 = vmatpush1.bf16.msra.mxu0 %v2285
    %2415 = vmatprep.subr.bf16.mxu0 %v2288
    %2416 = vmatpush1.bf16.msra.mxu0 %v2287
    %2417 = vmatprep.subr.bf16.mxu0 %v2290
    %2418 = vmatpush1.bf16.msra.mxu0 %v2289
    %2419 = vmatprep.subr.bf16.mxu0 %v2292
    %2420 = vmatpush1.bf16.msra.mxu0 %v2291
    %2421 = vmatprep.subr.bf16.mxu0 %v2294
    %2422 = vmatpush1.bf16.msra.mxu0 %v2293
    %2423 = vmatprep.subr.bf16.mxu0 %v2296
    %2424 = vmatpush1.bf16.msra.mxu0 %v2295
    %2425 = vmatprep.subr.bf16.mxu0 %v2298
    %2426 = vmatpush1.bf16.msra.mxu0 %v2297
    %2427 = vmatprep.subr.bf16.mxu0 %v2300
    %2428 = vmatpush1.bf16.msra.mxu0 %v2299
    %2429 = vmatprep.subr.bf16.mxu0 %v2302
    %2430 = vmatpush1.bf16.msra.mxu0 %v2301
    %2431 = vmatprep.subr.bf16.mxu0 %v2304
    %2432 = vmatpush1.bf16.msra.mxu0 %v2303
    %2433 = vmatprep.subr.bf16.mxu0 %v2306
    %2434 = vmatpush1.bf16.msra.mxu0 %v2305
    %2435 = vmatprep.subr.bf16.mxu0 %v2308
    %2436 = vmatpush1.bf16.msra.mxu0 %v2307
    %2437 = vmatprep.subr.bf16.mxu0 %v2310
    %2438 = vmatpush1.bf16.msra.mxu0 %v2309
    %2439 = vmatprep.subr.bf16.mxu0 %v2312
    %2440 = vmatpush1.bf16.msra.mxu0 %v2311
    %2441 = vmatprep.subr.bf16.mxu0 %v2314
    %2442 = vmatpush1.bf16.msra.mxu0 %v2313
    %2443 = vmatprep.mubr.bf16.mxu0 %v2012
    %2444 = vmatmul.mubr.bf16.gmra.mrb[0].mxu0 %v2011
    %v2445 = vpop.f32.mrb[0].mxu0
    %v2446 = vadd.f32 %v2084, %v2445
    %v2447 = vpop.f32.mrb[0].mxu0
    %v2448 = vadd.f32 %v2088, %v2447
    %v2449 = vpop.f32.mrb[0].mxu0
    %v2450 = vpop.f32.mrb[0].mxu0
    %2451 = vdwg.mxu0
    %2452 = vmatprep.subr.bf16.mxu0 %v2316
    %2453 = vmatpush1.bf16.msra.mxu0 %v2315
    %2454 = vmatprep.subr.bf16.mxu0 %v2318
    %2455 = vmatpush1.bf16.msra.mxu0 %v2317
    %2456 = vmatprep.subr.bf16.mxu0 %v2320
    %2457 = vmatpush1.bf16.msra.mxu0 %v2319
    %2458 = vmatprep.subr.bf16.mxu0 %v2322
    %2459 = vmatpush1.bf16.msra.mxu0 %v2321
    %2460 = vmatprep.subr.bf16.mxu0 %v2324
    %2461 = vmatpush1.bf16.msra.mxu0 %v2323
    %2462 = vmatprep.subr.bf16.mxu0 %v2326
    %2463 = vmatpush1.bf16.msra.mxu0 %v2325
    %2464 = vmatprep.subr.bf16.mxu0 %v2328
    %2465 = vmatpush1.bf16.msra.mxu0 %v2327
    %2466 = vmatprep.subr.bf16.mxu0 %v2330
    %2467 = vmatpush1.bf16.msra.mxu0 %v2329
    %2468 = vmatprep.subr.bf16.mxu0 %v2332
    %2469 = vmatpush1.bf16.msra.mxu0 %v2331
    %2470 = vmatprep.subr.bf16.mxu0 %v2334
    %2471 = vmatpush1.bf16.msra.mxu0 %v2333
    %2472 = vmatprep.subr.bf16.mxu0 %v2336
    %2473 = vmatpush1.bf16.msra.mxu0 %v2335
    %2474 = vmatprep.subr.bf16.mxu0 %v2338
    %2475 = vmatpush1.bf16.msra.mxu0 %v2337
    %2476 = vmatprep.subr.bf16.mxu0 %v2340
    %2477 = vmatpush1.bf16.msra.mxu0 %v2339
    %2478 = vmatprep.subr.bf16.mxu0 %v2342
    %2479 = vmatpush1.bf16.msra.mxu0 %v2341
    %2480 = vmatprep.subr.bf16.mxu0 %v2344
    %2481 = vmatpush1.bf16.msra.mxu0 %v2343
    %2482 = vmatprep.subr.bf16.mxu0 %v2346
    %2483 = vmatpush1.bf16.msra.mxu0 %v2345
    %2484 = vmatprep.mubr.bf16.mxu0 %v2014
    %2485 = vmatmul.mubr.bf16.gmra.mrb[0].mxu0 %v2013
    %v2486 = vpop.f32.mrb[0].mxu0
    %v2487 = vadd.f32 %v2446, %v2486
    %v2488 = vpop.f32.mrb[0].mxu0
    %v2489 = vadd.f32 %v2448, %v2488
    %v2490 = vpop.f32.mrb[0].mxu0
    %v2491 = vpop.f32.mrb[0].mxu0
    %2492 = vdwg.mxu0
    %v2493 = vmax.f32 %v2487, 0.0
    %v2494 = vmax.f32 %v2489, 0.0
    %v2495 = vld [vmem:[%s5] sm:$0x3]
    %s2496 = sld [smem:[#allocation2]]
    %v2497 = vstv %s2496
    %v2499 = vlaneseq
    %v2500 = vshrl.u32 %v2499, 7
    %v2501 = vsub.s32 0, %v2500
    %v2502 = vrot.slane %v2495, %v2501
    %v2503 = vlaneseq
    %v2504 = vshrl.u32 %v2503, 7
    %v2505 = vsub.s32 1, %v2504
    %v2506 = vrot.slane %v2495, %v2505
    %2509 = vmatprep.subr.mxu0 %v2494
    %2510 = vmatpush1.xpose.msra.mxu0 %v2493
    %2511 = vmatprep.subr.mxu0 0.0
    %2512 = vmatpush1.xpose.msra.mxu0 0.0
    %2513 = vmatprep.subr.mxu0 0.0
    %2514 = vmatpush1.xpose.msra.mxu0 0.0
    %2515 = vmatprep.subr.mxu0 0.0
    %2516 = vmatpush1.xpose.msra.mxu0 0.0
    %2517 = vmatprep.subr.mxu0 0.0
    %2518 = vmatpush1.xpose.msra.mxu0 0.0
    %2519 = vmatprep.subr.mxu0 0.0
    %2520 = vmatpush1.xpose.msra.mxu0 0.0
    %2521 = vmatprep.subr.mxu0 0.0
    %2522 = vmatpush1.xpose.msra.mxu0 0.0
    %2523 = vmatprep.subr.mxu0 0.0
    %2524 = vmatpush1.xpose.msra.mxu0 0.0
    %2525 = vmatprep.subr.mxu0 0.0
    %2526 = vmatpush1.xpose.msra.mxu0 0.0
    %2527 = vmatprep.subr.mxu0 0.0
    %2528 = vmatpush1.xpose.msra.mxu0 0.0
    %2529 = vmatprep.subr.mxu0 0.0
    %2530 = vmatpush1.xpose.msra.mxu0 0.0
    %2531 = vmatprep.subr.mxu0 0.0
    %2532 = vmatpush1.xpose.msra.mxu0 0.0
    %2533 = vmatprep.subr.mxu0 0.0
    %2534 = vmatpush1.xpose.msra.mxu0 0.0
    %2535 = vmatprep.subr.mxu0 0.0
    %2536 = vmatpush1.xpose.msra.mxu0 0.0
    %2537 = vmatprep.subr.mxu0 0.0
    %2538 = vmatpush1.xpose.msra.mxu0 0.0
    %2539 = vmatprep.subr.mxu0 0.0
    %2540 = vmatpush1.xpose.msra.mxu0 0.0
    %2541 = vmatprep.subr.mxu0 0.0
    %2542 = vmatpush1.xpose.msra.mxu0 0.0
    %2543 = vmatprep.subr.mxu0 0.0
    %2544 = vmatpush1.xpose.msra.mxu0 0.0
    %2545 = vmatprep.subr.mxu0 0.0
    %2546 = vmatpush1.xpose.msra.mxu0 0.0
    %2547 = vmatprep.subr.mxu0 0.0
    %2548 = vmatpush1.xpose.msra.mxu0 0.0
    %2549 = vmatprep.subr.mxu0 0.0
    %2550 = vmatpush1.xpose.msra.mxu0 0.0
    %2551 = vmatprep.subr.mxu0 0.0
    %2552 = vmatpush1.xpose.msra.mxu0 0.0
    %2553 = vmatprep.subr.mxu0 0.0
    %2554 = vmatpush1.xpose.msra.mxu0 0.0
    %2555 = vmatprep.subr.mxu0 0.0
    %2556 = vmatpush1.xpose.msra.mxu0 0.0
    %2557 = vmatprep.subr.mxu0 0.0
    %2558 = vmatpush1.xpose.msra.mxu0 0.0
    %2559 = vmatprep.subr.mxu0 0.0
    %2560 = vmatpush1.xpose.msra.mxu0 0.0
    %2561 = vmatprep.subr.mxu0 0.0
    %2562 = vmatpush1.xpose.msra.mxu0 0.0
    %2563 = vmatprep.subr.mxu0 0.0
    %2564 = vmatpush1.xpose.msra.mxu0 0.0
    %2565 = vmatprep.subr.mxu0 0.0
    %2566 = vmatpush1.xpose.msra.mxu0 0.0
    %2567 = vmatprep.subr.mxu0 0.0
    %2568 = vmatpush1.xpose.msra.mxu0 0.0
    %2569 = vmatprep.subr.mxu0 0.0
    %2570 = vmatpush1.xpose.msra.mxu0 0.0
    %2571 = vmatprep.subr.mxu0 0.0
    %2572 = vmatpush1.xpose.msra.mxu0 0.0
    %2573 = vmatprep.mubr.f32.mxu0 %v2506
    %2574 = vmatmul.mubr.f32.gmra.mrb[0].mxu0 %v2502
    %v2575 = vpop.f32.mrb[0].mxu0
    %v2576 = vadd.f32 %v2497, %v2575
    %v2577 = vpop.f32.mrb[0].mxu0
    %2578 = vdwg.mxu0
    %vm2579 = vcmask 8192
    %2580 = vst.msk [vmem:[#allocation9] sm:$0x1] %vm2579, %v2576
    // Predicated region
    $region42: #{tpu_custom_call.1} parent=1 // pred_check
      _
    $region43: #{tpu_custom_call.1} parent=1 // pred_check_branch
      %2582 = sbr.rel (0) target = $region45
    $region44: #{tpu_custom_call.1} parent=1 // pred_region
      %s2584 = ssub.s32 16, 16
      %2585 = vsyncadd [#allocation5], %s2584
      %s2587 = sshll.u32 [#allocation9], 4
      %s2588 = int_to_ptr.vmem [resolvable:$true] %s2587
      %2590 = dma.vmem_to_hbm [thread:$0]  %s2588, 16, %s7, [#allocation5]
    $region45: #{tpu_custom_call.1} parent=1 // pred_fallthru
      _
    // Predicated region
    $region46: #{tpu_custom_call.1} parent=1 // pred_check
      _
    $region47: #{tpu_custom_call.1} parent=1 // pred_check_branch
      %2592 = sbr.rel (0) target = $region49
    $region48: #{tpu_custom_call.1} parent=1 // pred_region
      %2593 = dma.done [#allocation5], 16
    $region49: #{tpu_custom_call.1} parent=1 // pred_fallthru
      _
    %2594 = vsyncpa [#allocation4], 1
    %2595 = vsyncpa [#allocation7], 1
    %2596 = vsyncpa [#allocation5], 1

</llo_original>
